<compile_context>
chip_gen: v7x
topology: tpu7x:2x2x1
jax: 0.10.0
libtpu: 0.0.40
codegen_flags: <defaults>
</compile_context>

<pallas_src>
import functools

import jax
import jax.numpy as jnp
from jax.experimental import pallas as pl
from jax.experimental.pallas import tpu as pltpu


# --------------------------------------------------------------------------
# tiling / VMEM helpers
# --------------------------------------------------------------------------
@functools.lru_cache(maxsize=None)
def _vmem_limit_bytes():
    """~75% of physical VMEM (96 MiB v5e/v6e, 48 MiB v7x); safe fallback."""
    try:
        return int(pltpu.get_tpu_info().vmem_capacity_bytes) * 3 // 4
    except Exception:
        return 48 * 1024 * 1024


def _pick_row_tile(m):
    # 512-row tiles reach ~85% of HBM roofline; still need >=2 grid steps.
    for t in (512, 256, 128, 64, 32, 16, 8):
        if m % t == 0 and m // t >= 2:
            return t
    return m


def _pick_seq_tile(s):
    for t in (256, 128, 64, 32, 16, 8):
        if s % t == 0 and s // t >= 2:
            return t
    return s


def _pick_hidden_tile(h4):
    for t in (2048, 1024, 512, 256, 128):
        if h4 % t == 0 and h4 // t >= 2:
            return t
    return h4


def _pick_lane_tile(n):
    # lane-dense (multiple of 128) output-feature tile; real configs should
    # pad vocab / emb to x128 so the fallback (masked stores) never triggers.
    for t in (1024, 512, 256, 128):
        if n % t == 0 and n // t >= 2:
            return t
    return n


# --------------------------------------------------------------------------
# Pallas kernels
# --------------------------------------------------------------------------
def _mha_kernel(xq_ref, xkv_ref, wq_ref, bq_ref, wkv_ref, bkv_ref,
                wo_ref, bo_ref, *rest, n_heads, causal, fuse_addnorm):
    """Fused MHA for one (batch, q-tile) grid point.

    Packed lane-dense projections (Q: (tq,D)@(D,D), K|V: (Sk,D)@(D,2D)), per-
    head softmax attention into a (tq,D) VMEM concat scratch, single (D,D)
    output projection.  Optional fused residual-add + LayerNorm epilogue.
    """
    if fuse_addnorm:
        res_ref, g_ref, beta_ref, o_ref, ctx_ref = rest
    else:
        o_ref, ctx_ref = rest

    tq = xq_ref.shape[1]
    d = xq_ref.shape[2]
    sk = xkv_ref.shape[1]
    dh = d // n_heads
    scale = 1.0 / (dh ** 0.5)

    xq = xq_ref[0].astype(jnp.bfloat16)      # (tq, D)
    xkv = xkv_ref[0].astype(jnp.bfloat16)    # (Sk, D)

    # lane-dense packed projections (f32 MXU accumulation)
    q = jnp.dot(xq, wq_ref[...], preferred_element_type=jnp.float32) + bq_ref[...]
    q = q * scale                                        # fold 1/sqrt(dh) once
    kv = jnp.dot(xkv, wkv_ref[...], preferred_element_type=jnp.float32) + bkv_ref[...]

    q_b = q.astype(jnp.bfloat16)
    k_b = kv[:, :d].astype(jnp.bfloat16)
    v_b = kv[:, d:].astype(jnp.bfloat16)

    if causal:
        q0 = pl.program_id(1) * tq
        row = q0 + jax.lax.broadcasted_iota(jnp.int32, (tq, sk), 0)
        col = jax.lax.broadcasted_iota(jnp.int32, (tq, sk), 1)
        neg = jnp.where(row >= col, 0.0, -1e9).astype(jnp.float32)

    # TODO(synk): for large n_heads / long Sk switch to a fori_loop over heads
    # and flash-style KV streaming with an online-softmax accumulator.
    for h in range(n_heads):
        sl = slice(h * dh, (h + 1) * dh)
        s = jax.lax.dot_general(q_b[:, sl], k_b[:, sl],
                                dimension_numbers=(((1,), (1,)), ((), ())),
                                preferred_element_type=jnp.float32)
        if causal:
            s = s + neg
        s = s - jnp.max(s, axis=-1, keepdims=True)
        p = jnp.exp(s)
        p = p * pl.reciprocal(jnp.sum(p, axis=-1, keepdims=True), approx=True)
        ctx_ref[:, sl] = jnp.dot(p.astype(jnp.bfloat16), v_b[:, sl],
                                 preferred_element_type=jnp.float32)

    out = jnp.dot(ctx_ref[...].astype(jnp.bfloat16), wo_ref[...],
                  preferred_element_type=jnp.float32) + bo_ref[...]

    if fuse_addnorm:                          # residual add + LayerNorm epilogue
        z = res_ref[0].astype(jnp.float32) + out
        mean = jnp.mean(z, axis=-1, keepdims=True)
        var = jnp.mean(jnp.square(z - mean), axis=-1, keepdims=True)
        out = (z - mean) * jax.lax.rsqrt(var + 1e-5) * g_ref[...] + beta_ref[...]
    o_ref[0] = out.astype(o_ref.dtype)


def _ffn_addnorm_kernel(x_ref, w1_ref, b1_ref, w2_ref, b2_ref, g_ref, bt_ref,
                        o_ref, acc_ref):
    """FFN with the 4D hidden dim tiled as a reduction grid axis (axis 1).

    Partial w2 products accumulate in an f32 VMEM scratch; residual add +
    LayerNorm fused into the last reduction step.  Weights never need to be
    fully VMEM-resident (v7x-safe).
    """
    j = pl.program_id(1)

    @pl.when(j == 0)
    def _():
        acc_ref[...] = jnp.zeros_like(acc_ref)

    x_b = x_ref[...].astype(jnp.bfloat16)
    h = jnp.dot(x_b, w1_ref[...], preferred_element_type=jnp.float32) + b1_ref[...]
    h = jnp.maximum(h, 0.0)
    acc_ref[...] += jnp.dot(h.astype(jnp.bfloat16), w2_ref[...],
                            preferred_element_type=jnp.float32)

    @pl.when(j == pl.num_programs(1) - 1)
    def _():
        z = x_ref[...].astype(jnp.float32) + acc_ref[...] + b2_ref[...]
        mean = jnp.mean(z, axis=-1, keepdims=True)
        var = jnp.mean(jnp.square(z - mean), axis=-1, keepdims=True)
        zn = (z - mean) * jax.lax.rsqrt(var + 1e-5)
        o_ref[...] = (zn * g_ref[...] + bt_ref[...]).astype(o_ref.dtype)


def _add_layernorm_kernel(x_ref, y_ref, g_ref, b_ref, o_ref):
    z = x_ref[...].astype(jnp.float32) + y_ref[...].astype(jnp.float32)
    mean = jnp.mean(z, axis=-1, keepdims=True)
    var = jnp.mean(jnp.square(z - mean), axis=-1, keepdims=True)
    zn = (z - mean) * jax.lax.rsqrt(var + 1e-5)
    o_ref[...] = (zn * g_ref[...] + b_ref[...]).astype(o_ref.dtype)


def _linear_kernel(x_ref, w_ref, b_ref, o_ref):
    o_ref[...] = (jnp.dot(x_ref[...].astype(jnp.bfloat16), w_ref[...],
                          preferred_element_type=jnp.float32)
                  + b_ref[...]).astype(o_ref.dtype)


# --------------------------------------------------------------------------
# Pallas wrappers
# --------------------------------------------------------------------------
def mha_forward(p, q_in, kv_in, n_heads, *, causal=True, addnorm=None, residual=None):
    B, Sq, D = q_in.shape
    Sk = kv_in.shape[1]
    dh = D // n_heads
    tq = _pick_seq_tile(Sq)
    fuse = addnorm is not None

    kernel = functools.partial(_mha_kernel, n_heads=n_heads, causal=causal,
                               fuse_addnorm=fuse)
    in_specs = [
        pl.BlockSpec((1, tq, D), lambda b, i: (b, i, 0)),
        pl.BlockSpec((1, Sk, D), lambda b, i: (b, 0, 0)),
        pl.BlockSpec((D, D), lambda b, i: (0, 0)),
        pl.BlockSpec((1, D), lambda b, i: (0, 0)),
        pl.BlockSpec((D, 2 * D), lambda b, i: (0, 0)),
        pl.BlockSpec((1, 2 * D), lambda b, i: (0, 0)),
        pl.BlockSpec((D, D), lambda b, i: (0, 0)),
        pl.BlockSpec((1, D), lambda b, i: (0, 0)),
    ]
    args = [q_in, kv_in, p["wq"], p["bq"], p["wkv"], p["bkv"], p["wo"], p["bo"]]
    if fuse:
        in_specs += [
            pl.BlockSpec((1, tq, D), lambda b, i: (b, i, 0)),
            pl.BlockSpec((1, D), lambda b, i: (0, 0)),
            pl.BlockSpec((1, D), lambda b, i: (0, 0)),
        ]
        args += [residual, addnorm["gamma"], addnorm["beta"]]

    flops = (2 * B * Sq * D * D            # Q proj
             + 2 * B * Sk * D * 2 * D      # K|V proj
             + 4 * B * n_heads * Sq * Sk * dh   # scores + context
             + 2 * B * Sq * D * D)         # out proj
    bytes_accessed = (4 * B * (2 * Sq * D + Sk * D)        # activations f32
                      + 2 * (4 * D * D) + 4 * (4 * D))     # bf16 weights + biases
    return pl.pallas_call(
        kernel,
        out_shape=jax.ShapeDtypeStruct((B, Sq, D), q_in.dtype),
        grid=(B, Sq // tq),
        in_specs=in_specs,
        out_specs=pl.BlockSpec((1, tq, D), lambda b, i: (b, i, 0)),
        scratch_shapes=[pltpu.VMEM((tq, D), jnp.float32)],
        compiler_params=pltpu.CompilerParams(
            dimension_semantics=("parallel", "parallel"),
            vmem_limit_bytes=_vmem_limit_bytes()),
        cost_estimate=pl.CostEstimate(flops=flops,
                                      transcendentals=B * n_heads * Sq * Sk,
                                      bytes_accessed=bytes_accessed),
    )(*args)


def ffn_addnorm_forward(ffn_p, ln_p, x):
    B, S, D = x.shape
    M = B * S
    H4 = ffn_p["w1"].shape[1]
    tm = _pick_row_tile(M)
    th = _pick_hidden_tile(H4)
    flops = 4 * M * D * H4
    bytes_accessed = 8 * M * D + 2 * (2 * D * H4) + 4 * (H4 + 3 * D)
    out = pl.pallas_call(
        _ffn_addnorm_kernel,
        out_shape=jax.ShapeDtypeStruct((M, D), x.dtype),
        grid=(M // tm, H4 // th),
        in_specs=[
            pl.BlockSpec((tm, D), lambda i, j: (i, 0)),
            pl.BlockSpec((D, th), lambda i, j: (0, j)),
            pl.BlockSpec((1, th), lambda i, j: (0, j)),
            pl.BlockSpec((th, D), lambda i, j: (j, 0)),
            pl.BlockSpec((1, D), lambda i, j: (0, 0)),
            pl.BlockSpec((1, D), lambda i, j: (0, 0)),
            pl.BlockSpec((1, D), lambda i, j: (0, 0)),
        ],
        out_specs=pl.BlockSpec((tm, D), lambda i, j: (i, 0)),
        scratch_shapes=[pltpu.VMEM((tm, D), jnp.float32)],
        compiler_params=pltpu.CompilerParams(
            dimension_semantics=("parallel", "arbitrary"),
            vmem_limit_bytes=_vmem_limit_bytes()),
        cost_estimate=pl.CostEstimate(flops=flops, transcendentals=0,
                                      bytes_accessed=bytes_accessed),
    )(x.reshape(M, D), ffn_p["w1"], ffn_p["b1"], ffn_p["w2"], ffn_p["b2"],
      ln_p["gamma"], ln_p["beta"])
    return out.reshape(B, S, D)


def add_norm_forward(p, x, y):
    # only used on the encoder-decoder path (first_add_norm); the other two
    # AddNorms are fused into the MHA / FFN kernel epilogues.
    B, S, D = x.shape
    M = B * S
    tm = _pick_row_tile(M)
    out = pl.pallas_call(
        _add_layernorm_kernel,
        out_shape=jax.ShapeDtypeStruct((M, D), x.dtype),
        grid=(M // tm,),
        in_specs=[
            pl.BlockSpec((tm, D), lambda i: (i, 0)),
            pl.BlockSpec((tm, D), lambda i: (i, 0)),
            pl.BlockSpec((1, D), lambda i: (0, 0)),
            pl.BlockSpec((1, D), lambda i: (0, 0)),
        ],
        out_specs=pl.BlockSpec((tm, D), lambda i: (i, 0)),
        compiler_params=pltpu.CompilerParams(
            dimension_semantics=("parallel",),
            vmem_limit_bytes=_vmem_limit_bytes()),
        cost_estimate=pl.CostEstimate(flops=8 * M * D, transcendentals=0,
                                      bytes_accessed=12 * M * D),
    )(x.reshape(M, D), y.reshape(M, D), p["gamma"], p["beta"])
    return out.reshape(B, S, D)


def linear_forward(x2, w, b):
    # tiled over rows (M) and output features (N); K = emb_dim kept whole.
    M, K = x2.shape
    N = w.shape[1]
    tm = _pick_row_tile(M)
    tn = _pick_lane_tile(N)
    return pl.pallas_call(
        _linear_kernel,
        out_shape=jax.ShapeDtypeStruct((M, N), x2.dtype),
        grid=(M // tm, N // tn),
        in_specs=[
            pl.BlockSpec((tm, K), lambda i, j: (i, 0)),
            pl.BlockSpec((K, tn), lambda i, j: (0, j)),
            pl.BlockSpec((1, tn), lambda i, j: (0, j)),
        ],
        out_specs=pl.BlockSpec((tm, tn), lambda i, j: (i, j)),
        compiler_params=pltpu.CompilerParams(
            dimension_semantics=("parallel", "parallel"),
            vmem_limit_bytes=_vmem_limit_bytes()),
        cost_estimate=pl.CostEstimate(flops=2 * M * K * N, transcendentals=0,
                                      bytes_accessed=4 * M * K + 2 * K * N + 4 * M * N),
    )(x2, w, b)


# --------------------------------------------------------------------------
# Model forward (glue in JAX, math in the fused Pallas kernels)
# --------------------------------------------------------------------------
def decoder_layer_forward(p, inputs, n_heads, encoder_inputs=None):
    # weighted = self.input_mha(inputs, inputs, inputs)
    weighted = mha_forward(p["input_mha"], inputs, inputs, n_heads, causal=True)
    if encoder_inputs is not None:
        # inputs = self.first_add_norm(inputs, weighted)
        normed = add_norm_forward(p["first_add_norm"], inputs, weighted)
        # enc_dec_mix = self.encoder_mha(q=encoder_inputs, k=normed, v=normed)
        # weighted   = self.second_add_norm(weighted, enc_dec_mix)
        #   -> AddNorm fused into the encoder MHA epilogue (residual=weighted)
        # TODO(synk): the reference MHA class registers a seq_len causal mask,
        # so causal=True is kept for cross-attention too; flip to False if the
        # PyTorch MHA only masks self-attention.
        weighted = mha_forward(p["encoder_mha"], encoder_inputs, normed, n_heads,
                               causal=True, addnorm=p["second_add_norm"],
                               residual=weighted)
    # When encoder_inputs is None the reference discards first_add_norm's
    # output, so it is not computed (identical forward result).
    # weighted = self.third_add_norm(weighted, self.ffn(weighted))
    return ffn_addnorm_forward(p["ffn"], p["third_add_norm"], weighted)


def transformer_decoder_forward(params, token_ids, n_heads, encoder_inputs=None):
    B, S = token_ids.shape
    # TokenEmbedding: learned token table + learned positional table (gather in XLA)
    # TODO(synk): exact TokenEmbedding formula (e.g. sqrt(D) scaling / sinusoidal
    # positions) unknown from the reference snippet; learned tok+pos tables assumed.
    x = jnp.take(params["tok_emb"], token_ids, axis=0) + params["pos_emb"][None, :S, :]
    for layer_p in params["layers"]:
        x = decoder_layer_forward(layer_p, x, n_heads, encoder_inputs)
    B_, S_, D = x.shape
    logits = linear_forward(x.reshape(B_ * S_, D), params["out_w"], params["out_b"])
    return logits.reshape(B_, S_, -1)


# --------------------------------------------------------------------------
# Deterministic parameter init (weights bf16 packed lane-dense, rest f32)
# --------------------------------------------------------------------------
def _dense(key, fan_in, fan_out):
    return 0.02 * jax.random.normal(key, (fan_in, fan_out), dtype=jnp.float32)


def init_params(key, *, emb_dim, n_heads, seq_len, n_layers, vocab_size):
    del n_heads  # heads are contiguous emb_dim column groups of the packed weights
    keys = jax.random.split(key, 4 + n_layers)
    params = {
        "tok_emb": 0.02 * jax.random.normal(keys[0], (vocab_size, emb_dim), jnp.float32),
        "pos_emb": 0.02 * jax.random.normal(keys[1], (seq_len, emb_dim), jnp.float32),
        "out_w": _dense(keys[2], emb_dim, vocab_size).astype(jnp.bfloat16),
        "out_b": 0.02 * jax.random.normal(keys[3], (1, vocab_size), jnp.float32),
        "layers": [],
    }

    def mha_params(k):
        ks = jax.random.split(k, 7)
        wk = _dense(ks[1], emb_dim, emb_dim)
        wv = _dense(ks[2], emb_dim, emb_dim)
        return {  # packed, lane-dense layouts
            "wq": _dense(ks[0], emb_dim, emb_dim).astype(jnp.bfloat16),
            "wkv": jnp.concatenate([wk, wv], axis=1).astype(jnp.bfloat16),
            "wo": _dense(ks[3], emb_dim, emb_dim).astype(jnp.bfloat16),
            "bq": 0.02 * jax.random.normal(ks[4], (1, emb_dim), jnp.float32),
            "bkv": 0.02 * jax.random.normal(ks[5], (1, 2 * emb_dim), jnp.float32),
            "bo": 0.02 * jax.random.normal(ks[6], (1, emb_dim), jnp.float32),
        }

    def addnorm_params(k):
        ks = jax.random.split(k, 2)
        return {"gamma": 1.0 + 0.05 * jax.random.normal(ks[0], (1, emb_dim), jnp.float32),
                "beta": 0.02 * jax.random.normal(ks[1], (1, emb_dim), jnp.float32)}

    for li in range(n_layers):
        ks = jax.random.split(keys[4 + li], 9)
        params["layers"].append({
            "input_mha": mha_params(ks[0]),
            "encoder_mha": mha_params(ks[1]),
            "first_add_norm": addnorm_params(ks[2]),
            "second_add_norm": addnorm_params(ks[3]),
            "third_add_norm": addnorm_params(ks[4]),
            "ffn": {
                "w1": _dense(ks[5], emb_dim, 4 * emb_dim).astype(jnp.bfloat16),
                "b1": 0.02 * jax.random.normal(ks[6], (1, 4 * emb_dim), jnp.float32),
                "w2": _dense(ks[7], 4 * emb_dim, emb_dim).astype(jnp.bfloat16),
                "b2": 0.02 * jax.random.normal(ks[8], (1, emb_dim), jnp.float32),
            },
        })
    return params


# --------------------------------------------------------------------------
# Pure-JAX reference (same bf16-operand / f32-accumulate recipe) for checking
# --------------------------------------------------------------------------
def _reference_forward(params, token_ids, n_heads):
    bf16, f32 = jnp.bfloat16, jnp.float32

    def mm(a, b):
        return jnp.dot(a.astype(bf16), b.astype(bf16), preferred_element_type=f32)

    def layer_norm(z, p):
        mean = jnp.mean(z, axis=-1, keepdims=True)
        var = jnp.mean(jnp.square(z - mean), axis=-1, keepdims=True)
        return (z - mean) * jax.lax.rsqrt(var + 1e-5) * p["gamma"] + p["beta"]

    def mha(p, xq, xkv):
        B, Sq, D = xq.shape
        Sk = xkv.shape[1]
        dh = D // n_heads
        q = mm(xq, p["wq"]) + p["bq"]
        kv = mm(xkv, p["wkv"]) + p["bkv"]
        k, v = kv[..., :D], kv[..., D:]
        q = q.reshape(B, Sq, n_heads, dh).transpose(0, 2, 1, 3)
        k = k.reshape(B, Sk, n_heads, dh).transpose(0, 2, 1, 3)
        v = v.reshape(B, Sk, n_heads, dh).transpose(0, 2, 1, 3)
        s = jnp.einsum("bhqd,bhkd->bhqk", q.astype(bf16), k.astype(bf16),
                       preferred_element_type=f32) / (dh ** 0.5)
        mask = jnp.tril(jnp.ones((Sq, Sk), dtype=bool))
        s = jnp.where(mask[None, None], s, -1e9)
        a = jax.nn.softmax(s, axis=-1)
        ctx = jnp.einsum("bhqk,bhkd->bhqd", a.astype(bf16), v.astype(bf16),
                         preferred_element_type=f32)
        ctx = ctx.transpose(0, 2, 1, 3).reshape(B, Sq, D)
        return mm(ctx, p["wo"]) + p["bo"]

    def ffn_addnorm(pf, pn, x):
        h = jnp.maximum(mm(x, pf["w1"]) + pf["b1"], 0.0)
        y = mm(h, pf["w2"]) + pf["b2"]
        return layer_norm(x + y, pn)

    S = token_ids.shape[1]
    x = jnp.take(params["tok_emb"], token_ids, axis=0) + params["pos_emb"][None, :S, :]
    for lp in params["layers"]:
        w = mha(lp["input_mha"], x, x)
        x = ffn_addnorm(lp["ffn"], lp["third_add_norm"], w)
    return mm(x, params["out_w"]) + params["out_b"]


# --------------------------------------------------------------------------
if __name__ == "__main__":
    # Small but lane-aligned shapes: D, 4D and vocab are multiples of 128 so
    # every kernel block is lane-dense (no masked partial stores).
    EMB_DIM = 128
    N_HEADS = 4
    SEQ_LEN = 16
    N_LAYERS = 2
    VOCAB = 256
    BATCH = 2

    root = jax.random.PRNGKey(0)
    k_param, k_tok = jax.random.split(root)

    params = init_params(k_param, emb_dim=EMB_DIM, n_heads=N_HEADS,
                         seq_len=SEQ_LEN, n_layers=N_LAYERS, vocab_size=VOCAB)
    token_ids = jax.random.randint(k_tok, (BATCH, SEQ_LEN), 0, VOCAB, dtype=jnp.int32)

    fwd = jax.jit(transformer_decoder_forward, static_argnames=("n_heads",))
    logits = fwd(params, token_ids, n_heads=N_HEADS, encoder_inputs=None)
    logits = jax.block_until_ready(logits)

    assert logits.shape == (BATCH, SEQ_LEN, VOCAB), logits.shape
    assert bool(jnp.all(jnp.isfinite(logits)))

    ref = _reference_forward(params, token_ids, N_HEADS)
    max_err = float(jnp.max(jnp.abs(logits.astype(jnp.float32) - ref)))
    assert max_err < 5e-2, f"max |pallas - reference| = {max_err}"
    print("KERNEL_OK")
</pallas_src>

<mosaic_0001>
module attributes {stable_mosaic.version = 11 : i64} {
  func.func @_mha_kernel(%arg0: i32, %arg1: i32, %arg2: memref<1x8x128xf32, #tpu.memory_space<vmem>>, %arg3: memref<1x16x128xf32, #tpu.memory_space<vmem>>, %arg4: memref<128x128xbf16, #tpu.memory_space<vmem>>, %arg5: memref<1x128xf32, #tpu.memory_space<vmem>>, %arg6: memref<128x256xbf16, #tpu.memory_space<vmem>>, %arg7: memref<1x256xf32, #tpu.memory_space<vmem>>, %arg8: memref<128x128xbf16, #tpu.memory_space<vmem>>, %arg9: memref<1x128xf32, #tpu.memory_space<vmem>>, %arg10: memref<1x8x128xf32, #tpu.memory_space<vmem>>, %arg11: memref<8x128xf32, #tpu.memory_space<vmem>>) attributes {dimension_semantics = [#tpu.dimension_semantics<parallel>, #tpu.dimension_semantics<parallel>], iteration_bounds = array<i64: 2, 2>, scalar_prefetch = 0 : i64, scratch_operands = 1 : i64, tpu.core_type = #tpu.core_type<tc>, window_params = [{transform_indices = @transform_0, window_bounds = array<i64: 1, 8, 128>}, {transform_indices = @transform_1, window_bounds = array<i64: 1, 16, 128>}, {pipeline_mode = #tpu.pipeline_mode<synchronous>, transform_indices = @transform_2, window_bounds = array<i64: 128, 128>}, {pipeline_mode = #tpu.pipeline_mode<synchronous>, transform_indices = @transform_3, window_bounds = array<i64: 1, 128>}, {pipeline_mode = #tpu.pipeline_mode<synchronous>, transform_indices = @transform_4, window_bounds = array<i64: 128, 256>}, {pipeline_mode = #tpu.pipeline_mode<synchronous>, transform_indices = @transform_5, window_bounds = array<i64: 1, 256>}, {pipeline_mode = #tpu.pipeline_mode<synchronous>, transform_indices = @transform_6, window_bounds = array<i64: 128, 128>}, {pipeline_mode = #tpu.pipeline_mode<synchronous>, transform_indices = @transform_7, window_bounds = array<i64: 1, 128>}, {transform_indices = @transform_8, window_bounds = array<i64: 1, 8, 128>}]} {
    %c0 = arith.constant 0 : index
    %c0_0 = arith.constant 0 : index
    %c0_1 = arith.constant 0 : index
    %0 = vector.load %arg2[%c0, %c0_0, %c0_1] : memref<1x8x128xf32, #tpu.memory_space<vmem>>, vector<1x8x128xf32>
    %1 = vector.shape_cast %0 : vector<1x8x128xf32> to vector<8x128xf32>
    %2 = arith.truncf %1 : vector<8x128xf32> to vector<8x128xbf16>
    %c0_2 = arith.constant 0 : index
    %c0_3 = arith.constant 0 : index
    %c0_4 = arith.constant 0 : index
    %3 = vector.load %arg3[%c0_2, %c0_3, %c0_4] : memref<1x16x128xf32, #tpu.memory_space<vmem>>, vector<1x16x128xf32>
    %4 = vector.shape_cast %3 : vector<1x16x128xf32> to vector<16x128xf32>
    %5 = arith.truncf %4 : vector<16x128xf32> to vector<16x128xbf16>
    %c0_5 = arith.constant 0 : index
    %c0_6 = arith.constant 0 : index
    %6 = vector.load %arg4[%c0_5, %c0_6] : memref<128x128xbf16, #tpu.memory_space<vmem>>, vector<128x128xbf16>
    %cst = arith.constant dense<0.000000e+00> : vector<8x128xf32>
    %7 = tpu.matmul %2, %6, %cst {dimension_numbers = #tpu.dot_dimension_numbers<[1], [0], [0], [1], [0, 0, 1, 1], [], []>} : vector<8x128xbf16>, vector<128x128xbf16>, vector<8x128xf32> -> vector<8x128xf32>
    %c0_7 = arith.constant 0 : index
    %c0_8 = arith.constant 0 : index
    %8 = vector.load %arg5[%c0_7, %c0_8] : memref<1x128xf32, #tpu.memory_space<vmem>>, vector<1x128xf32>
    %9 = vector.broadcast %8 : vector<1x128xf32> to vector<8x128xf32>
    %10 = arith.addf %7, %9 : vector<8x128xf32>
    %cst_9 = arith.constant 0.176776692 : f32
    %11 = vector.broadcast %cst_9 : f32 to vector<8x128xf32>
    %12 = arith.mulf %10, %11 : vector<8x128xf32>
    %c0_10 = arith.constant 0 : index
    %c0_11 = arith.constant 0 : index
    %13 = vector.load %arg6[%c0_10, %c0_11] : memref<128x256xbf16, #tpu.memory_space<vmem>>, vector<128x256xbf16>
    %cst_12 = arith.constant dense<0.000000e+00> : vector<16x256xf32>
    %14 = tpu.matmul %5, %13, %cst_12 {dimension_numbers = #tpu.dot_dimension_numbers<[1], [0], [0], [1], [0, 0, 1, 1], [], []>} : vector<16x128xbf16>, vector<128x256xbf16>, vector<16x256xf32> -> vector<16x256xf32>
    %c0_13 = arith.constant 0 : index
    %c0_14 = arith.constant 0 : index
    %15 = vector.load %arg7[%c0_13, %c0_14] : memref<1x256xf32, #tpu.memory_space<vmem>>, vector<1x256xf32>
    %16 = vector.broadcast %15 : vector<1x256xf32> to vector<16x256xf32>
    %17 = arith.addf %14, %16 : vector<16x256xf32>
    %18 = arith.truncf %12 : vector<8x128xf32> to vector<8x128xbf16>
    %19 = vector.extract_strided_slice %17 {offsets = [0, 0], sizes = [16, 128], strides = [1, 1]} : vector<16x256xf32> to vector<16x128xf32>
    %20 = arith.truncf %19 : vector<16x128xf32> to vector<16x128xbf16>
    %21 = vector.extract_strided_slice %17 {offsets = [0, 128], sizes = [16, 128], strides = [1, 1]} : vector<16x256xf32> to vector<16x128xf32>
    %22 = arith.truncf %21 : vector<16x128xf32> to vector<16x128xbf16>
    %c8_i32 = arith.constant 8 : i32
    %23 = arith.muli %arg1, %c8_i32 : i32
    %24 = tpu.iota {dimensions = array<i32: 0>} : vector<8x16xi32>
    %25 = vector.broadcast %23 : i32 to vector<8x16xi32>
    %26 = arith.addi %25, %24 : vector<8x16xi32>
    %27 = tpu.iota {dimensions = array<i32: 1>} : vector<8x16xi32>
    %28 = arith.cmpi sge, %26, %27 : vector<8x16xi32>
    %cst_15 = arith.constant 0.000000e+00 : f32
    %cst_16 = arith.constant -1.000000e+09 : f32
    %29 = vector.broadcast %cst_15 : f32 to vector<8x16xf32>
    %30 = vector.broadcast %cst_16 : f32 to vector<8x16xf32>
    %31 = arith.select %28, %29, %30 : vector<8x16xi1>, vector<8x16xf32>
    %32 = vector.extract_strided_slice %18 {offsets = [0, 0], sizes = [8, 32], strides = [1, 1]} : vector<8x128xbf16> to vector<8x32xbf16>
    %33 = vector.extract_strided_slice %20 {offsets = [0, 0], sizes = [16, 32], strides = [1, 1]} : vector<16x128xbf16> to vector<16x32xbf16>
    %cst_17 = arith.constant dense<0.000000e+00> : vector<8x16xf32>
    %34 = tpu.matmul %32, %33, %cst_17 {dimension_numbers = #tpu.dot_dimension_numbers<[1], [1], [0], [0], [0, 0, 1, 0], [], []>} : vector<8x32xbf16>, vector<16x32xbf16>, vector<8x16xf32> -> vector<8x16xf32>
    %35 = arith.addf %34, %31 : vector<8x16xf32>
    %cst_18 = arith.constant dense<0xFF800000> : vector<8xf32>
    %36 = vector.multi_reduction <maximumf>, %35, %cst_18 [1] : vector<8x16xf32> to vector<8xf32>
    %37 = vector.shape_cast %36 : vector<8xf32> to vector<8x1xf32>
    %38 = vector.broadcast %37 : vector<8x1xf32> to vector<8x16xf32>
    %39 = arith.subf %35, %38 : vector<8x16xf32>
    %40 = math.exp %39 : vector<8x16xf32>
    %cst_19 = arith.constant dense<0.000000e+00> : vector<8xf32>
    %41 = vector.multi_reduction <add>, %40, %cst_19 [1] : vector<8x16xf32> to vector<8xf32>
    %42 = vector.shape_cast %41 : vector<8xf32> to vector<8x1xf32>
    %43 = tpu.reciprocal %42 {approx = true} : vector<8x1xf32> -> vector<8x1xf32>
    %44 = vector.broadcast %43 : vector<8x1xf32> to vector<8x16xf32>
    %45 = arith.mulf %40, %44 : vector<8x16xf32>
    %46 = arith.truncf %45 : vector<8x16xf32> to vector<8x16xbf16>
    %47 = vector.extract_strided_slice %22 {offsets = [0, 0], sizes = [16, 32], strides = [1, 1]} : vector<16x128xbf16> to vector<16x32xbf16>
    %cst_20 = arith.constant dense<0.000000e+00> : vector<8x32xf32>
    %48 = tpu.matmul %46, %47, %cst_20 {dimension_numbers = #tpu.dot_dimension_numbers<[1], [0], [0], [1], [0, 0, 1, 1], [], []>} : vector<8x16xbf16>, vector<16x32xbf16>, vector<8x32xf32> -> vector<8x32xf32>
    %c0_21 = arith.constant 0 : index
    %c0_22 = arith.constant 0 : index
    %49 = vector.load %arg11[%c0_21, %c0_22] : memref<8x128xf32, #tpu.memory_space<vmem>>, vector<8x32xf32>
    tpu.vector_store %arg11[%c0_21, %c0_22], %48 {strides = array<i32>} : memref<8x128xf32, #tpu.memory_space<vmem>>, vector<8x32xf32>,
    %50 = vector.extract_strided_slice %18 {offsets = [0, 32], sizes = [8, 32], strides = [1, 1]} : vector<8x128xbf16> to vector<8x32xbf16>
    %51 = vector.extract_strided_slice %20 {offsets = [0, 32], sizes = [16, 32], strides = [1, 1]} : vector<16x128xbf16> to vector<16x32xbf16>
    %cst_23 = arith.constant dense<0.000000e+00> : vector<8x16xf32>
    %52 = tpu.matmul %50, %51, %cst_23 {dimension_numbers = #tpu.dot_dimension_numbers<[1], [1], [0], [0], [0, 0, 1, 0], [], []>} : vector<8x32xbf16>, vector<16x32xbf16>, vector<8x16xf32> -> vector<8x16xf32>
    %53 = arith.addf %52, %31 : vector<8x16xf32>
    %cst_24 = arith.constant dense<0xFF800000> : vector<8xf32>
    %54 = vector.multi_reduction <maximumf>, %53, %cst_24 [1] : vector<8x16xf32> to vector<8xf32>
    %55 = vector.shape_cast %54 : vector<8xf32> to vector<8x1xf32>
    %56 = vector.broadcast %55 : vector<8x1xf32> to vector<8x16xf32>
    %57 = arith.subf %53, %56 : vector<8x16xf32>
    %58 = math.exp %57 : vector<8x16xf32>
    %cst_25 = arith.constant dense<0.000000e+00> : vector<8xf32>
    %59 = vector.multi_reduction <add>, %58, %cst_25 [1] : vector<8x16xf32> to vector<8xf32>
    %60 = vector.shape_cast %59 : vector<8xf32> to vector<8x1xf32>
    %61 = tpu.reciprocal %60 {approx = true} : vector<8x1xf32> -> vector<8x1xf32>
    %62 = vector.broadcast %61 : vector<8x1xf32> to vector<8x16xf32>
    %63 = arith.mulf %58, %62 : vector<8x16xf32>
    %64 = arith.truncf %63 : vector<8x16xf32> to vector<8x16xbf16>
    %65 = vector.extract_strided_slice %22 {offsets = [0, 32], sizes = [16, 32], strides = [1, 1]} : vector<16x128xbf16> to vector<16x32xbf16>
    %cst_26 = arith.constant dense<0.000000e+00> : vector<8x32xf32>
    %66 = tpu.matmul %64, %65, %cst_26 {dimension_numbers = #tpu.dot_dimension_numbers<[1], [0], [0], [1], [0, 0, 1, 1], [], []>} : vector<8x16xbf16>, vector<16x32xbf16>, vector<8x32xf32> -> vector<8x32xf32>
    %c0_27 = arith.constant 0 : index
    %c32 = arith.constant 32 : index
    %67 = vector.load %arg11[%c0_27, %c32] : memref<8x128xf32, #tpu.memory_space<vmem>>, vector<8x32xf32>
    tpu.vector_store %arg11[%c0_27, %c32], %66 {strides = array<i32>} : memref<8x128xf32, #tpu.memory_space<vmem>>, vector<8x32xf32>,
    %68 = vector.extract_strided_slice %18 {offsets = [0, 64], sizes = [8, 32], strides = [1, 1]} : vector<8x128xbf16> to vector<8x32xbf16>
    %69 = vector.extract_strided_slice %20 {offsets = [0, 64], sizes = [16, 32], strides = [1, 1]} : vector<16x128xbf16> to vector<16x32xbf16>
    %cst_28 = arith.constant dense<0.000000e+00> : vector<8x16xf32>
    %70 = tpu.matmul %68, %69, %cst_28 {dimension_numbers = #tpu.dot_dimension_numbers<[1], [1], [0], [0], [0, 0, 1, 0], [], []>} : vector<8x32xbf16>, vector<16x32xbf16>, vector<8x16xf32> -> vector<8x16xf32>
    %71 = arith.addf %70, %31 : vector<8x16xf32>
    %cst_29 = arith.constant dense<0xFF800000> : vector<8xf32>
    %72 = vector.multi_reduction <maximumf>, %71, %cst_29 [1] : vector<8x16xf32> to vector<8xf32>
    %73 = vector.shape_cast %72 : vector<8xf32> to vector<8x1xf32>
    %74 = vector.broadcast %73 : vector<8x1xf32> to vector<8x16xf32>
    %75 = arith.subf %71, %74 : vector<8x16xf32>
    %76 = math.exp %75 : vector<8x16xf32>
    %cst_30 = arith.constant dense<0.000000e+00> : vector<8xf32>
    %77 = vector.multi_reduction <add>, %76, %cst_30 [1] : vector<8x16xf32> to vector<8xf32>
    %78 = vector.shape_cast %77 : vector<8xf32> to vector<8x1xf32>
    %79 = tpu.reciprocal %78 {approx = true} : vector<8x1xf32> -> vector<8x1xf32>
    %80 = vector.broadcast %79 : vector<8x1xf32> to vector<8x16xf32>
    %81 = arith.mulf %76, %80 : vector<8x16xf32>
    %82 = arith.truncf %81 : vector<8x16xf32> to vector<8x16xbf16>
    %83 = vector.extract_strided_slice %22 {offsets = [0, 64], sizes = [16, 32], strides = [1, 1]} : vector<16x128xbf16> to vector<16x32xbf16>
    %cst_31 = arith.constant dense<0.000000e+00> : vector<8x32xf32>
    %84 = tpu.matmul %82, %83, %cst_31 {dimension_numbers = #tpu.dot_dimension_numbers<[1], [0], [0], [1], [0, 0, 1, 1], [], []>} : vector<8x16xbf16>, vector<16x32xbf16>, vector<8x32xf32> -> vector<8x32xf32>
    %c0_32 = arith.constant 0 : index
    %c64 = arith.constant 64 : index
    %85 = vector.load %arg11[%c0_32, %c64] : memref<8x128xf32, #tpu.memory_space<vmem>>, vector<8x32xf32>
    tpu.vector_store %arg11[%c0_32, %c64], %84 {strides = array<i32>} : memref<8x128xf32, #tpu.memory_space<vmem>>, vector<8x32xf32>,
    %86 = vector.extract_strided_slice %18 {offsets = [0, 96], sizes = [8, 32], strides = [1, 1]} : vector<8x128xbf16> to vector<8x32xbf16>
    %87 = vector.extract_strided_slice %20 {offsets = [0, 96], sizes = [16, 32], strides = [1, 1]} : vector<16x128xbf16> to vector<16x32xbf16>
    %cst_33 = arith.constant dense<0.000000e+00> : vector<8x16xf32>
    %88 = tpu.matmul %86, %87, %cst_33 {dimension_numbers = #tpu.dot_dimension_numbers<[1], [1], [0], [0], [0, 0, 1, 0], [], []>} : vector<8x32xbf16>, vector<16x32xbf16>, vector<8x16xf32> -> vector<8x16xf32>
    %89 = arith.addf %88, %31 : vector<8x16xf32>
    %cst_34 = arith.constant dense<0xFF800000> : vector<8xf32>
    %90 = vector.multi_reduction <maximumf>, %89, %cst_34 [1] : vector<8x16xf32> to vector<8xf32>
    %91 = vector.shape_cast %90 : vector<8xf32> to vector<8x1xf32>
    %92 = vector.broadcast %91 : vector<8x1xf32> to vector<8x16xf32>
    %93 = arith.subf %89, %92 : vector<8x16xf32>
    %94 = math.exp %93 : vector<8x16xf32>
    %cst_35 = arith.constant dense<0.000000e+00> : vector<8xf32>
    %95 = vector.multi_reduction <add>, %94, %cst_35 [1] : vector<8x16xf32> to vector<8xf32>
    %96 = vector.shape_cast %95 : vector<8xf32> to vector<8x1xf32>
    %97 = tpu.reciprocal %96 {approx = true} : vector<8x1xf32> -> vector<8x1xf32>
    %98 = vector.broadcast %97 : vector<8x1xf32> to vector<8x16xf32>
    %99 = arith.mulf %94, %98 : vector<8x16xf32>
    %100 = arith.truncf %99 : vector<8x16xf32> to vector<8x16xbf16>
    %101 = vector.extract_strided_slice %22 {offsets = [0, 96], sizes = [16, 32], strides = [1, 1]} : vector<16x128xbf16> to vector<16x32xbf16>
    %cst_36 = arith.constant dense<0.000000e+00> : vector<8x32xf32>
    %102 = tpu.matmul %100, %101, %cst_36 {dimension_numbers = #tpu.dot_dimension_numbers<[1], [0], [0], [1], [0, 0, 1, 1], [], []>} : vector<8x16xbf16>, vector<16x32xbf16>, vector<8x32xf32> -> vector<8x32xf32>
    %c0_37 = arith.constant 0 : index
    %c96 = arith.constant 96 : index
    %103 = vector.load %arg11[%c0_37, %c96] : memref<8x128xf32, #tpu.memory_space<vmem>>, vector<8x32xf32>
    tpu.vector_store %arg11[%c0_37, %c96], %102 {strides = array<i32>} : memref<8x128xf32, #tpu.memory_space<vmem>>, vector<8x32xf32>,
    %c0_38 = arith.constant 0 : index
    %c0_39 = arith.constant 0 : index
    %104 = vector.load %arg11[%c0_38, %c0_39] : memref<8x128xf32, #tpu.memory_space<vmem>>, vector<8x128xf32>
    %105 = arith.truncf %104 : vector<8x128xf32> to vector<8x128xbf16>
    %c0_40 = arith.constant 0 : index
    %c0_41 = arith.constant 0 : index
    %106 = vector.load %arg8[%c0_40, %c0_41] : memref<128x128xbf16, #tpu.memory_space<vmem>>, vector<128x128xbf16>
    %cst_42 = arith.constant dense<0.000000e+00> : vector<8x128xf32>
    %107 = tpu.matmul %105, %106, %cst_42 {dimension_numbers = #tpu.dot_dimension_numbers<[1], [0], [0], [1], [0, 0, 1, 1], [], []>} : vector<8x128xbf16>, vector<128x128xbf16>, vector<8x128xf32> -> vector<8x128xf32>
    %c0_43 = arith.constant 0 : index
    %c0_44 = arith.constant 0 : index
    %108 = vector.load %arg9[%c0_43, %c0_44] : memref<1x128xf32, #tpu.memory_space<vmem>>, vector<1x128xf32>
    %109 = vector.broadcast %108 : vector<1x128xf32> to vector<8x128xf32>
    %110 = arith.addf %107, %109 : vector<8x128xf32>
    %c0_45 = arith.constant 0 : index
    %c0_46 = arith.constant 0 : index
    %c0_47 = arith.constant 0 : index
    %111 = vector.load %arg10[%c0_45, %c0_46, %c0_47] : memref<1x8x128xf32, #tpu.memory_space<vmem>>, vector<1x8x128xf32>
    %112 = vector.shape_cast %111 : vector<1x8x128xf32> to vector<8x128xf32>
    %113 = vector.shape_cast %110 : vector<8x128xf32> to vector<1x8x128xf32>
    tpu.vector_store %arg10[%c0_45, %c0_46, %c0_47], %113 {strides = array<i32>} : memref<1x8x128xf32, #tpu.memory_space<vmem>>, vector<1x8x128xf32>,
    return
  }
  func.func @transform_0(%arg0: i32, %arg1: i32) -> (i32, i32, i32) {
    %c0_i32 = arith.constant 0 : i32
    %c0_i32_0 = arith.constant 0 : i32
    return %arg0, %arg1, %c0_i32 : i32, i32, i32
  }
  func.func @transform_1(%arg0: i32, %arg1: i32) -> (i32, i32, i32) {
    %c0_i32 = arith.constant 0 : i32
    %c0_i32_0 = arith.constant 0 : i32
    %c0_i32_1 = arith.constant 0 : i32
    return %arg0, %c0_i32, %c0_i32_0 : i32, i32, i32
  }
  func.func @transform_2(%arg0: i32, %arg1: i32) -> (i32, i32) {
    %c0_i32 = arith.constant 0 : i32
    %c0_i32_0 = arith.constant 0 : i32
    %c0_i32_1 = arith.constant 0 : i32
    return %c0_i32, %c0_i32_0 : i32, i32
  }
  func.func @transform_3(%arg0: i32, %arg1: i32) -> (i32, i32) {
    %c0_i32 = arith.constant 0 : i32
    %c0_i32_0 = arith.constant 0 : i32
    %c0_i32_1 = arith.constant 0 : i32
    return %c0_i32, %c0_i32_0 : i32, i32
  }
  func.func @transform_4(%arg0: i32, %arg1: i32) -> (i32, i32) {
    %c0_i32 = arith.constant 0 : i32
    %c0_i32_0 = arith.constant 0 : i32
    %c0_i32_1 = arith.constant 0 : i32
    return %c0_i32, %c0_i32_0 : i32, i32
  }
  func.func @transform_5(%arg0: i32, %arg1: i32) -> (i32, i32) {
    %c0_i32 = arith.constant 0 : i32
    %c0_i32_0 = arith.constant 0 : i32
    %c0_i32_1 = arith.constant 0 : i32
    return %c0_i32, %c0_i32_0 : i32, i32
  }
  func.func @transform_6(%arg0: i32, %arg1: i32) -> (i32, i32) {
    %c0_i32 = arith.constant 0 : i32
    %c0_i32_0 = arith.constant 0 : i32
    %c0_i32_1 = arith.constant 0 : i32
    return %c0_i32, %c0_i32_0 : i32, i32
  }
  func.func @transform_7(%arg0: i32, %arg1: i32) -> (i32, i32) {
    %c0_i32 = arith.constant 0 : i32
    %c0_i32_0 = arith.constant 0 : i32
    %c0_i32_1 = arith.constant 0 : i32
    return %c0_i32, %c0_i32_0 : i32, i32
  }
  func.func @transform_8(%arg0: i32, %arg1: i32) -> (i32, i32, i32) {
    %c0_i32 = arith.constant 0 : i32
    %c0_i32_0 = arith.constant 0 : i32
    return %arg0, %arg1, %c0_i32 : i32, i32, i32
  }
}

module attributes {stable_mosaic.version = 11 : i64} {
  func.func @_ffn_addnorm_kernel(%arg0: i32, %arg1: i32, %arg2: memref<16x128xf32, #tpu.memory_space<vmem>>, %arg3: memref<128x256xbf16, #tpu.memory_space<vmem>>, %arg4: memref<1x256xf32, #tpu.memory_space<vmem>>, %arg5: memref<256x128xbf16, #tpu.memory_space<vmem>>, %arg6: memref<1x128xf32, #tpu.memory_space<vmem>>, %arg7: memref<1x128xf32, #tpu.memory_space<vmem>>, %arg8: memref<1x128xf32, #tpu.memory_space<vmem>>, %arg9: memref<16x128xf32, #tpu.memory_space<vmem>>, %arg10: memref<16x128xf32, #tpu.memory_space<vmem>>) attributes {dimension_semantics = [#tpu.dimension_semantics<parallel>, #tpu.dimension_semantics<arbitrary>], iteration_bounds = array<i64: 2, 2>, scalar_prefetch = 0 : i64, scratch_operands = 1 : i64, tpu.core_type = #tpu.core_type<tc>, window_params = [{transform_indices = @transform_0, window_bounds = array<i64: 16, 128>}, {transform_indices = @transform_1, window_bounds = array<i64: 128, 256>}, {transform_indices = @transform_2, window_bounds = array<i64: 1, 256>}, {transform_indices = @transform_3, window_bounds = array<i64: 256, 128>}, {pipeline_mode = #tpu.pipeline_mode<synchronous>, transform_indices = @transform_4, window_bounds = array<i64: 1, 128>}, {pipeline_mode = #tpu.pipeline_mode<synchronous>, transform_indices = @transform_5, window_bounds = array<i64: 1, 128>}, {pipeline_mode = #tpu.pipeline_mode<synchronous>, transform_indices = @transform_6, window_bounds = array<i64: 1, 128>}, {transform_indices = @transform_7, window_bounds = array<i64: 16, 128>}]} {
    %c0_i32 = arith.constant 0 : i32
    %0 = arith.cmpi eq, %arg1, %c0_i32 : i32
    %1 = arith.extui %0 : i1 to i32
    %c0_i32_0 = arith.constant 0 : i32
    %2 = arith.cmpi ne, %1, %c0_i32_0 : i32
    scf.if %2 {
      %cst_15 = arith.constant 0.000000e+00 : f32
      %21 = vector.broadcast %cst_15 : f32 to vector<16x128xf32>
      %c0_16 = arith.constant 0 : index
      %c0_17 = arith.constant 0 : index
      %22 = vector.load %arg10[%c0_16, %c0_17] : memref<16x128xf32, #tpu.memory_space<vmem>>, vector<16x128xf32>
      tpu.vector_store %arg10[%c0_16, %c0_17], %21 {strides = array<i32>} : memref<16x128xf32, #tpu.memory_space<vmem>>, vector<16x128xf32>,
    } else {
    }
    %c0 = arith.constant 0 : index
    %c0_1 = arith.constant 0 : index
    %3 = vector.load %arg2[%c0, %c0_1] : memref<16x128xf32, #tpu.memory_space<vmem>>, vector<16x128xf32>
    %4 = arith.truncf %3 : vector<16x128xf32> to vector<16x128xbf16>
    %c0_2 = arith.constant 0 : index
    %c0_3 = arith.constant 0 : index
    %5 = vector.load %arg3[%c0_2, %c0_3] : memref<128x256xbf16, #tpu.memory_space<vmem>>, vector<128x256xbf16>
    %cst = arith.constant dense<0.000000e+00> : vector<16x256xf32>
    %6 = tpu.matmul %4, %5, %cst {dimension_numbers = #tpu.dot_dimension_numbers<[1], [0], [0], [1], [0, 0, 1, 1], [], []>} : vector<16x128xbf16>, vector<128x256xbf16>, vector<16x256xf32> -> vector<16x256xf32>
    %c0_4 = arith.constant 0 : index
    %c0_5 = arith.constant 0 : index
    %7 = vector.load %arg4[%c0_4, %c0_5] : memref<1x256xf32, #tpu.memory_space<vmem>>, vector<1x256xf32>
    %8 = vector.broadcast %7 : vector<1x256xf32> to vector<16x256xf32>
    %9 = arith.addf %6, %8 : vector<16x256xf32>
    %cst_6 = arith.constant 0.000000e+00 : f32
    %10 = vector.broadcast %cst_6 : f32 to vector<16x256xf32>
    %11 = arith.maximumf %9, %10 : vector<16x256xf32>
    %c0_7 = arith.constant 0 : index
    %c0_8 = arith.constant 0 : index
    %12 = vector.load %arg10[%c0_7, %c0_8] : memref<16x128xf32, #tpu.memory_space<vmem>>, vector<16x128xf32>
    %13 = arith.truncf %11 : vector<16x256xf32> to vector<16x256xbf16>
    %c0_9 = arith.constant 0 : index
    %c0_10 = arith.constant 0 : index
    %14 = vector.load %arg5[%c0_9, %c0_10] : memref<256x128xbf16, #tpu.memory_space<vmem>>, vector<256x128xbf16>
    %cst_11 = arith.constant dense<0.000000e+00> : vector<16x128xf32>
    %15 = tpu.matmul %13, %14, %cst_11 {dimension_numbers = #tpu.dot_dimension_numbers<[1], [0], [0], [1], [0, 0, 1, 1], [], []>} : vector<16x256xbf16>, vector<256x128xbf16>, vector<16x128xf32> -> vector<16x128xf32>
    %16 = arith.addf %12, %15 : vector<16x128xf32>
    %c0_12 = arith.constant 0 : index
    %c0_13 = arith.constant 0 : index
    %17 = vector.load %arg10[%c0_12, %c0_13] : memref<16x128xf32, #tpu.memory_space<vmem>>, vector<16x128xf32>
    tpu.vector_store %arg10[%c0_12, %c0_13], %16 {strides = array<i32>} : memref<16x128xf32, #tpu.memory_space<vmem>>, vector<16x128xf32>,
    %c1_i32 = arith.constant 1 : i32
    %18 = arith.cmpi eq, %arg1, %c1_i32 : i32
    %19 = arith.extui %18 : i1 to i32
    %c0_i32_14 = arith.constant 0 : i32
    %20 = arith.cmpi ne, %19, %c0_i32_14 : i32
    scf.if %20 {
      %c0_15 = arith.constant 0 : index
      %c0_16 = arith.constant 0 : index
      %21 = vector.load %arg2[%c0_15, %c0_16] : memref<16x128xf32, #tpu.memory_space<vmem>>, vector<16x128xf32>
      %c0_17 = arith.constant 0 : index
      %c0_18 = arith.constant 0 : index
      %22 = vector.load %arg10[%c0_17, %c0_18] : memref<16x128xf32, #tpu.memory_space<vmem>>, vector<16x128xf32>
      %23 = arith.addf %21, %22 : vector<16x128xf32>
      %c0_19 = arith.constant 0 : index
      %c0_20 = arith.constant 0 : index
      %24 = vector.load %arg6[%c0_19, %c0_20] : memref<1x128xf32, #tpu.memory_space<vmem>>, vector<1x128xf32>
      %25 = vector.broadcast %24 : vector<1x128xf32> to vector<16x128xf32>
      %26 = arith.addf %23, %25 : vector<16x128xf32>
      %cst_21 = arith.constant dense<0.000000e+00> : vector<16xf32>
      %27 = vector.multi_reduction <add>, %26, %cst_21 [1] : vector<16x128xf32> to vector<16xf32>
      %28 = vector.shape_cast %27 : vector<16xf32> to vector<16x1xf32>
      %cst_22 = arith.constant 1.280000e+02 : f32
      %29 = vector.broadcast %cst_22 : f32 to vector<16x1xf32>
      %30 = arith.divf %28, %29 : vector<16x1xf32>
      %31 = vector.broadcast %30 : vector<16x1xf32> to vector<16x128xf32>
      %32 = arith.subf %26, %31 : vector<16x128xf32>
      %33 = arith.mulf %32, %32 : vector<16x128xf32>
      %cst_23 = arith.constant dense<0.000000e+00> : vector<16xf32>
      %34 = vector.multi_reduction <add>, %33, %cst_23 [1] : vector<16x128xf32> to vector<16xf32>
      %35 = vector.shape_cast %34 : vector<16xf32> to vector<16x1xf32>
      %cst_24 = arith.constant 1.280000e+02 : f32
      %36 = vector.broadcast %cst_24 : f32 to vector<16x1xf32>
      %37 = arith.divf %35, %36 : vector<16x1xf32>
      %38 = vector.broadcast %30 : vector<16x1xf32> to vector<16x128xf32>
      %39 = arith.subf %26, %38 : vector<16x128xf32>
      %cst_25 = arith.constant 9.99999974E-6 : f32
      %40 = vector.broadcast %cst_25 : f32 to vector<16x1xf32>
      %41 = arith.addf %37, %40 : vector<16x1xf32>
      %42 = math.rsqrt %41 : vector<16x1xf32>
      %43 = vector.broadcast %42 : vector<16x1xf32> to vector<16x128xf32>
      %44 = arith.mulf %39, %43 : vector<16x128xf32>
      %c0_26 = arith.constant 0 : index
      %c0_27 = arith.constant 0 : index
      %45 = vector.load %arg7[%c0_26, %c0_27] : memref<1x128xf32, #tpu.memory_space<vmem>>, vector<1x128xf32>
      %46 = vector.broadcast %45 : vector<1x128xf32> to vector<16x128xf32>
      %47 = arith.mulf %44, %46 : vector<16x128xf32>
      %c0_28 = arith.constant 0 : index
      %c0_29 = arith.constant 0 : index
      %48 = vector.load %arg8[%c0_28, %c0_29] : memref<1x128xf32, #tpu.memory_space<vmem>>, vector<1x128xf32>
      %49 = vector.broadcast %48 : vector<1x128xf32> to vector<16x128xf32>
      %50 = arith.addf %47, %49 : vector<16x128xf32>
      %c0_30 = arith.constant 0 : index
      %c0_31 = arith.constant 0 : index
      %51 = vector.load %arg9[%c0_30, %c0_31] : memref<16x128xf32, #tpu.memory_space<vmem>>, vector<16x128xf32>
      tpu.vector_store %arg9[%c0_30, %c0_31], %50 {strides = array<i32>} : memref<16x128xf32, #tpu.memory_space<vmem>>, vector<16x128xf32>,
    } else {
    }
    return
  }
  func.func @transform_0(%arg0: i32, %arg1: i32) -> (i32, i32) {
    %c0_i32 = arith.constant 0 : i32
    %c0_i32_0 = arith.constant 0 : i32
    return %arg0, %c0_i32 : i32, i32
  }
  func.func @transform_1(%arg0: i32, %arg1: i32) -> (i32, i32) {
    %c0_i32 = arith.constant 0 : i32
    %c0_i32_0 = arith.constant 0 : i32
    return %c0_i32, %arg1 : i32, i32
  }
  func.func @transform_2(%arg0: i32, %arg1: i32) -> (i32, i32) {
    %c0_i32 = arith.constant 0 : i32
    %c0_i32_0 = arith.constant 0 : i32
    return %c0_i32, %arg1 : i32, i32
  }
  func.func @transform_3(%arg0: i32, %arg1: i32) -> (i32, i32) {
    %c0_i32 = arith.constant 0 : i32
    %c0_i32_0 = arith.constant 0 : i32
    return %arg1, %c0_i32 : i32, i32
  }
  func.func @transform_4(%arg0: i32, %arg1: i32) -> (i32, i32) {
    %c0_i32 = arith.constant 0 : i32
    %c0_i32_0 = arith.constant 0 : i32
    %c0_i32_1 = arith.constant 0 : i32
    return %c0_i32, %c0_i32_0 : i32, i32
  }
  func.func @transform_5(%arg0: i32, %arg1: i32) -> (i32, i32) {
    %c0_i32 = arith.constant 0 : i32
    %c0_i32_0 = arith.constant 0 : i32
    %c0_i32_1 = arith.constant 0 : i32
    return %c0_i32, %c0_i32_0 : i32, i32
  }
  func.func @transform_6(%arg0: i32, %arg1: i32) -> (i32, i32) {
    %c0_i32 = arith.constant 0 : i32
    %c0_i32_0 = arith.constant 0 : i32
    %c0_i32_1 = arith.constant 0 : i32
    return %c0_i32, %c0_i32_0 : i32, i32
  }
  func.func @transform_7(%arg0: i32, %arg1: i32) -> (i32, i32) {
    %c0_i32 = arith.constant 0 : i32
    %c0_i32_0 = arith.constant 0 : i32
    return %arg0, %c0_i32 : i32, i32
  }
}

module attributes {stable_mosaic.version = 11 : i64} {
  func.func @_mha_kernel(%arg0: i32, %arg1: i32, %arg2: memref<1x8x128xf32, #tpu.memory_space<vmem>>, %arg3: memref<1x16x128xf32, #tpu.memory_space<vmem>>, %arg4: memref<128x128xbf16, #tpu.memory_space<vmem>>, %arg5: memref<1x128xf32, #tpu.memory_space<vmem>>, %arg6: memref<128x256xbf16, #tpu.memory_space<vmem>>, %arg7: memref<1x256xf32, #tpu.memory_space<vmem>>, %arg8: memref<128x128xbf16, #tpu.memory_space<vmem>>, %arg9: memref<1x128xf32, #tpu.memory_space<vmem>>, %arg10: memref<1x8x128xf32, #tpu.memory_space<vmem>>, %arg11: memref<8x128xf32, #tpu.memory_space<vmem>>) attributes {dimension_semantics = [#tpu.dimension_semantics<parallel>, #tpu.dimension_semantics<parallel>], iteration_bounds = array<i64: 2, 2>, scalar_prefetch = 0 : i64, scratch_operands = 1 : i64, tpu.core_type = #tpu.core_type<tc>, window_params = [{transform_indices = @transform_0, window_bounds = array<i64: 1, 8, 128>}, {transform_indices = @transform_1, window_bounds = array<i64: 1, 16, 128>}, {pipeline_mode = #tpu.pipeline_mode<synchronous>, transform_indices = @transform_2, window_bounds = array<i64: 128, 128>}, {pipeline_mode = #tpu.pipeline_mode<synchronous>, transform_indices = @transform_3, window_bounds = array<i64: 1, 128>}, {pipeline_mode = #tpu.pipeline_mode<synchronous>, transform_indices = @transform_4, window_bounds = array<i64: 128, 256>}, {pipeline_mode = #tpu.pipeline_mode<synchronous>, transform_indices = @transform_5, window_bounds = array<i64: 1, 256>}, {pipeline_mode = #tpu.pipeline_mode<synchronous>, transform_indices = @transform_6, window_bounds = array<i64: 128, 128>}, {pipeline_mode = #tpu.pipeline_mode<synchronous>, transform_indices = @transform_7, window_bounds = array<i64: 1, 128>}, {transform_indices = @transform_8, window_bounds = array<i64: 1, 8, 128>}]} {
    %c0 = arith.constant 0 : index
    %c0_0 = arith.constant 0 : index
    %c0_1 = arith.constant 0 : index
    %0 = vector.load %arg2[%c0, %c0_0, %c0_1] : memref<1x8x128xf32, #tpu.memory_space<vmem>>, vector<1x8x128xf32>
    %1 = vector.shape_cast %0 : vector<1x8x128xf32> to vector<8x128xf32>
    %2 = arith.truncf %1 : vector<8x128xf32> to vector<8x128xbf16>
    %c0_2 = arith.constant 0 : index
    %c0_3 = arith.constant 0 : index
    %c0_4 = arith.constant 0 : index
    %3 = vector.load %arg3[%c0_2, %c0_3, %c0_4] : memref<1x16x128xf32, #tpu.memory_space<vmem>>, vector<1x16x128xf32>
    %4 = vector.shape_cast %3 : vector<1x16x128xf32> to vector<16x128xf32>
    %5 = arith.truncf %4 : vector<16x128xf32> to vector<16x128xbf16>
    %c0_5 = arith.constant 0 : index
    %c0_6 = arith.constant 0 : index
    %6 = vector.load %arg4[%c0_5, %c0_6] : memref<128x128xbf16, #tpu.memory_space<vmem>>, vector<128x128xbf16>
    %cst = arith.constant dense<0.000000e+00> : vector<8x128xf32>
    %7 = tpu.matmul %2, %6, %cst {dimension_numbers = #tpu.dot_dimension_numbers<[1], [0], [0], [1], [0, 0, 1, 1], [], []>} : vector<8x128xbf16>, vector<128x128xbf16>, vector<8x128xf32> -> vector<8x128xf32>
    %c0_7 = arith.constant 0 : index
    %c0_8 = arith.constant 0 : index
    %8 = vector.load %arg5[%c0_7, %c0_8] : memref<1x128xf32, #tpu.memory_space<vmem>>, vector<1x128xf32>
    %9 = vector.broadcast %8 : vector<1x128xf32> to vector<8x128xf32>
    %10 = arith.addf %7, %9 : vector<8x128xf32>
    %cst_9 = arith.constant 0.176776692 : f32
    %11 = vector.broadcast %cst_9 : f32 to vector<8x128xf32>
    %12 = arith.mulf %10, %11 : vector<8x128xf32>
    %c0_10 = arith.constant 0 : index
    %c0_11 = arith.constant 0 : index
    %13 = vector.load %arg6[%c0_10, %c0_11] : memref<128x256xbf16, #tpu.memory_space<vmem>>, vector<128x256xbf16>
    %cst_12 = arith.constant dense<0.000000e+00> : vector<16x256xf32>
    %14 = tpu.matmul %5, %13, %cst_12 {dimension_numbers = #tpu.dot_dimension_numbers<[1], [0], [0], [1], [0, 0, 1, 1], [], []>} : vector<16x128xbf16>, vector<128x256xbf16>, vector<16x256xf32> -> vector<16x256xf32>
    %c0_13 = arith.constant 0 : index
    %c0_14 = arith.constant 0 : index
    %15 = vector.load %arg7[%c0_13, %c0_14] : memref<1x256xf32, #tpu.memory_space<vmem>>, vector<1x256xf32>
    %16 = vector.broadcast %15 : vector<1x256xf32> to vector<16x256xf32>
    %17 = arith.addf %14, %16 : vector<16x256xf32>
    %18 = arith.truncf %12 : vector<8x128xf32> to vector<8x128xbf16>
    %19 = vector.extract_strided_slice %17 {offsets = [0, 0], sizes = [16, 128], strides = [1, 1]} : vector<16x256xf32> to vector<16x128xf32>
    %20 = arith.truncf %19 : vector<16x128xf32> to vector<16x128xbf16>
    %21 = vector.extract_strided_slice %17 {offsets = [0, 128], sizes = [16, 128], strides = [1, 1]} : vector<16x256xf32> to vector<16x128xf32>
    %22 = arith.truncf %21 : vector<16x128xf32> to vector<16x128xbf16>
    %c8_i32 = arith.constant 8 : i32
    %23 = arith.muli %arg1, %c8_i32 : i32
    %24 = tpu.iota {dimensions = array<i32: 0>} : vector<8x16xi32>
    %25 = vector.broadcast %23 : i32 to vector<8x16xi32>
    %26 = arith.addi %25, %24 : vector<8x16xi32>
    %27 = tpu.iota {dimensions = array<i32: 1>} : vector<8x16xi32>
    %28 = arith.cmpi sge, %26, %27 : vector<8x16xi32>
    %cst_15 = arith.constant 0.000000e+00 : f32
    %cst_16 = arith.constant -1.000000e+09 : f32
    %29 = vector.broadcast %cst_15 : f32 to vector<8x16xf32>
    %30 = vector.broadcast %cst_16 : f32 to vector<8x16xf32>
    %31 = arith.select %28, %29, %30 : vector<8x16xi1>, vector<8x16xf32>
    %32 = vector.extract_strided_slice %18 {offsets = [0, 0], sizes = [8, 32], strides = [1, 1]} : vector<8x128xbf16> to vector<8x32xbf16>
    %33 = vector.extract_strided_slice %20 {offsets = [0, 0], sizes = [16, 32], strides = [1, 1]} : vector<16x128xbf16> to vector<16x32xbf16>
    %cst_17 = arith.constant dense<0.000000e+00> : vector<8x16xf32>
    %34 = tpu.matmul %32, %33, %cst_17 {dimension_numbers = #tpu.dot_dimension_numbers<[1], [1], [0], [0], [0, 0, 1, 0], [], []>} : vector<8x32xbf16>, vector<16x32xbf16>, vector<8x16xf32> -> vector<8x16xf32>
    %35 = arith.addf %34, %31 : vector<8x16xf32>
    %cst_18 = arith.constant dense<0xFF800000> : vector<8xf32>
    %36 = vector.multi_reduction <maximumf>, %35, %cst_18 [1] : vector<8x16xf32> to vector<8xf32>
    %37 = vector.shape_cast %36 : vector<8xf32> to vector<8x1xf32>
    %38 = vector.broadcast %37 : vector<8x1xf32> to vector<8x16xf32>
    %39 = arith.subf %35, %38 : vector<8x16xf32>
    %40 = math.exp %39 : vector<8x16xf32>
    %cst_19 = arith.constant dense<0.000000e+00> : vector<8xf32>
    %41 = vector.multi_reduction <add>, %40, %cst_19 [1] : vector<8x16xf32> to vector<8xf32>
    %42 = vector.shape_cast %41 : vector<8xf32> to vector<8x1xf32>
    %43 = tpu.reciprocal %42 {approx = true} : vector<8x1xf32> -> vector<8x1xf32>
    %44 = vector.broadcast %43 : vector<8x1xf32> to vector<8x16xf32>
    %45 = arith.mulf %40, %44 : vector<8x16xf32>
    %46 = arith.truncf %45 : vector<8x16xf32> to vector<8x16xbf16>
    %47 = vector.extract_strided_slice %22 {offsets = [0, 0], sizes = [16, 32], strides = [1, 1]} : vector<16x128xbf16> to vector<16x32xbf16>
    %cst_20 = arith.constant dense<0.000000e+00> : vector<8x32xf32>
    %48 = tpu.matmul %46, %47, %cst_20 {dimension_numbers = #tpu.dot_dimension_numbers<[1], [0], [0], [1], [0, 0, 1, 1], [], []>} : vector<8x16xbf16>, vector<16x32xbf16>, vector<8x32xf32> -> vector<8x32xf32>
    %c0_21 = arith.constant 0 : index
    %c0_22 = arith.constant 0 : index
    %49 = vector.load %arg11[%c0_21, %c0_22] : memref<8x128xf32, #tpu.memory_space<vmem>>, vector<8x32xf32>
    tpu.vector_store %arg11[%c0_21, %c0_22], %48 {strides = array<i32>} : memref<8x128xf32, #tpu.memory_space<vmem>>, vector<8x32xf32>,
    %50 = vector.extract_strided_slice %18 {offsets = [0, 32], sizes = [8, 32], strides = [1, 1]} : vector<8x128xbf16> to vector<8x32xbf16>
    %51 = vector.extract_strided_slice %20 {offsets = [0, 32], sizes = [16, 32], strides = [1, 1]} : vector<16x128xbf16> to vector<16x32xbf16>
    %cst_23 = arith.constant dense<0.000000e+00> : vector<8x16xf32>
    %52 = tpu.matmul %50, %51, %cst_23 {dimension_numbers = #tpu.dot_dimension_numbers<[1], [1], [0], [0], [0, 0, 1, 0], [], []>} : vector<8x32xbf16>, vector<16x32xbf16>, vector<8x16xf32> -> vector<8x16xf32>
    %53 = arith.addf %52, %31 : vector<8x16xf32>
    %cst_24 = arith.constant dense<0xFF800000> : vector<8xf32>
    %54 = vector.multi_reduction <maximumf>, %53, %cst_24 [1] : vector<8x16xf32> to vector<8xf32>
    %55 = vector.shape_cast %54 : vector<8xf32> to vector<8x1xf32>
    %56 = vector.broadcast %55 : vector<8x1xf32> to vector<8x16xf32>
    %57 = arith.subf %53, %56 : vector<8x16xf32>
    %58 = math.exp %57 : vector<8x16xf32>
    %cst_25 = arith.constant dense<0.000000e+00> : vector<8xf32>
    %59 = vector.multi_reduction <add>, %58, %cst_25 [1] : vector<8x16xf32> to vector<8xf32>
    %60 = vector.shape_cast %59 : vector<8xf32> to vector<8x1xf32>
    %61 = tpu.reciprocal %60 {approx = true} : vector<8x1xf32> -> vector<8x1xf32>
    %62 = vector.broadcast %61 : vector<8x1xf32> to vector<8x16xf32>
    %63 = arith.mulf %58, %62 : vector<8x16xf32>
    %64 = arith.truncf %63 : vector<8x16xf32> to vector<8x16xbf16>
    %65 = vector.extract_strided_slice %22 {offsets = [0, 32], sizes = [16, 32], strides = [1, 1]} : vector<16x128xbf16> to vector<16x32xbf16>
    %cst_26 = arith.constant dense<0.000000e+00> : vector<8x32xf32>
    %66 = tpu.matmul %64, %65, %cst_26 {dimension_numbers = #tpu.dot_dimension_numbers<[1], [0], [0], [1], [0, 0, 1, 1], [], []>} : vector<8x16xbf16>, vector<16x32xbf16>, vector<8x32xf32> -> vector<8x32xf32>
    %c0_27 = arith.constant 0 : index
    %c32 = arith.constant 32 : index
    %67 = vector.load %arg11[%c0_27, %c32] : memref<8x128xf32, #tpu.memory_space<vmem>>, vector<8x32xf32>
    tpu.vector_store %arg11[%c0_27, %c32], %66 {strides = array<i32>} : memref<8x128xf32, #tpu.memory_space<vmem>>, vector<8x32xf32>,
    %68 = vector.extract_strided_slice %18 {offsets = [0, 64], sizes = [8, 32], strides = [1, 1]} : vector<8x128xbf16> to vector<8x32xbf16>
    %69 = vector.extract_strided_slice %20 {offsets = [0, 64], sizes = [16, 32], strides = [1, 1]} : vector<16x128xbf16> to vector<16x32xbf16>
    %cst_28 = arith.constant dense<0.000000e+00> : vector<8x16xf32>
    %70 = tpu.matmul %68, %69, %cst_28 {dimension_numbers = #tpu.dot_dimension_numbers<[1], [1], [0], [0], [0, 0, 1, 0], [], []>} : vector<8x32xbf16>, vector<16x32xbf16>, vector<8x16xf32> -> vector<8x16xf32>
    %71 = arith.addf %70, %31 : vector<8x16xf32>
    %cst_29 = arith.constant dense<0xFF800000> : vector<8xf32>
    %72 = vector.multi_reduction <maximumf>, %71, %cst_29 [1] : vector<8x16xf32> to vector<8xf32>
    %73 = vector.shape_cast %72 : vector<8xf32> to vector<8x1xf32>
    %74 = vector.broadcast %73 : vector<8x1xf32> to vector<8x16xf32>
    %75 = arith.subf %71, %74 : vector<8x16xf32>
    %76 = math.exp %75 : vector<8x16xf32>
    %cst_30 = arith.constant dense<0.000000e+00> : vector<8xf32>
    %77 = vector.multi_reduction <add>, %76, %cst_30 [1] : vector<8x16xf32> to vector<8xf32>
    %78 = vector.shape_cast %77 : vector<8xf32> to vector<8x1xf32>
    %79 = tpu.reciprocal %78 {approx = true} : vector<8x1xf32> -> vector<8x1xf32>
    %80 = vector.broadcast %79 : vector<8x1xf32> to vector<8x16xf32>
    %81 = arith.mulf %76, %80 : vector<8x16xf32>
    %82 = arith.truncf %81 : vector<8x16xf32> to vector<8x16xbf16>
    %83 = vector.extract_strided_slice %22 {offsets = [0, 64], sizes = [16, 32], strides = [1, 1]} : vector<16x128xbf16> to vector<16x32xbf16>
    %cst_31 = arith.constant dense<0.000000e+00> : vector<8x32xf32>
    %84 = tpu.matmul %82, %83, %cst_31 {dimension_numbers = #tpu.dot_dimension_numbers<[1], [0], [0], [1], [0, 0, 1, 1], [], []>} : vector<8x16xbf16>, vector<16x32xbf16>, vector<8x32xf32> -> vector<8x32xf32>
    %c0_32 = arith.constant 0 : index
    %c64 = arith.constant 64 : index
    %85 = vector.load %arg11[%c0_32, %c64] : memref<8x128xf32, #tpu.memory_space<vmem>>, vector<8x32xf32>
    tpu.vector_store %arg11[%c0_32, %c64], %84 {strides = array<i32>} : memref<8x128xf32, #tpu.memory_space<vmem>>, vector<8x32xf32>,
    %86 = vector.extract_strided_slice %18 {offsets = [0, 96], sizes = [8, 32], strides = [1, 1]} : vector<8x128xbf16> to vector<8x32xbf16>
    %87 = vector.extract_strided_slice %20 {offsets = [0, 96], sizes = [16, 32], strides = [1, 1]} : vector<16x128xbf16> to vector<16x32xbf16>
    %cst_33 = arith.constant dense<0.000000e+00> : vector<8x16xf32>
    %88 = tpu.matmul %86, %87, %cst_33 {dimension_numbers = #tpu.dot_dimension_numbers<[1], [1], [0], [0], [0, 0, 1, 0], [], []>} : vector<8x32xbf16>, vector<16x32xbf16>, vector<8x16xf32> -> vector<8x16xf32>
    %89 = arith.addf %88, %31 : vector<8x16xf32>
    %cst_34 = arith.constant dense<0xFF800000> : vector<8xf32>
    %90 = vector.multi_reduction <maximumf>, %89, %cst_34 [1] : vector<8x16xf32> to vector<8xf32>
    %91 = vector.shape_cast %90 : vector<8xf32> to vector<8x1xf32>
    %92 = vector.broadcast %91 : vector<8x1xf32> to vector<8x16xf32>
    %93 = arith.subf %89, %92 : vector<8x16xf32>
    %94 = math.exp %93 : vector<8x16xf32>
    %cst_35 = arith.constant dense<0.000000e+00> : vector<8xf32>
    %95 = vector.multi_reduction <add>, %94, %cst_35 [1] : vector<8x16xf32> to vector<8xf32>
    %96 = vector.shape_cast %95 : vector<8xf32> to vector<8x1xf32>
    %97 = tpu.reciprocal %96 {approx = true} : vector<8x1xf32> -> vector<8x1xf32>
    %98 = vector.broadcast %97 : vector<8x1xf32> to vector<8x16xf32>
    %99 = arith.mulf %94, %98 : vector<8x16xf32>
    %100 = arith.truncf %99 : vector<8x16xf32> to vector<8x16xbf16>
    %101 = vector.extract_strided_slice %22 {offsets = [0, 96], sizes = [16, 32], strides = [1, 1]} : vector<16x128xbf16> to vector<16x32xbf16>
    %cst_36 = arith.constant dense<0.000000e+00> : vector<8x32xf32>
    %102 = tpu.matmul %100, %101, %cst_36 {dimension_numbers = #tpu.dot_dimension_numbers<[1], [0], [0], [1], [0, 0, 1, 1], [], []>} : vector<8x16xbf16>, vector<16x32xbf16>, vector<8x32xf32> -> vector<8x32xf32>
    %c0_37 = arith.constant 0 : index
    %c96 = arith.constant 96 : index
    %103 = vector.load %arg11[%c0_37, %c96] : memref<8x128xf32, #tpu.memory_space<vmem>>, vector<8x32xf32>
    tpu.vector_store %arg11[%c0_37, %c96], %102 {strides = array<i32>} : memref<8x128xf32, #tpu.memory_space<vmem>>, vector<8x32xf32>,
    %c0_38 = arith.constant 0 : index
    %c0_39 = arith.constant 0 : index
    %104 = vector.load %arg11[%c0_38, %c0_39] : memref<8x128xf32, #tpu.memory_space<vmem>>, vector<8x128xf32>
    %105 = arith.truncf %104 : vector<8x128xf32> to vector<8x128xbf16>
    %c0_40 = arith.constant 0 : index
    %c0_41 = arith.constant 0 : index
    %106 = vector.load %arg8[%c0_40, %c0_41] : memref<128x128xbf16, #tpu.memory_space<vmem>>, vector<128x128xbf16>
    %cst_42 = arith.constant dense<0.000000e+00> : vector<8x128xf32>
    %107 = tpu.matmul %105, %106, %cst_42 {dimension_numbers = #tpu.dot_dimension_numbers<[1], [0], [0], [1], [0, 0, 1, 1], [], []>} : vector<8x128xbf16>, vector<128x128xbf16>, vector<8x128xf32> -> vector<8x128xf32>
    %c0_43 = arith.constant 0 : index
    %c0_44 = arith.constant 0 : index
    %108 = vector.load %arg9[%c0_43, %c0_44] : memref<1x128xf32, #tpu.memory_space<vmem>>, vector<1x128xf32>
    %109 = vector.broadcast %108 : vector<1x128xf32> to vector<8x128xf32>
    %110 = arith.addf %107, %109 : vector<8x128xf32>
    %c0_45 = arith.constant 0 : index
    %c0_46 = arith.constant 0 : index
    %c0_47 = arith.constant 0 : index
    %111 = vector.load %arg10[%c0_45, %c0_46, %c0_47] : memref<1x8x128xf32, #tpu.memory_space<vmem>>, vector<1x8x128xf32>
    %112 = vector.shape_cast %111 : vector<1x8x128xf32> to vector<8x128xf32>
    %113 = vector.shape_cast %110 : vector<8x128xf32> to vector<1x8x128xf32>
    tpu.vector_store %arg10[%c0_45, %c0_46, %c0_47], %113 {strides = array<i32>} : memref<1x8x128xf32, #tpu.memory_space<vmem>>, vector<1x8x128xf32>,
    return
  }
  func.func @transform_0(%arg0: i32, %arg1: i32) -> (i32, i32, i32) {
    %c0_i32 = arith.constant 0 : i32
    %c0_i32_0 = arith.constant 0 : i32
    return %arg0, %arg1, %c0_i32 : i32, i32, i32
  }
  func.func @transform_1(%arg0: i32, %arg1: i32) -> (i32, i32, i32) {
    %c0_i32 = arith.constant 0 : i32
    %c0_i32_0 = arith.constant 0 : i32
    %c0_i32_1 = arith.constant 0 : i32
    return %arg0, %c0_i32, %c0_i32_0 : i32, i32, i32
  }
  func.func @transform_2(%arg0: i32, %arg1: i32) -> (i32, i32) {
    %c0_i32 = arith.constant 0 : i32
    %c0_i32_0 = arith.constant 0 : i32
    %c0_i32_1 = arith.constant 0 : i32
    return %c0_i32, %c0_i32_0 : i32, i32
  }
  func.func @transform_3(%arg0: i32, %arg1: i32) -> (i32, i32) {
    %c0_i32 = arith.constant 0 : i32
    %c0_i32_0 = arith.constant 0 : i32
    %c0_i32_1 = arith.constant 0 : i32
    return %c0_i32, %c0_i32_0 : i32, i32
  }
  func.func @transform_4(%arg0: i32, %arg1: i32) -> (i32, i32) {
    %c0_i32 = arith.constant 0 : i32
    %c0_i32_0 = arith.constant 0 : i32
    %c0_i32_1 = arith.constant 0 : i32
    return %c0_i32, %c0_i32_0 : i32, i32
  }
  func.func @transform_5(%arg0: i32, %arg1: i32) -> (i32, i32) {
    %c0_i32 = arith.constant 0 : i32
    %c0_i32_0 = arith.constant 0 : i32
    %c0_i32_1 = arith.constant 0 : i32
    return %c0_i32, %c0_i32_0 : i32, i32
  }
  func.func @transform_6(%arg0: i32, %arg1: i32) -> (i32, i32) {
    %c0_i32 = arith.constant 0 : i32
    %c0_i32_0 = arith.constant 0 : i32
    %c0_i32_1 = arith.constant 0 : i32
    return %c0_i32, %c0_i32_0 : i32, i32
  }
  func.func @transform_7(%arg0: i32, %arg1: i32) -> (i32, i32) {
    %c0_i32 = arith.constant 0 : i32
    %c0_i32_0 = arith.constant 0 : i32
    %c0_i32_1 = arith.constant 0 : i32
    return %c0_i32, %c0_i32_0 : i32, i32
  }
  func.func @transform_8(%arg0: i32, %arg1: i32) -> (i32, i32, i32) {
    %c0_i32 = arith.constant 0 : i32
    %c0_i32_0 = arith.constant 0 : i32
    return %arg0, %arg1, %c0_i32 : i32, i32, i32
  }
}

module attributes {stable_mosaic.version = 11 : i64} {
  func.func @_ffn_addnorm_kernel(%arg0: i32, %arg1: i32, %arg2: memref<16x128xf32, #tpu.memory_space<vmem>>, %arg3: memref<128x256xbf16, #tpu.memory_space<vmem>>, %arg4: memref<1x256xf32, #tpu.memory_space<vmem>>, %arg5: memref<256x128xbf16, #tpu.memory_space<vmem>>, %arg6: memref<1x128xf32, #tpu.memory_space<vmem>>, %arg7: memref<1x128xf32, #tpu.memory_space<vmem>>, %arg8: memref<1x128xf32, #tpu.memory_space<vmem>>, %arg9: memref<16x128xf32, #tpu.memory_space<vmem>>, %arg10: memref<16x128xf32, #tpu.memory_space<vmem>>) attributes {dimension_semantics = [#tpu.dimension_semantics<parallel>, #tpu.dimension_semantics<arbitrary>], iteration_bounds = array<i64: 2, 2>, scalar_prefetch = 0 : i64, scratch_operands = 1 : i64, tpu.core_type = #tpu.core_type<tc>, window_params = [{transform_indices = @transform_0, window_bounds = array<i64: 16, 128>}, {transform_indices = @transform_1, window_bounds = array<i64: 128, 256>}, {transform_indices = @transform_2, window_bounds = array<i64: 1, 256>}, {transform_indices = @transform_3, window_bounds = array<i64: 256, 128>}, {pipeline_mode = #tpu.pipeline_mode<synchronous>, transform_indices = @transform_4, window_bounds = array<i64: 1, 128>}, {pipeline_mode = #tpu.pipeline_mode<synchronous>, transform_indices = @transform_5, window_bounds = array<i64: 1, 128>}, {pipeline_mode = #tpu.pipeline_mode<synchronous>, transform_indices = @transform_6, window_bounds = array<i64: 1, 128>}, {transform_indices = @transform_7, window_bounds = array<i64: 16, 128>}]} {
    %c0_i32 = arith.constant 0 : i32
    %0 = arith.cmpi eq, %arg1, %c0_i32 : i32
    %1 = arith.extui %0 : i1 to i32
    %c0_i32_0 = arith.constant 0 : i32
    %2 = arith.cmpi ne, %1, %c0_i32_0 : i32
    scf.if %2 {
      %cst_15 = arith.constant 0.000000e+00 : f32
      %21 = vector.broadcast %cst_15 : f32 to vector<16x128xf32>
      %c0_16 = arith.constant 0 : index
      %c0_17 = arith.constant 0 : index
      %22 = vector.load %arg10[%c0_16, %c0_17] : memref<16x128xf32, #tpu.memory_space<vmem>>, vector<16x128xf32>
      tpu.vector_store %arg10[%c0_16, %c0_17], %21 {strides = array<i32>} : memref<16x128xf32, #tpu.memory_space<vmem>>, vector<16x128xf32>,
    } else {
    }
    %c0 = arith.constant 0 : index
    %c0_1 = arith.constant 0 : index
    %3 = vector.load %arg2[%c0, %c0_1] : memref<16x128xf32, #tpu.memory_space<vmem>>, vector<16x128xf32>
    %4 = arith.truncf %3 : vector<16x128xf32> to vector<16x128xbf16>
    %c0_2 = arith.constant 0 : index
    %c0_3 = arith.constant 0 : index
    %5 = vector.load %arg3[%c0_2, %c0_3] : memref<128x256xbf16, #tpu.memory_space<vmem>>, vector<128x256xbf16>
    %cst = arith.constant dense<0.000000e+00> : vector<16x256xf32>
    %6 = tpu.matmul %4, %5, %cst {dimension_numbers = #tpu.dot_dimension_numbers<[1], [0], [0], [1], [0, 0, 1, 1], [], []>} : vector<16x128xbf16>, vector<128x256xbf16>, vector<16x256xf32> -> vector<16x256xf32>
    %c0_4 = arith.constant 0 : index
    %c0_5 = arith.constant 0 : index
    %7 = vector.load %arg4[%c0_4, %c0_5] : memref<1x256xf32, #tpu.memory_space<vmem>>, vector<1x256xf32>
    %8 = vector.broadcast %7 : vector<1x256xf32> to vector<16x256xf32>
    %9 = arith.addf %6, %8 : vector<16x256xf32>
    %cst_6 = arith.constant 0.000000e+00 : f32
    %10 = vector.broadcast %cst_6 : f32 to vector<16x256xf32>
    %11 = arith.maximumf %9, %10 : vector<16x256xf32>
    %c0_7 = arith.constant 0 : index
    %c0_8 = arith.constant 0 : index
    %12 = vector.load %arg10[%c0_7, %c0_8] : memref<16x128xf32, #tpu.memory_space<vmem>>, vector<16x128xf32>
    %13 = arith.truncf %11 : vector<16x256xf32> to vector<16x256xbf16>
    %c0_9 = arith.constant 0 : index
    %c0_10 = arith.constant 0 : index
    %14 = vector.load %arg5[%c0_9, %c0_10] : memref<256x128xbf16, #tpu.memory_space<vmem>>, vector<256x128xbf16>
    %cst_11 = arith.constant dense<0.000000e+00> : vector<16x128xf32>
    %15 = tpu.matmul %13, %14, %cst_11 {dimension_numbers = #tpu.dot_dimension_numbers<[1], [0], [0], [1], [0, 0, 1, 1], [], []>} : vector<16x256xbf16>, vector<256x128xbf16>, vector<16x128xf32> -> vector<16x128xf32>
    %16 = arith.addf %12, %15 : vector<16x128xf32>
    %c0_12 = arith.constant 0 : index
    %c0_13 = arith.constant 0 : index
    %17 = vector.load %arg10[%c0_12, %c0_13] : memref<16x128xf32, #tpu.memory_space<vmem>>, vector<16x128xf32>
    tpu.vector_store %arg10[%c0_12, %c0_13], %16 {strides = array<i32>} : memref<16x128xf32, #tpu.memory_space<vmem>>, vector<16x128xf32>,
    %c1_i32 = arith.constant 1 : i32
    %18 = arith.cmpi eq, %arg1, %c1_i32 : i32
    %19 = arith.extui %18 : i1 to i32
    %c0_i32_14 = arith.constant 0 : i32
    %20 = arith.cmpi ne, %19, %c0_i32_14 : i32
    scf.if %20 {
      %c0_15 = arith.constant 0 : index
      %c0_16 = arith.constant 0 : index
      %21 = vector.load %arg2[%c0_15, %c0_16] : memref<16x128xf32, #tpu.memory_space<vmem>>, vector<16x128xf32>
      %c0_17 = arith.constant 0 : index
      %c0_18 = arith.constant 0 : index
      %22 = vector.load %arg10[%c0_17, %c0_18] : memref<16x128xf32, #tpu.memory_space<vmem>>, vector<16x128xf32>
      %23 = arith.addf %21, %22 : vector<16x128xf32>
      %c0_19 = arith.constant 0 : index
      %c0_20 = arith.constant 0 : index
      %24 = vector.load %arg6[%c0_19, %c0_20] : memref<1x128xf32, #tpu.memory_space<vmem>>, vector<1x128xf32>
      %25 = vector.broadcast %24 : vector<1x128xf32> to vector<16x128xf32>
      %26 = arith.addf %23, %25 : vector<16x128xf32>
      %cst_21 = arith.constant dense<0.000000e+00> : vector<16xf32>
      %27 = vector.multi_reduction <add>, %26, %cst_21 [1] : vector<16x128xf32> to vector<16xf32>
      %28 = vector.shape_cast %27 : vector<16xf32> to vector<16x1xf32>
      %cst_22 = arith.constant 1.280000e+02 : f32
      %29 = vector.broadcast %cst_22 : f32 to vector<16x1xf32>
      %30 = arith.divf %28, %29 : vector<16x1xf32>
      %31 = vector.broadcast %30 : vector<16x1xf32> to vector<16x128xf32>
      %32 = arith.subf %26, %31 : vector<16x128xf32>
      %33 = arith.mulf %32, %32 : vector<16x128xf32>
      %cst_23 = arith.constant dense<0.000000e+00> : vector<16xf32>
      %34 = vector.multi_reduction <add>, %33, %cst_23 [1] : vector<16x128xf32> to vector<16xf32>
      %35 = vector.shape_cast %34 : vector<16xf32> to vector<16x1xf32>
      %cst_24 = arith.constant 1.280000e+02 : f32
      %36 = vector.broadcast %cst_24 : f32 to vector<16x1xf32>
      %37 = arith.divf %35, %36 : vector<16x1xf32>
      %38 = vector.broadcast %30 : vector<16x1xf32> to vector<16x128xf32>
      %39 = arith.subf %26, %38 : vector<16x128xf32>
      %cst_25 = arith.constant 9.99999974E-6 : f32
      %40 = vector.broadcast %cst_25 : f32 to vector<16x1xf32>
      %41 = arith.addf %37, %40 : vector<16x1xf32>
      %42 = math.rsqrt %41 : vector<16x1xf32>
      %43 = vector.broadcast %42 : vector<16x1xf32> to vector<16x128xf32>
      %44 = arith.mulf %39, %43 : vector<16x128xf32>
      %c0_26 = arith.constant 0 : index
      %c0_27 = arith.constant 0 : index
      %45 = vector.load %arg7[%c0_26, %c0_27] : memref<1x128xf32, #tpu.memory_space<vmem>>, vector<1x128xf32>
      %46 = vector.broadcast %45 : vector<1x128xf32> to vector<16x128xf32>
      %47 = arith.mulf %44, %46 : vector<16x128xf32>
      %c0_28 = arith.constant 0 : index
      %c0_29 = arith.constant 0 : index
      %48 = vector.load %arg8[%c0_28, %c0_29] : memref<1x128xf32, #tpu.memory_space<vmem>>, vector<1x128xf32>
      %49 = vector.broadcast %48 : vector<1x128xf32> to vector<16x128xf32>
      %50 = arith.addf %47, %49 : vector<16x128xf32>
      %c0_30 = arith.constant 0 : index
      %c0_31 = arith.constant 0 : index
      %51 = vector.load %arg9[%c0_30, %c0_31] : memref<16x128xf32, #tpu.memory_space<vmem>>, vector<16x128xf32>
      tpu.vector_store %arg9[%c0_30, %c0_31], %50 {strides = array<i32>} : memref<16x128xf32, #tpu.memory_space<vmem>>, vector<16x128xf32>,
    } else {
    }
    return
  }
  func.func @transform_0(%arg0: i32, %arg1: i32) -> (i32, i32) {
    %c0_i32 = arith.constant 0 : i32
    %c0_i32_0 = arith.constant 0 : i32
    return %arg0, %c0_i32 : i32, i32
  }
  func.func @transform_1(%arg0: i32, %arg1: i32) -> (i32, i32) {
    %c0_i32 = arith.constant 0 : i32
    %c0_i32_0 = arith.constant 0 : i32
    return %c0_i32, %arg1 : i32, i32
  }
  func.func @transform_2(%arg0: i32, %arg1: i32) -> (i32, i32) {
    %c0_i32 = arith.constant 0 : i32
    %c0_i32_0 = arith.constant 0 : i32
    return %c0_i32, %arg1 : i32, i32
  }
  func.func @transform_3(%arg0: i32, %arg1: i32) -> (i32, i32) {
    %c0_i32 = arith.constant 0 : i32
    %c0_i32_0 = arith.constant 0 : i32
    return %arg1, %c0_i32 : i32, i32
  }
  func.func @transform_4(%arg0: i32, %arg1: i32) -> (i32, i32) {
    %c0_i32 = arith.constant 0 : i32
    %c0_i32_0 = arith.constant 0 : i32
    %c0_i32_1 = arith.constant 0 : i32
    return %c0_i32, %c0_i32_0 : i32, i32
  }
  func.func @transform_5(%arg0: i32, %arg1: i32) -> (i32, i32) {
    %c0_i32 = arith.constant 0 : i32
    %c0_i32_0 = arith.constant 0 : i32
    %c0_i32_1 = arith.constant 0 : i32
    return %c0_i32, %c0_i32_0 : i32, i32
  }
  func.func @transform_6(%arg0: i32, %arg1: i32) -> (i32, i32) {
    %c0_i32 = arith.constant 0 : i32
    %c0_i32_0 = arith.constant 0 : i32
    %c0_i32_1 = arith.constant 0 : i32
    return %c0_i32, %c0_i32_0 : i32, i32
  }
  func.func @transform_7(%arg0: i32, %arg1: i32) -> (i32, i32) {
    %c0_i32 = arith.constant 0 : i32
    %c0_i32_0 = arith.constant 0 : i32
    return %arg0, %c0_i32 : i32, i32
  }
}

module attributes {stable_mosaic.version = 11 : i64} {
  func.func @_linear_kernel(%arg0: i32, %arg1: i32, %arg2: memref<16x128xf32, #tpu.memory_space<vmem>>, %arg3: memref<128x128xbf16, #tpu.memory_space<vmem>>, %arg4: memref<1x128xf32, #tpu.memory_space<vmem>>, %arg5: memref<16x128xf32, #tpu.memory_space<vmem>>) attributes {dimension_semantics = [#tpu.dimension_semantics<parallel>, #tpu.dimension_semantics<parallel>], iteration_bounds = array<i64: 2, 2>, scalar_prefetch = 0 : i64, scratch_operands = 0 : i64, tpu.core_type = #tpu.core_type<tc>, window_params = [{transform_indices = @transform_0, window_bounds = array<i64: 16, 128>}, {transform_indices = @transform_1, window_bounds = array<i64: 128, 128>}, {transform_indices = @transform_2, window_bounds = array<i64: 1, 128>}, {transform_indices = @transform_3, window_bounds = array<i64: 16, 128>}]} {
    %c0 = arith.constant 0 : index
    %c0_0 = arith.constant 0 : index
    %0 = vector.load %arg2[%c0, %c0_0] : memref<16x128xf32, #tpu.memory_space<vmem>>, vector<16x128xf32>
    %1 = arith.truncf %0 : vector<16x128xf32> to vector<16x128xbf16>
    %c0_1 = arith.constant 0 : index
    %c0_2 = arith.constant 0 : index
    %2 = vector.load %arg3[%c0_1, %c0_2] : memref<128x128xbf16, #tpu.memory_space<vmem>>, vector<128x128xbf16>
    %cst = arith.constant dense<0.000000e+00> : vector<16x128xf32>
    %3 = tpu.matmul %1, %2, %cst {dimension_numbers = #tpu.dot_dimension_numbers<[1], [0], [0], [1], [0, 0, 1, 1], [], []>} : vector<16x128xbf16>, vector<128x128xbf16>, vector<16x128xf32> -> vector<16x128xf32>
    %c0_3 = arith.constant 0 : index
    %c0_4 = arith.constant 0 : index
    %4 = vector.load %arg4[%c0_3, %c0_4] : memref<1x128xf32, #tpu.memory_space<vmem>>, vector<1x128xf32>
    %5 = vector.broadcast %4 : vector<1x128xf32> to vector<16x128xf32>
    %6 = arith.addf %3, %5 : vector<16x128xf32>
    %c0_5 = arith.constant 0 : index
    %c0_6 = arith.constant 0 : index
    %7 = vector.load %arg5[%c0_5, %c0_6] : memref<16x128xf32, #tpu.memory_space<vmem>>, vector<16x128xf32>
    tpu.vector_store %arg5[%c0_5, %c0_6], %6 {strides = array<i32>} : memref<16x128xf32, #tpu.memory_space<vmem>>, vector<16x128xf32>,
    return
  }
  func.func @transform_0(%arg0: i32, %arg1: i32) -> (i32, i32) {
    %c0_i32 = arith.constant 0 : i32
    %c0_i32_0 = arith.constant 0 : i32
    return %arg0, %c0_i32 : i32, i32
  }
  func.func @transform_1(%arg0: i32, %arg1: i32) -> (i32, i32) {
    %c0_i32 = arith.constant 0 : i32
    %c0_i32_0 = arith.constant 0 : i32
    return %c0_i32, %arg1 : i32, i32
  }
  func.func @transform_2(%arg0: i32, %arg1: i32) -> (i32, i32) {
    %c0_i32 = arith.constant 0 : i32
    %c0_i32_0 = arith.constant 0 : i32
    return %c0_i32, %arg1 : i32, i32
  }
  func.func @transform_3(%arg0: i32, %arg1: i32) -> (i32, i32) {
    %c0_i32 = arith.constant 0 : i32
    return %arg0, %arg1 : i32, i32
  }
}

</mosaic_0001>

<llo_original>
// kernel: transformer_decoder_forward.7
$region0: #{transformer_decoder_forward.7}
  #allocation0 [shape = 'u32[]', space=smem, size = 0x4, offset = 0x4, fixed_abs, tag = 'smem constant byte address 0x4 - core index']
  #allocation1 [shape = 'u32[144,128]{1,0:T(1,128)}', space=vmem, size = 0x12000, scoped, tag = 'internal scratch']
  #allocation2 [shape = 'f32[8,128]{1,0:T(8,128)}', space=vmem, size = 0x1000, scoped, tag = 'scratch operand']
  %s0 = inlined_call_operand.vmem [shape: f32[2,16,128], index: 0, kind: input, shape index: {}, may-alias: {0,1}]
  %s1 = inlined_call_operand.vmem [shape: f32[2,16,128], index: 1, kind: input, shape index: {}, may-alias: {0,1}]
  %s2 = inlined_call_operand.vmem [shape: bf16[128,128], index: 2, kind: input, shape index: {}]
  %s3 = inlined_call_operand.vmem [shape: f32[1,128], index: 3, kind: input, shape index: {}]
  %s4 = inlined_call_operand.vmem [shape: bf16[128,256], index: 4, kind: input, shape index: {}]
  %s5 = inlined_call_operand.vmem [shape: f32[1,256], index: 5, kind: input, shape index: {}]
  %s6 = inlined_call_operand.vmem [shape: bf16[128,128], index: 6, kind: input, shape index: {}]
  %s7 = inlined_call_operand.vmem [shape: f32[1,128], index: 7, kind: input, shape index: {}]
  %s8 = inlined_call_operand.vmem [shape: f32[2,16,128], index: 8, kind: output, shape index: {}]
  %s9 = sld [smem:[#allocation0]]
  $region65: #{transformer_decoder_forward.7} parent=0
    _
  %s11 = ssub.s32 1, %s9
  %s12 = scalar_select 0, %s11, %s9
  loop: start=0, step=1, limit=6
  $region2: #{transformer_decoder_forward.7} parent=0 // loop_pre_header
    _
  $region3: #{transformer_decoder_forward.7} parent=0 // loop_header
    %s14 = sphi 0, %s18
    %p15 = scmp.ge.s32.totalorder %s14, 6
    %s21 = sphi 0, %s33
    %s22 = sphi 0, %s29
    %s23 = sphi 0, %s21
    %s24 = sphi 0, %s22
    %s25 = sphi 0, %s23
    %s26 = sphi 0, %s24
    %s38 = sphi 0, %s40
    %s41 = sphi 0, %s38
    %s42 = sphi 0, %s41
    %s58 = sphi 0, %s42
    %s64 = sphi 0, %s66
    %s67 = sphi 0, %s64
    %s68 = sphi 0, %s67
    %s84 = sphi 0, %s68
    %s88 = sphi 0, %s88
    %s90 = sphi 0, %s88
    %s91 = sphi 0, %s90
    %s105 = sphi 0, %s91
    %s109 = sphi 0, %s109
    %s111 = sphi 0, %s109
    %s112 = sphi 0, %s111
    %s126 = sphi 0, %s112
    %s130 = sphi 0, %s130
    %s132 = sphi 0, %s130
    %s133 = sphi 0, %s132
    %s147 = sphi 0, %s133
    %s151 = sphi 0, %s151
    %s153 = sphi 0, %s151
    %s154 = sphi 0, %s153
    %s168 = sphi 0, %s154
    %s172 = sphi 0, %s172
    %s174 = sphi 0, %s172
    %s175 = sphi 0, %s174
    %s189 = sphi 0, %s175
    %s193 = sphi 0, %s193
    %s195 = sphi 0, %s193
    %s196 = sphi 0, %s195
    %s210 = sphi 0, %s196
    %s218 = sphi 0, %s220
    %s221 = sphi 0, %s218
    %s222 = sphi 0, %s221
    %s238 = sphi 0, %s222
  $region4: #{transformer_decoder_forward.7} parent=0 // loop_header_branch
    %17 = sbr.rel (%p15) target = $region8
  $region5: #{transformer_decoder_forward.7} parent=0 // loop_body
    %s19 = ssub.s32 %s14, 1
    %s20 = ssub.s32 %s14, 2
    %s27 = sadd.s32 1, %s22
    %p28 = scmp.ge.s32.totalorder %s27, 2
    %s29 = scalar_select %p28, 0, %s27
    %s30 = sadd.s32 1, %s21
    %s31 = scalar_select %p28, %s30, %s21
    %p32 = scmp.ge.s32.totalorder %s31, 2
    %s33 = scalar_select %p32, 0, %s31
    %s34 = ssub.s32 %s21, %s33
    %s35 = ssub.s32 %s22, %s29
    %s36 = sor.u32 %s34, %s35
    %p37 = scmp.eq.s32.totalorder %s36, 0
    %s39 = sadd.s32 %s38, 1
    %s40 = scalar_select %p37, %s38, %s39
    %p43 = pneg %p37
    %p44 = scmp.eq.s32.totalorder %s14, 3
    %p45 = por %p43, %p44
    %p46 = scmp.ne.s32.totalorder %s38, %s41
    %p47 = scmp.eq.s32.totalorder %s14, 0
    %p48 = por %p46, %p47
    %p49 = scmp.ne.s32.totalorder %s38, %s41
    %p50 = scmp.eq.s32.totalorder %s19, 3
    %p51 = por %p49, %p50
    %p52 = scmp.ne.s32.totalorder %s41, %s42
    %p53 = scmp.eq.s32.totalorder %s19, 0
    %p54 = por %p52, %p53
    %p55 = scmp.ne.s32.totalorder %s41, %s42
    %p56 = scmp.eq.s32.totalorder %s20, 3
    %p57 = por %p55, %p56
    %p59 = scmp.ne.s32.totalorder %s42, %s58
    %p60 = scmp.eq.s32.totalorder %s20, 0
    %p61 = por %p59, %p60
    %s62 = ssub.s32 %s21, %s33
    %p63 = scmp.eq.s32.totalorder %s62, 0
    %s65 = sadd.s32 %s64, 1
    %s66 = scalar_select %p63, %s64, %s65
    %p69 = pneg %p63
    %p70 = scmp.eq.s32.totalorder %s14, 3
    %p71 = por %p69, %p70
    %p72 = scmp.ne.s32.totalorder %s64, %s67
    %p73 = scmp.eq.s32.totalorder %s14, 0
    %p74 = por %p72, %p73
    %p75 = scmp.ne.s32.totalorder %s64, %s67
    %p76 = scmp.eq.s32.totalorder %s19, 3
    %p77 = por %p75, %p76
    %p78 = scmp.ne.s32.totalorder %s67, %s68
    %p79 = scmp.eq.s32.totalorder %s19, 0
    %p80 = por %p78, %p79
    %p81 = scmp.ne.s32.totalorder %s67, %s68
    %p82 = scmp.eq.s32.totalorder %s20, 3
    %p83 = por %p81, %p82
    %p85 = scmp.ne.s32.totalorder %s68, %s84
    %p86 = scmp.eq.s32.totalorder %s20, 0
    %p87 = por %p85, %p86
    %s89 = sadd.s32 %s88, 1
    %p92 = scmp.eq.s32.totalorder %s14, 3
    %p93 = scmp.ne.s32.totalorder %s88, %s90
    %p94 = scmp.eq.s32.totalorder %s14, 0
    %p95 = por %p93, %p94
    %p96 = scmp.ne.s32.totalorder %s88, %s90
    %p97 = scmp.eq.s32.totalorder %s19, 3
    %p98 = por %p96, %p97
    %p99 = scmp.ne.s32.totalorder %s90, %s91
    %p100 = scmp.eq.s32.totalorder %s19, 0
    %p101 = por %p99, %p100
    %p102 = scmp.ne.s32.totalorder %s90, %s91
    %p103 = scmp.eq.s32.totalorder %s20, 3
    %p104 = por %p102, %p103
    %p106 = scmp.ne.s32.totalorder %s91, %s105
    %p107 = scmp.eq.s32.totalorder %s20, 0
    %p108 = por %p106, %p107
    %s110 = sadd.s32 %s109, 1
    %p113 = scmp.eq.s32.totalorder %s14, 3
    %p114 = scmp.ne.s32.totalorder %s109, %s111
    %p115 = scmp.eq.s32.totalorder %s14, 0
    %p116 = por %p114, %p115
    %p117 = scmp.ne.s32.totalorder %s109, %s111
    %p118 = scmp.eq.s32.totalorder %s19, 3
    %p119 = por %p117, %p118
    %p120 = scmp.ne.s32.totalorder %s111, %s112
    %p121 = scmp.eq.s32.totalorder %s19, 0
    %p122 = por %p120, %p121
    %p123 = scmp.ne.s32.totalorder %s111, %s112
    %p124 = scmp.eq.s32.totalorder %s20, 3
    %p125 = por %p123, %p124
    %p127 = scmp.ne.s32.totalorder %s112, %s126
    %p128 = scmp.eq.s32.totalorder %s20, 0
    %p129 = por %p127, %p128
    %s131 = sadd.s32 %s130, 1
    %p134 = scmp.eq.s32.totalorder %s14, 3
    %p135 = scmp.ne.s32.totalorder %s130, %s132
    %p136 = scmp.eq.s32.totalorder %s14, 0
    %p137 = por %p135, %p136
    %p138 = scmp.ne.s32.totalorder %s130, %s132
    %p139 = scmp.eq.s32.totalorder %s19, 3
    %p140 = por %p138, %p139
    %p141 = scmp.ne.s32.totalorder %s132, %s133
    %p142 = scmp.eq.s32.totalorder %s19, 0
    %p143 = por %p141, %p142
    %p144 = scmp.ne.s32.totalorder %s132, %s133
    %p145 = scmp.eq.s32.totalorder %s20, 3
    %p146 = por %p144, %p145
    %p148 = scmp.ne.s32.totalorder %s133, %s147
    %p149 = scmp.eq.s32.totalorder %s20, 0
    %p150 = por %p148, %p149
    %s152 = sadd.s32 %s151, 1
    %p155 = scmp.eq.s32.totalorder %s14, 3
    %p156 = scmp.ne.s32.totalorder %s151, %s153
    %p157 = scmp.eq.s32.totalorder %s14, 0
    %p158 = por %p156, %p157
    %p159 = scmp.ne.s32.totalorder %s151, %s153
    %p160 = scmp.eq.s32.totalorder %s19, 3
    %p161 = por %p159, %p160
    %p162 = scmp.ne.s32.totalorder %s153, %s154
    %p163 = scmp.eq.s32.totalorder %s19, 0
    %p164 = por %p162, %p163
    %p165 = scmp.ne.s32.totalorder %s153, %s154
    %p166 = scmp.eq.s32.totalorder %s20, 3
    %p167 = por %p165, %p166
    %p169 = scmp.ne.s32.totalorder %s154, %s168
    %p170 = scmp.eq.s32.totalorder %s20, 0
    %p171 = por %p169, %p170
    %s173 = sadd.s32 %s172, 1
    %p176 = scmp.eq.s32.totalorder %s14, 3
    %p177 = scmp.ne.s32.totalorder %s172, %s174
    %p178 = scmp.eq.s32.totalorder %s14, 0
    %p179 = por %p177, %p178
    %p180 = scmp.ne.s32.totalorder %s172, %s174
    %p181 = scmp.eq.s32.totalorder %s19, 3
    %p182 = por %p180, %p181
    %p183 = scmp.ne.s32.totalorder %s174, %s175
    %p184 = scmp.eq.s32.totalorder %s19, 0
    %p185 = por %p183, %p184
    %p186 = scmp.ne.s32.totalorder %s174, %s175
    %p187 = scmp.eq.s32.totalorder %s20, 3
    %p188 = por %p186, %p187
    %p190 = scmp.ne.s32.totalorder %s175, %s189
    %p191 = scmp.eq.s32.totalorder %s20, 0
    %p192 = por %p190, %p191
    %s194 = sadd.s32 %s193, 1
    %p197 = scmp.eq.s32.totalorder %s14, 3
    %p198 = scmp.ne.s32.totalorder %s193, %s195
    %p199 = scmp.eq.s32.totalorder %s14, 0
    %p200 = por %p198, %p199
    %p201 = scmp.ne.s32.totalorder %s193, %s195
    %p202 = scmp.eq.s32.totalorder %s19, 3
    %p203 = por %p201, %p202
    %p204 = scmp.ne.s32.totalorder %s195, %s196
    %p205 = scmp.eq.s32.totalorder %s19, 0
    %p206 = por %p204, %p205
    %p207 = scmp.ne.s32.totalorder %s195, %s196
    %p208 = scmp.eq.s32.totalorder %s20, 3
    %p209 = por %p207, %p208
    %p211 = scmp.ne.s32.totalorder %s196, %s210
    %p212 = scmp.eq.s32.totalorder %s20, 0
    %p213 = por %p211, %p212
    %s214 = ssub.s32 %s21, %s33
    %s215 = ssub.s32 %s22, %s29
    %s216 = sor.u32 %s214, %s215
    %p217 = scmp.eq.s32.totalorder %s216, 0
    %s219 = sadd.s32 %s218, 1
    %s220 = scalar_select %p217, %s218, %s219
    %p223 = pneg %p217
    %p224 = scmp.eq.s32.totalorder %s14, 3
    %p225 = por %p223, %p224
    %p226 = scmp.ne.s32.totalorder %s218, %s221
    %p227 = scmp.eq.s32.totalorder %s14, 0
    %p228 = por %p226, %p227
    %p229 = scmp.ne.s32.totalorder %s218, %s221
    %p230 = scmp.eq.s32.totalorder %s19, 3
    %p231 = por %p229, %p230
    %p232 = scmp.ne.s32.totalorder %s221, %s222
    %p233 = scmp.eq.s32.totalorder %s19, 0
    %p234 = por %p232, %p233
    %p235 = scmp.ne.s32.totalorder %s221, %s222
    %p236 = scmp.eq.s32.totalorder %s20, 3
    %p237 = por %p235, %p236
    %p239 = scmp.ne.s32.totalorder %s222, %s238
    %p240 = scmp.eq.s32.totalorder %s20, 0
    %p241 = por %p239, %p240
    %p242 = scmp.le.s32.totalorder 1, %s14
    %p243 = scmp.lt.s32.totalorder %s14, 5
    %p244 = pnand %p242, %p243
    %p245 = pneg %p244
    // Predicated region
    $region9: #{transformer_decoder_forward.7} parent=5 // pred_check
      _
    $region10: #{transformer_decoder_forward.7} parent=5 // pred_check_branch
      %247 = sbr.rel (%p244) target = $region12
    $region11: #{transformer_decoder_forward.7} parent=5 // pred_region
      %s248 = ssub.s32 %s14, 1
      // Predicated region
      $region13: #{transformer_decoder_forward.7} parent=11 // pred_check
        %p249 = pneg %p101
      $region14: #{transformer_decoder_forward.7} parent=11 // pred_check_branch
        %251 = sbr.rel (%p249) target = $region16
      $region15: #{transformer_decoder_forward.7} parent=11 // pred_region
        _
      $region16: #{transformer_decoder_forward.7} parent=11 // pred_fallthru
        _
      // Predicated region
      $region17: #{transformer_decoder_forward.7} parent=11 // pred_check
        %p252 = pneg %p122
      $region18: #{transformer_decoder_forward.7} parent=11 // pred_check_branch
        %254 = sbr.rel (%p252) target = $region20
      $region19: #{transformer_decoder_forward.7} parent=11 // pred_region
        _
      $region20: #{transformer_decoder_forward.7} parent=11 // pred_fallthru
        _
      // Predicated region
      $region21: #{transformer_decoder_forward.7} parent=11 // pred_check
        %p255 = pneg %p143
      $region22: #{transformer_decoder_forward.7} parent=11 // pred_check_branch
        %257 = sbr.rel (%p255) target = $region24
      $region23: #{transformer_decoder_forward.7} parent=11 // pred_region
        _
      $region24: #{transformer_decoder_forward.7} parent=11 // pred_fallthru
        _
      // Predicated region
      $region25: #{transformer_decoder_forward.7} parent=11 // pred_check
        %p258 = pneg %p164
      $region26: #{transformer_decoder_forward.7} parent=11 // pred_check_branch
        %260 = sbr.rel (%p258) target = $region28
      $region27: #{transformer_decoder_forward.7} parent=11 // pred_region
        _
      $region28: #{transformer_decoder_forward.7} parent=11 // pred_fallthru
        _
      // Predicated region
      $region29: #{transformer_decoder_forward.7} parent=11 // pred_check
        %p261 = pneg %p185
      $region30: #{transformer_decoder_forward.7} parent=11 // pred_check_branch
        %263 = sbr.rel (%p261) target = $region32
      $region31: #{transformer_decoder_forward.7} parent=11 // pred_region
        _
      $region32: #{transformer_decoder_forward.7} parent=11 // pred_fallthru
        _
      // Predicated region
      $region33: #{transformer_decoder_forward.7} parent=11 // pred_check
        %p264 = pneg %p206
      $region34: #{transformer_decoder_forward.7} parent=11 // pred_check_branch
        %266 = sbr.rel (%p264) target = $region36
      $region35: #{transformer_decoder_forward.7} parent=11 // pred_region
        _
      $region36: #{transformer_decoder_forward.7} parent=11 // pred_fallthru
        _
    $region12: #{transformer_decoder_forward.7} parent=5 // pred_fallthru
      _
    %p267 = scmp.lt.s32.totalorder %s14, 4
    // Predicated region
    $region37: #{transformer_decoder_forward.7} parent=5 // pred_check
      %p268 = pneg %p267
    $region38: #{transformer_decoder_forward.7} parent=5 // pred_check_branch
      %270 = sbr.rel (%p268) target = $region40
    $region39: #{transformer_decoder_forward.7} parent=5 // pred_region
      // Predicated region
      $region41: #{transformer_decoder_forward.7} parent=39 // pred_check
        %p271 = pneg %p48
      $region42: #{transformer_decoder_forward.7} parent=39 // pred_check_branch
        %273 = sbr.rel (%p271) target = $region44
      $region43: #{transformer_decoder_forward.7} parent=39 // pred_region
        %p274 = scmp.lt.s32.totalorder %s21, 1
        %s275 = scalar_select %p274, %s21, 1
        %p276 = scmp.lt.s32.totalorder %s22, 1
        %s277 = scalar_select %p276, %s22, 1
        %s278 = smul.addr %s275, 2
        %s279 = sadd.s32 %s277, %s278
        %s280 = smul.addr %s279, 8
        %s281 = scalar_lea.vmem %s0, %s280
      $region44: #{transformer_decoder_forward.7} parent=39 // pred_fallthru
        _
      // Predicated region
      $region45: #{transformer_decoder_forward.7} parent=39 // pred_check
        %p282 = pneg %p74
      $region46: #{transformer_decoder_forward.7} parent=39 // pred_check_branch
        %284 = sbr.rel (%p282) target = $region48
      $region47: #{transformer_decoder_forward.7} parent=39 // pred_region
        %p285 = scmp.lt.s32.totalorder %s21, 1
        %s286 = scalar_select %p285, %s21, 1
        %s287 = smul.addr %s286, 2
        %s288 = smul.addr %s287, 8
        %s289 = scalar_lea.vmem %s1, %s288
      $region48: #{transformer_decoder_forward.7} parent=39 // pred_fallthru
        _
    $region40: #{transformer_decoder_forward.7} parent=5 // pred_fallthru
      _
    %p290 = scmp.le.s32.totalorder 1, %s14
    %p291 = scmp.lt.s32.totalorder %s14, 5
    %p292 = pnand %p290, %p291
    %p293 = pneg %p292
    // Predicated region
    $region49: #{transformer_decoder_forward.7} parent=5 // pred_check
      _
    $region50: #{transformer_decoder_forward.7} parent=5 // pred_check_branch
      %295 = sbr.rel (%p292) target = $region52
    $region51: #{transformer_decoder_forward.7} parent=5 // pred_region
      %s296 = ssub.s32 %s14, 1
      %p297 = scmp.lt.s32.totalorder %s23, 1
      %s298 = scalar_select %p297, %s23, 1
      %p299 = scmp.lt.s32.totalorder %s24, 1
      %s300 = scalar_select %p299, %s24, 1
      %s301 = smul.addr %s298, 2
      %s302 = sadd.s32 %s300, %s301
      %s303 = smul.addr %s302, 8
      %s304 = scalar_lea.vmem %s0, %s303
      %p305 = pneg %p54
      %p306 = pneg %p51
      %p307 = scmp.lt.s32.totalorder %s23, 1
      %s308 = scalar_select %p307, %s23, 1
      %s309 = smul.addr %s308, 2
      %s310 = smul.addr %s309, 8
      %s311 = scalar_lea.vmem %s1, %s310
      %p312 = pneg %p80
      %p313 = pneg %p77
      %p314 = pneg %p101
      %p315 = pneg %p98
      %p316 = pneg %p122
      %p317 = pneg %p119
      %p318 = pneg %p143
      %p319 = pneg %p140
      %p320 = pneg %p164
      %p321 = pneg %p161
      %p322 = pneg %p185
      %p323 = pneg %p182
      %p324 = pneg %p206
      %p325 = pneg %p203
      %p326 = pneg %p234
      %p327 = pneg %p231
      %p328 = scmp.lt.s32.totalorder %s23, 1
      %s329 = scalar_select %p328, %s23, 1
      %p330 = scmp.lt.s32.totalorder %s24, 1
      %s331 = scalar_select %p330, %s24, 1
      %s332 = smul.addr %s329, 2
      %s333 = sadd.s32 %s331, %s332
      %s334 = smul.addr %s333, 8
      %s335 = scalar_lea.vmem %s8, %s334
      %p336 = scmp.lt.s32.totalorder %s23, 1
      %s337 = scalar_select %p336, %s23, 1
      %p338 = scmp.lt.s32.totalorder %s24, 1
      %s339 = scalar_select %p338, %s24, 1
      %s340 = smul.addr %s337, 2
      %s341 = sadd.s32 %s339, %s340
      %s342 = smul.addr %s341, 8
      %s343 = scalar_lea.vmem %s0, %s342
      %p344 = scmp.lt.s32.totalorder %s23, 1
      %s345 = scalar_select %p344, %s23, 1
      %s346 = smul.addr %s345, 2
      %s347 = smul.addr %s346, 8
      %s348 = scalar_lea.vmem %s1, %s347
      %p349 = scmp.lt.s32.totalorder %s23, 1
      %s350 = scalar_select %p349, %s23, 1
      %p351 = scmp.lt.s32.totalorder %s24, 1
      %s352 = scalar_select %p351, %s24, 1
      %s353 = smul.addr %s350, 2
      %s354 = sadd.s32 %s352, %s353
      %s355 = smul.addr %s354, 8
      %s356 = scalar_lea.vmem %s8, %s355
      %v358 = vld [vmem:[%s343] sm:$0xff]
      %v359 = vpack.c.bf16 %v358, %v358
      %v360 = vld [vmem:[%s348] sm:$0xff]
      %v361 = vld [vmem:[%s348 + $0x8] sm:$0xff]
      %v362 = vpack.c.bf16 %v361, %v360
      %v363 = vld [vmem:[%s2] sm:$0xf]
      %v364 = vld [vmem:[%s2 + $0x4] sm:$0xf]
      %v365 = vld [vmem:[%s2 + $0x8] sm:$0xf]
      %v366 = vld [vmem:[%s2 + $0xc] sm:$0xf]
      %v367 = vld [vmem:[%s2 + $0x10] sm:$0xf]
      %v368 = vld [vmem:[%s2 + $0x14] sm:$0xf]
      %v369 = vld [vmem:[%s2 + $0x18] sm:$0xf]
      %v370 = vld [vmem:[%s2 + $0x1c] sm:$0xf]
      %v371 = vld [vmem:[%s2 + $0x20] sm:$0xf]
      %v372 = vld [vmem:[%s2 + $0x24] sm:$0xf]
      %v373 = vld [vmem:[%s2 + $0x28] sm:$0xf]
      %v374 = vld [vmem:[%s2 + $0x2c] sm:$0xf]
      %v375 = vld [vmem:[%s2 + $0x30] sm:$0xf]
      %v376 = vld [vmem:[%s2 + $0x34] sm:$0xf]
      %v377 = vld [vmem:[%s2 + $0x38] sm:$0xf]
      %v378 = vld [vmem:[%s2 + $0x3c] sm:$0xf]
      %v379 = vld [vmem:[%s3] sm:$0x1]
      %v381 = vlaneseq
      %v382 = vshrl.u32 %v381, 7
      %v383 = vsub.s32 0, %v382
      %v384 = vrot.slane %v379, %v383
      %v402 = vunpack.c.l.b16 %v363
      %v403 = vunpack.c.l.b16 %v364
      %v404 = vunpack.c.l.b16 %v365
      %v405 = vunpack.c.l.b16 %v366
      %v406 = vunpack.c.l.b16 %v367
      %v407 = vunpack.c.l.b16 %v368
      %v408 = vunpack.c.l.b16 %v369
      %v409 = vunpack.c.l.b16 %v370
      %v410 = vunpack.c.l.b16 %v371
      %v411 = vunpack.c.l.b16 %v372
      %v412 = vunpack.c.l.b16 %v373
      %v413 = vunpack.c.l.b16 %v374
      %v414 = vunpack.c.l.b16 %v375
      %v415 = vunpack.c.l.b16 %v376
      %v416 = vunpack.c.l.b16 %v377
      %v417 = vunpack.c.l.b16 %v378
      %v418 = vpack.c.b16 %v403, %v402
      %v419 = vpack.c.b16 %v405, %v404
      %v420 = vpack.c.b16 %v407, %v406
      %v421 = vpack.c.b16 %v409, %v408
      %v422 = vpack.c.b16 %v411, %v410
      %v423 = vpack.c.b16 %v413, %v412
      %v424 = vpack.c.b16 %v415, %v414
      %v425 = vpack.c.b16 %v417, %v416
      %434 = vmatprep.subr.bf16.mxu0 0
      %435 = vmatpush1.bf16.msra.mxu0 %v418
      %436 = vmatprep.subr.bf16.mxu0 0
      %437 = vmatpush1.bf16.msra.mxu0 %v419
      %438 = vmatprep.subr.bf16.mxu0 0
      %439 = vmatpush1.bf16.msra.mxu0 %v420
      %440 = vmatprep.subr.bf16.mxu0 0
      %441 = vmatpush1.bf16.msra.mxu0 %v421
      %442 = vmatprep.subr.bf16.mxu0 0
      %443 = vmatpush1.bf16.msra.mxu0 %v422
      %444 = vmatprep.subr.bf16.mxu0 0
      %445 = vmatpush1.bf16.msra.mxu0 %v423
      %446 = vmatprep.subr.bf16.mxu0 0
      %447 = vmatpush1.bf16.msra.mxu0 %v424
      %448 = vmatprep.subr.bf16.mxu0 0
      %449 = vmatpush1.bf16.msra.mxu0 %v425
      %450 = vmatprep.subr.bf16.mxu0 0
      %451 = vmatpush1.bf16.msra.mxu0 0
      %452 = vmatprep.subr.bf16.mxu0 0
      %453 = vmatpush1.bf16.msra.mxu0 0
      %454 = vmatprep.subr.bf16.mxu0 0
      %455 = vmatpush1.bf16.msra.mxu0 0
      %456 = vmatprep.subr.bf16.mxu0 0
      %457 = vmatpush1.bf16.msra.mxu0 0
      %458 = vmatprep.subr.bf16.mxu0 0
      %459 = vmatpush1.bf16.msra.mxu0 0
      %460 = vmatprep.subr.bf16.mxu0 0
      %461 = vmatpush1.bf16.msra.mxu0 0
      %462 = vmatprep.subr.bf16.mxu0 0
      %463 = vmatpush1.bf16.msra.mxu0 0
      %464 = vmatprep.subr.bf16.mxu0 0
      %465 = vmatpush1.bf16.msra.mxu0 0
      %466 = vmatprep.mubr.bf16.mxu0 0
      %467 = vmatmul.mubr.bf16.gmra.mrb[0].mxu0 %v359
      %v468 = vpop.f32.mrb[0].mxu0
      %v469 = vadd.f32 %v384, %v468
      %v470 = vpop.f32.mrb[0].mxu0
      %v471 = vpop.f32.mrb[0].mxu0
      %v472 = vpop.f32.mrb[0].mxu0
      %473 = vdwg.mxu0
      %v474 = vmul.f32 %v469, 0.17677669
      %v475 = vld [vmem:[%s4] sm:$0xff]
      %v476 = vld [vmem:[%s4 + $0x8] sm:$0xff]
      %v477 = vld [vmem:[%s4 + $0x10] sm:$0xff]
      %v478 = vld [vmem:[%s4 + $0x18] sm:$0xff]
      %v479 = vld [vmem:[%s4 + $0x20] sm:$0xff]
      %v480 = vld [vmem:[%s4 + $0x28] sm:$0xff]
      %v481 = vld [vmem:[%s4 + $0x30] sm:$0xff]
      %v482 = vld [vmem:[%s4 + $0x38] sm:$0xff]
      %v483 = vld [vmem:[%s4 + $0x40] sm:$0xff]
      %v484 = vld [vmem:[%s4 + $0x48] sm:$0xff]
      %v485 = vld [vmem:[%s4 + $0x50] sm:$0xff]
      %v486 = vld [vmem:[%s4 + $0x58] sm:$0xff]
      %v487 = vld [vmem:[%s4 + $0x60] sm:$0xff]
      %v488 = vld [vmem:[%s4 + $0x68] sm:$0xff]
      %v489 = vld [vmem:[%s4 + $0x70] sm:$0xff]
      %v490 = vld [vmem:[%s4 + $0x78] sm:$0xff]
      %v491 = vld [vmem:[%s5] sm:$0x3]
      %v493 = vlaneseq
      %v494 = vshrl.u32 %v493, 7
      %v495 = vsub.s32 0, %v494
      %v496 = vrot.slane %v491, %v495
      %v497 = vlaneseq
      %v498 = vshrl.u32 %v497, 7
      %v499 = vsub.s32 1, %v498
      %v500 = vrot.slane %v491, %v499
      %v519 = vunpack.c.l.b16 %v475
      %v520 = vunpack.c.h.b16 %v475
      %v521 = vunpack.c.l.b16 %v476
      %v522 = vunpack.c.h.b16 %v476
      %v523 = vunpack.c.l.b16 %v477
      %v524 = vunpack.c.h.b16 %v477
      %v525 = vunpack.c.l.b16 %v478
      %v526 = vunpack.c.h.b16 %v478
      %v527 = vunpack.c.l.b16 %v479
      %v528 = vunpack.c.h.b16 %v479
      %v529 = vunpack.c.l.b16 %v480
      %v530 = vunpack.c.h.b16 %v480
      %v531 = vunpack.c.l.b16 %v481
      %v532 = vunpack.c.h.b16 %v481
      %v533 = vunpack.c.l.b16 %v482
      %v534 = vunpack.c.h.b16 %v482
      %v535 = vunpack.c.l.b16 %v483
      %v536 = vunpack.c.h.b16 %v483
      %v537 = vunpack.c.l.b16 %v484
      %v538 = vunpack.c.h.b16 %v484
      %v539 = vunpack.c.l.b16 %v485
      %v540 = vunpack.c.h.b16 %v485
      %v541 = vunpack.c.l.b16 %v486
      %v542 = vunpack.c.h.b16 %v486
      %v543 = vunpack.c.l.b16 %v487
      %v544 = vunpack.c.h.b16 %v487
      %v545 = vunpack.c.l.b16 %v488
      %v546 = vunpack.c.h.b16 %v488
      %v547 = vunpack.c.l.b16 %v489
      %v548 = vunpack.c.h.b16 %v489
      %v549 = vunpack.c.l.b16 %v490
      %v550 = vunpack.c.h.b16 %v490
      %v551 = vpack.c.b16 %v521, %v519
      %v552 = vpack.c.b16 %v522, %v520
      %v553 = vpack.c.b16 %v525, %v523
      %v554 = vpack.c.b16 %v526, %v524
      %v555 = vpack.c.b16 %v529, %v527
      %v556 = vpack.c.b16 %v530, %v528
      %v557 = vpack.c.b16 %v533, %v531
      %v558 = vpack.c.b16 %v534, %v532
      %v559 = vpack.c.b16 %v537, %v535
      %v560 = vpack.c.b16 %v538, %v536
      %v561 = vpack.c.b16 %v541, %v539
      %v562 = vpack.c.b16 %v542, %v540
      %v563 = vpack.c.b16 %v545, %v543
      %v564 = vpack.c.b16 %v546, %v544
      %v565 = vpack.c.b16 %v549, %v547
      %v566 = vpack.c.b16 %v550, %v548
      %583 = vmatprep.subr.bf16.mxu0 %v552
      %584 = vmatpush1.bf16.msra.mxu0 %v551
      %585 = vmatprep.subr.bf16.mxu0 %v554
      %586 = vmatpush1.bf16.msra.mxu0 %v553
      %587 = vmatprep.subr.bf16.mxu0 %v556
      %588 = vmatpush1.bf16.msra.mxu0 %v555
      %589 = vmatprep.subr.bf16.mxu0 %v558
      %590 = vmatpush1.bf16.msra.mxu0 %v557
      %591 = vmatprep.subr.bf16.mxu0 %v560
      %592 = vmatpush1.bf16.msra.mxu0 %v559
      %593 = vmatprep.subr.bf16.mxu0 %v562
      %594 = vmatpush1.bf16.msra.mxu0 %v561
      %595 = vmatprep.subr.bf16.mxu0 %v564
      %596 = vmatpush1.bf16.msra.mxu0 %v563
      %597 = vmatprep.subr.bf16.mxu0 %v566
      %598 = vmatpush1.bf16.msra.mxu0 %v565
      %599 = vmatprep.subr.bf16.mxu0 0
      %600 = vmatpush1.bf16.msra.mxu0 0
      %601 = vmatprep.subr.bf16.mxu0 0
      %602 = vmatpush1.bf16.msra.mxu0 0
      %603 = vmatprep.subr.bf16.mxu0 0
      %604 = vmatpush1.bf16.msra.mxu0 0
      %605 = vmatprep.subr.bf16.mxu0 0
      %606 = vmatpush1.bf16.msra.mxu0 0
      %607 = vmatprep.subr.bf16.mxu0 0
      %608 = vmatpush1.bf16.msra.mxu0 0
      %609 = vmatprep.subr.bf16.mxu0 0
      %610 = vmatpush1.bf16.msra.mxu0 0
      %611 = vmatprep.subr.bf16.mxu0 0
      %612 = vmatpush1.bf16.msra.mxu0 0
      %613 = vmatprep.subr.bf16.mxu0 0
      %614 = vmatpush1.bf16.msra.mxu0 0
      %615 = vmatprep.mubr.bf16.mxu0 0
      %616 = vmatmul.mubr.bf16.gmra.mrb[0].mxu0 %v362
      %v617 = vpop.f32.mrb[0].mxu0
      %v618 = vadd.f32 %v496, %v617
      %v619 = vpop.f32.mrb[0].mxu0
      %v620 = vadd.f32 %v500, %v619
      %v621 = vpop.f32.mrb[0].mxu0
      %v622 = vadd.f32 %v496, %v621
      %v623 = vpop.f32.mrb[0].mxu0
      %v624 = vadd.f32 %v500, %v623
      %625 = vdwg.mxu0
      %v626 = vpack.c.bf16 %v474, %v474
      %v627 = vpack.c.bf16 %v622, %v618
      %v628 = vpack.c.bf16 %v624, %v620
      %s629 = smul.u32 %s24, 8
      %v630 = vlaneseq
      %v631 = vshrl.u32 %v630, 7
      %v632 = vstv %s629
      %v633 = vadd.s32 %v632, %v631
      %v634 = vlaneseq
      %v635 = vand.u32 %v634, 127
      %vm636 = vcmp.ge.s32.totalorder %v633, %v635
      %v637 = vsel %vm636, 0.0, -1e+09
      %vm638 = vcmask 261120
      %v640 = vsel %vm638, %v626, 0
      %v643 = vsel %vm638, %v627, 0
      %645 = vmatprep.subr.bf16.mxu0 0
      %646 = vmatpush1.bf16.xpose.msra.mxu0 %v643
      %647 = vmatprep.subr.bf16.mxu0 0
      %648 = vmatpush1.bf16.xpose.msra.mxu0 0
      %649 = vmatprep.subr.bf16.mxu0 0
      %650 = vmatpush1.bf16.xpose.msra.mxu0 0
      %651 = vmatprep.subr.bf16.mxu0 0
      %652 = vmatpush1.bf16.xpose.msra.mxu0 0
      %653 = vmatprep.subr.bf16.mxu0 0
      %654 = vmatpush1.bf16.xpose.msra.mxu0 0
      %655 = vmatprep.subr.bf16.mxu0 0
      %656 = vmatpush1.bf16.xpose.msra.mxu0 0
      %657 = vmatprep.subr.bf16.mxu0 0
      %658 = vmatpush1.bf16.xpose.msra.mxu0 0
      %659 = vmatprep.subr.bf16.mxu0 0
      %660 = vmatpush1.bf16.xpose.msra.mxu0 0
      %661 = vmatprep.subr.bf16.mxu0 0
      %662 = vmatpush1.bf16.xpose.msra.mxu0 0
      %663 = vmatprep.subr.bf16.mxu0 0
      %664 = vmatpush1.bf16.xpose.msra.mxu0 0
      %665 = vmatprep.subr.bf16.mxu0 0
      %666 = vmatpush1.bf16.xpose.msra.mxu0 0
      %667 = vmatprep.subr.bf16.mxu0 0
      %668 = vmatpush1.bf16.xpose.msra.mxu0 0
      %669 = vmatprep.subr.bf16.mxu0 0
      %670 = vmatpush1.bf16.xpose.msra.mxu0 0
      %671 = vmatprep.subr.bf16.mxu0 0
      %672 = vmatpush1.bf16.xpose.msra.mxu0 0
      %673 = vmatprep.subr.bf16.mxu0 0
      %674 = vmatpush1.bf16.xpose.msra.mxu0 0
      %675 = vmatprep.subr.bf16.mxu0 0
      %676 = vmatpush1.bf16.xpose.msra.mxu0 0
      %677 = vmatprep.mubr.bf16.mxu0 0
      %678 = vmatmul.mubr.bf16.gmra.mrb[0].mxu0 %v640
      %v679 = vpop.f32.mrb[0].mxu0
      %v680 = vadd.f32 %v637, %v679
      %v681 = vpop.f32.mrb[0].mxu0
      %v682 = vpop.f32.mrb[0].mxu0
      %v683 = vpop.f32.mrb[0].mxu0
      %684 = vdwg.mxu0
      %vm685 = vcmask 130048
      %v686 = vsel %vm685, %v680, -inf
      %687 = vmax.xlane.f32.xlu0 %v686
      %v688 = vpop.xlane.xlu0 %687
      %v689 = vsub.f32 %v680, %v688
      %v690 = vmul.f32 %v689, 1.442695
      %v691 = vpow.pop %v690
      %v692 = vsel %vm685, %v691, 0.0
      %693 = vadd.xlane.f32.xlu0 %v692
      %v694 = vpop.xlane.xlu0 %693
      %v695 = vrcp.pop %v694
      %v696 = vmul.f32 %v691, %v695
      %v697 = vpack.c.bf16 %v696, %v696
      %v699 = vsel %vm685, %v697, 0
      %701 = vmatprep.subr.bf16.mxu0 0
      %702 = vmatpush1.bf16.msra.mxu0 %v628
      %703 = vmatprep.subr.bf16.mxu0 0
      %704 = vmatpush1.bf16.msra.mxu0 0
      %705 = vmatprep.subr.bf16.mxu0 0
      %706 = vmatpush1.bf16.msra.mxu0 0
      %707 = vmatprep.subr.bf16.mxu0 0
      %708 = vmatpush1.bf16.msra.mxu0 0
      %709 = vmatprep.subr.bf16.mxu0 0
      %710 = vmatpush1.bf16.msra.mxu0 0
      %711 = vmatprep.subr.bf16.mxu0 0
      %712 = vmatpush1.bf16.msra.mxu0 0
      %713 = vmatprep.subr.bf16.mxu0 0
      %714 = vmatpush1.bf16.msra.mxu0 0
      %715 = vmatprep.subr.bf16.mxu0 0
      %716 = vmatpush1.bf16.msra.mxu0 0
      %717 = vmatprep.subr.bf16.mxu0 0
      %718 = vmatpush1.bf16.msra.mxu0 0
      %719 = vmatprep.subr.bf16.mxu0 0
      %720 = vmatpush1.bf16.msra.mxu0 0
      %721 = vmatprep.subr.bf16.mxu0 0
      %722 = vmatpush1.bf16.msra.mxu0 0
      %723 = vmatprep.subr.bf16.mxu0 0
      %724 = vmatpush1.bf16.msra.mxu0 0
      %725 = vmatprep.subr.bf16.mxu0 0
      %726 = vmatpush1.bf16.msra.mxu0 0
      %727 = vmatprep.subr.bf16.mxu0 0
      %728 = vmatpush1.bf16.msra.mxu0 0
      %729 = vmatprep.subr.bf16.mxu0 0
      %730 = vmatpush1.bf16.msra.mxu0 0
      %731 = vmatprep.subr.bf16.mxu0 0
      %732 = vmatpush1.bf16.msra.mxu0 0
      %733 = vmatprep.mubr.bf16.mxu0 0
      %734 = vmatmul.mubr.bf16.gmra.mrb[0].mxu0 %v699
      %v735 = vpop.f32.mrb[0].mxu0
      %v736 = vadd.f32 0.0, %v735
      %v737 = vpop.f32.mrb[0].mxu0
      %v738 = vpop.f32.mrb[0].mxu0
      %v739 = vpop.f32.mrb[0].mxu0
      %740 = vdwg.mxu0
      %741 = vst.msk [vmem:[#allocation2] sm:$0xff] %vm638, %v736
      %743 = vrot.lane.b32.xlu0 %v626, 96
      %v744 = vpop.permute.xlu0 %743
      %746 = vrot.lane.b32.xlu0 %v627, 96
      %v747 = vpop.permute.xlu0 %746
      %v749 = vsel %vm638, %v744, 0
      %v752 = vsel %vm638, %v747, 0
      %754 = vmatprep.subr.bf16.mxu0 0
      %755 = vmatpush1.bf16.xpose.msra.mxu0 %v752
      %756 = vmatprep.subr.bf16.mxu0 0
      %757 = vmatpush1.bf16.xpose.msra.mxu0 0
      %758 = vmatprep.subr.bf16.mxu0 0
      %759 = vmatpush1.bf16.xpose.msra.mxu0 0
      %760 = vmatprep.subr.bf16.mxu0 0
      %761 = vmatpush1.bf16.xpose.msra.mxu0 0
      %762 = vmatprep.subr.bf16.mxu0 0
      %763 = vmatpush1.bf16.xpose.msra.mxu0 0
      %764 = vmatprep.subr.bf16.mxu0 0
      %765 = vmatpush1.bf16.xpose.msra.mxu0 0
      %766 = vmatprep.subr.bf16.mxu0 0
      %767 = vmatpush1.bf16.xpose.msra.mxu0 0
      %768 = vmatprep.subr.bf16.mxu0 0
      %769 = vmatpush1.bf16.xpose.msra.mxu0 0
      %770 = vmatprep.subr.bf16.mxu0 0
      %771 = vmatpush1.bf16.xpose.msra.mxu0 0
      %772 = vmatprep.subr.bf16.mxu0 0
      %773 = vmatpush1.bf16.xpose.msra.mxu0 0
      %774 = vmatprep.subr.bf16.mxu0 0
      %775 = vmatpush1.bf16.xpose.msra.mxu0 0
      %776 = vmatprep.subr.bf16.mxu0 0
      %777 = vmatpush1.bf16.xpose.msra.mxu0 0
      %778 = vmatprep.subr.bf16.mxu0 0
      %779 = vmatpush1.bf16.xpose.msra.mxu0 0
      %780 = vmatprep.subr.bf16.mxu0 0
      %781 = vmatpush1.bf16.xpose.msra.mxu0 0
      %782 = vmatprep.subr.bf16.mxu0 0
      %783 = vmatpush1.bf16.xpose.msra.mxu0 0
      %784 = vmatprep.subr.bf16.mxu0 0
      %785 = vmatpush1.bf16.xpose.msra.mxu0 0
      %786 = vmatprep.mubr.bf16.mxu0 0
      %787 = vmatmul.mubr.bf16.gmra.mrb[0].mxu0 %v749
      %v788 = vpop.f32.mrb[0].mxu0
      %v789 = vadd.f32 %v637, %v788
      %v790 = vpop.f32.mrb[0].mxu0
      %v791 = vpop.f32.mrb[0].mxu0
      %v792 = vpop.f32.mrb[0].mxu0
      %793 = vdwg.mxu0
      %v794 = vsel %vm685, %v789, -inf
      %795 = vmax.xlane.f32.xlu0 %v794
      %v796 = vpop.xlane.xlu0 %795
      %v797 = vsub.f32 %v789, %v796
      %v798 = vmul.f32 %v797, 1.442695
      %v799 = vpow.pop %v798
      %v800 = vsel %vm685, %v799, 0.0
      %801 = vadd.xlane.f32.xlu0 %v800
      %v802 = vpop.xlane.xlu0 %801
      %v803 = vrcp.pop %v802
      %v804 = vmul.f32 %v799, %v803
      %v805 = vpack.c.bf16 %v804, %v804
      %807 = vrot.lane.b32.xlu0 %v628, 96
      %v808 = vpop.permute.xlu0 %807
      %v811 = vsel %vm685, %v805, 0
      %813 = vmatprep.subr.bf16.mxu0 0
      %814 = vmatpush1.bf16.msra.mxu0 %v808
      %815 = vmatprep.subr.bf16.mxu0 0
      %816 = vmatpush1.bf16.msra.mxu0 0
      %817 = vmatprep.subr.bf16.mxu0 0
      %818 = vmatpush1.bf16.msra.mxu0 0
      %819 = vmatprep.subr.bf16.mxu0 0
      %820 = vmatpush1.bf16.msra.mxu0 0
      %821 = vmatprep.subr.bf16.mxu0 0
      %822 = vmatpush1.bf16.msra.mxu0 0
      %823 = vmatprep.subr.bf16.mxu0 0
      %824 = vmatpush1.bf16.msra.mxu0 0
      %825 = vmatprep.subr.bf16.mxu0 0
      %826 = vmatpush1.bf16.msra.mxu0 0
      %827 = vmatprep.subr.bf16.mxu0 0
      %828 = vmatpush1.bf16.msra.mxu0 0
      %829 = vmatprep.subr.bf16.mxu0 0
      %830 = vmatpush1.bf16.msra.mxu0 0
      %831 = vmatprep.subr.bf16.mxu0 0
      %832 = vmatpush1.bf16.msra.mxu0 0
      %833 = vmatprep.subr.bf16.mxu0 0
      %834 = vmatpush1.bf16.msra.mxu0 0
      %835 = vmatprep.subr.bf16.mxu0 0
      %836 = vmatpush1.bf16.msra.mxu0 0
      %837 = vmatprep.subr.bf16.mxu0 0
      %838 = vmatpush1.bf16.msra.mxu0 0
      %839 = vmatprep.subr.bf16.mxu0 0
      %840 = vmatpush1.bf16.msra.mxu0 0
      %841 = vmatprep.subr.bf16.mxu0 0
      %842 = vmatpush1.bf16.msra.mxu0 0
      %843 = vmatprep.subr.bf16.mxu0 0
      %844 = vmatpush1.bf16.msra.mxu0 0
      %845 = vmatprep.mubr.bf16.mxu0 0
      %846 = vmatmul.mubr.bf16.gmra.mrb[0].mxu0 %v811
      %v847 = vpop.f32.mrb[0].mxu0
      %v848 = vadd.f32 0.0, %v847
      %v849 = vpop.f32.mrb[0].mxu0
      %v850 = vpop.f32.mrb[0].mxu0
      %v851 = vpop.f32.mrb[0].mxu0
      %852 = vdwg.mxu0
      %854 = vrot.lane.b32.xlu0 %v848, 32
      %v855 = vpop.permute.xlu0 %854
      %vm857 = vcmask 523520
      %858 = vst.msk [vmem:[#allocation2] sm:$0xff] %vm857, %v855
      %859 = vrot.lane.b32.xlu0 %v626, 64
      %v860 = vpop.permute.xlu0 %859
      %861 = vrot.lane.b32.xlu0 %v627, 64
      %v862 = vpop.permute.xlu0 %861
      %v864 = vsel %vm638, %v860, 0
      %v867 = vsel %vm638, %v862, 0
      %869 = vmatprep.subr.bf16.mxu0 0
      %870 = vmatpush1.bf16.xpose.msra.mxu0 %v867
      %871 = vmatprep.subr.bf16.mxu0 0
      %872 = vmatpush1.bf16.xpose.msra.mxu0 0
      %873 = vmatprep.subr.bf16.mxu0 0
      %874 = vmatpush1.bf16.xpose.msra.mxu0 0
      %875 = vmatprep.subr.bf16.mxu0 0
      %876 = vmatpush1.bf16.xpose.msra.mxu0 0
      %877 = vmatprep.subr.bf16.mxu0 0
      %878 = vmatpush1.bf16.xpose.msra.mxu0 0
      %879 = vmatprep.subr.bf16.mxu0 0
      %880 = vmatpush1.bf16.xpose.msra.mxu0 0
      %881 = vmatprep.subr.bf16.mxu0 0
      %882 = vmatpush1.bf16.xpose.msra.mxu0 0
      %883 = vmatprep.subr.bf16.mxu0 0
      %884 = vmatpush1.bf16.xpose.msra.mxu0 0
      %885 = vmatprep.subr.bf16.mxu0 0
      %886 = vmatpush1.bf16.xpose.msra.mxu0 0
      %887 = vmatprep.subr.bf16.mxu0 0
      %888 = vmatpush1.bf16.xpose.msra.mxu0 0
      %889 = vmatprep.subr.bf16.mxu0 0
      %890 = vmatpush1.bf16.xpose.msra.mxu0 0
      %891 = vmatprep.subr.bf16.mxu0 0
      %892 = vmatpush1.bf16.xpose.msra.mxu0 0
      %893 = vmatprep.subr.bf16.mxu0 0
      %894 = vmatpush1.bf16.xpose.msra.mxu0 0
      %895 = vmatprep.subr.bf16.mxu0 0
      %896 = vmatpush1.bf16.xpose.msra.mxu0 0
      %897 = vmatprep.subr.bf16.mxu0 0
      %898 = vmatpush1.bf16.xpose.msra.mxu0 0
      %899 = vmatprep.subr.bf16.mxu0 0
      %900 = vmatpush1.bf16.xpose.msra.mxu0 0
      %901 = vmatprep.mubr.bf16.mxu0 0
      %902 = vmatmul.mubr.bf16.gmra.mrb[0].mxu0 %v864
      %v903 = vpop.f32.mrb[0].mxu0
      %v904 = vadd.f32 %v637, %v903
      %v905 = vpop.f32.mrb[0].mxu0
      %v906 = vpop.f32.mrb[0].mxu0
      %v907 = vpop.f32.mrb[0].mxu0
      %908 = vdwg.mxu0
      %v909 = vsel %vm685, %v904, -inf
      %910 = vmax.xlane.f32.xlu0 %v909
      %v911 = vpop.xlane.xlu0 %910
      %v912 = vsub.f32 %v904, %v911
      %v913 = vmul.f32 %v912, 1.442695
      %v914 = vpow.pop %v913
      %v915 = vsel %vm685, %v914, 0.0
      %916 = vadd.xlane.f32.xlu0 %v915
      %v917 = vpop.xlane.xlu0 %916
      %v918 = vrcp.pop %v917
      %v919 = vmul.f32 %v914, %v918
      %v920 = vpack.c.bf16 %v919, %v919
      %921 = vrot.lane.b32.xlu0 %v628, 64
      %v922 = vpop.permute.xlu0 %921
      %v925 = vsel %vm685, %v920, 0
      %927 = vmatprep.subr.bf16.mxu0 0
      %928 = vmatpush1.bf16.msra.mxu0 %v922
      %929 = vmatprep.subr.bf16.mxu0 0
      %930 = vmatpush1.bf16.msra.mxu0 0
      %931 = vmatprep.subr.bf16.mxu0 0
      %932 = vmatpush1.bf16.msra.mxu0 0
      %933 = vmatprep.subr.bf16.mxu0 0
      %934 = vmatpush1.bf16.msra.mxu0 0
      %935 = vmatprep.subr.bf16.mxu0 0
      %936 = vmatpush1.bf16.msra.mxu0 0
      %937 = vmatprep.subr.bf16.mxu0 0
      %938 = vmatpush1.bf16.msra.mxu0 0
      %939 = vmatprep.subr.bf16.mxu0 0
      %940 = vmatpush1.bf16.msra.mxu0 0
      %941 = vmatprep.subr.bf16.mxu0 0
      %942 = vmatpush1.bf16.msra.mxu0 0
      %943 = vmatprep.subr.bf16.mxu0 0
      %944 = vmatpush1.bf16.msra.mxu0 0
      %945 = vmatprep.subr.bf16.mxu0 0
      %946 = vmatpush1.bf16.msra.mxu0 0
      %947 = vmatprep.subr.bf16.mxu0 0
      %948 = vmatpush1.bf16.msra.mxu0 0
      %949 = vmatprep.subr.bf16.mxu0 0
      %950 = vmatpush1.bf16.msra.mxu0 0
      %951 = vmatprep.subr.bf16.mxu0 0
      %952 = vmatpush1.bf16.msra.mxu0 0
      %953 = vmatprep.subr.bf16.mxu0 0
      %954 = vmatpush1.bf16.msra.mxu0 0
      %955 = vmatprep.subr.bf16.mxu0 0
      %956 = vmatpush1.bf16.msra.mxu0 0
      %957 = vmatprep.subr.bf16.mxu0 0
      %958 = vmatpush1.bf16.msra.mxu0 0
      %959 = vmatprep.mubr.bf16.mxu0 0
      %960 = vmatmul.mubr.bf16.gmra.mrb[0].mxu0 %v925
      %v961 = vpop.f32.mrb[0].mxu0
      %v962 = vadd.f32 0.0, %v961
      %v963 = vpop.f32.mrb[0].mxu0
      %v964 = vpop.f32.mrb[0].mxu0
      %v965 = vpop.f32.mrb[0].mxu0
      %966 = vdwg.mxu0
      %968 = vrot.lane.b32.xlu0 %v962, 64
      %v969 = vpop.permute.xlu0 %968
      %vm971 = vcmask 785920
      %972 = vst.msk [vmem:[#allocation2] sm:$0xff] %vm971, %v969
      %973 = vrot.lane.b32.xlu0 %v626, 32
      %v974 = vpop.permute.xlu0 %973
      %975 = vrot.lane.b32.xlu0 %v627, 32
      %v976 = vpop.permute.xlu0 %975
      %v978 = vsel %vm638, %v974, 0
      %v981 = vsel %vm638, %v976, 0
      %983 = vmatprep.subr.bf16.mxu0 0
      %984 = vmatpush1.bf16.xpose.msra.mxu0 %v981
      %985 = vmatprep.subr.bf16.mxu0 0
      %986 = vmatpush1.bf16.xpose.msra.mxu0 0
      %987 = vmatprep.subr.bf16.mxu0 0
      %988 = vmatpush1.bf16.xpose.msra.mxu0 0
      %989 = vmatprep.subr.bf16.mxu0 0
      %990 = vmatpush1.bf16.xpose.msra.mxu0 0
      %991 = vmatprep.subr.bf16.mxu0 0
      %992 = vmatpush1.bf16.xpose.msra.mxu0 0
      %993 = vmatprep.subr.bf16.mxu0 0
      %994 = vmatpush1.bf16.xpose.msra.mxu0 0
      %995 = vmatprep.subr.bf16.mxu0 0
      %996 = vmatpush1.bf16.xpose.msra.mxu0 0
      %997 = vmatprep.subr.bf16.mxu0 0
      %998 = vmatpush1.bf16.xpose.msra.mxu0 0
      %999 = vmatprep.subr.bf16.mxu0 0
      %1000 = vmatpush1.bf16.xpose.msra.mxu0 0
      %1001 = vmatprep.subr.bf16.mxu0 0
      %1002 = vmatpush1.bf16.xpose.msra.mxu0 0
      %1003 = vmatprep.subr.bf16.mxu0 0
      %1004 = vmatpush1.bf16.xpose.msra.mxu0 0
      %1005 = vmatprep.subr.bf16.mxu0 0
      %1006 = vmatpush1.bf16.xpose.msra.mxu0 0
      %1007 = vmatprep.subr.bf16.mxu0 0
      %1008 = vmatpush1.bf16.xpose.msra.mxu0 0
      %1009 = vmatprep.subr.bf16.mxu0 0
      %1010 = vmatpush1.bf16.xpose.msra.mxu0 0
      %1011 = vmatprep.subr.bf16.mxu0 0
      %1012 = vmatpush1.bf16.xpose.msra.mxu0 0
      %1013 = vmatprep.subr.bf16.mxu0 0
      %1014 = vmatpush1.bf16.xpose.msra.mxu0 0
      %1015 = vmatprep.mubr.bf16.mxu0 0
      %1016 = vmatmul.mubr.bf16.gmra.mrb[0].mxu0 %v978
      %v1017 = vpop.f32.mrb[0].mxu0
      %v1018 = vadd.f32 %v637, %v1017
      %v1019 = vpop.f32.mrb[0].mxu0
      %v1020 = vpop.f32.mrb[0].mxu0
      %v1021 = vpop.f32.mrb[0].mxu0
      %1022 = vdwg.mxu0
      %v1023 = vsel %vm685, %v1018, -inf
      %1024 = vmax.xlane.f32.xlu0 %v1023
      %v1025 = vpop.xlane.xlu0 %1024
      %v1026 = vsub.f32 %v1018, %v1025
      %v1027 = vmul.f32 %v1026, 1.442695
      %v1028 = vpow.pop %v1027
      %v1029 = vsel %vm685, %v1028, 0.0
      %1030 = vadd.xlane.f32.xlu0 %v1029
      %v1031 = vpop.xlane.xlu0 %1030
      %v1032 = vrcp.pop %v1031
      %v1033 = vmul.f32 %v1028, %v1032
      %v1034 = vpack.c.bf16 %v1033, %v1033
      %1035 = vrot.lane.b32.xlu0 %v628, 32
      %v1036 = vpop.permute.xlu0 %1035
      %v1039 = vsel %vm685, %v1034, 0
      %1041 = vmatprep.subr.bf16.mxu0 0
      %1042 = vmatpush1.bf16.msra.mxu0 %v1036
      %1043 = vmatprep.subr.bf16.mxu0 0
      %1044 = vmatpush1.bf16.msra.mxu0 0
      %1045 = vmatprep.subr.bf16.mxu0 0
      %1046 = vmatpush1.bf16.msra.mxu0 0
      %1047 = vmatprep.subr.bf16.mxu0 0
      %1048 = vmatpush1.bf16.msra.mxu0 0
      %1049 = vmatprep.subr.bf16.mxu0 0
      %1050 = vmatpush1.bf16.msra.mxu0 0
      %1051 = vmatprep.subr.bf16.mxu0 0
      %1052 = vmatpush1.bf16.msra.mxu0 0
      %1053 = vmatprep.subr.bf16.mxu0 0
      %1054 = vmatpush1.bf16.msra.mxu0 0
      %1055 = vmatprep.subr.bf16.mxu0 0
      %1056 = vmatpush1.bf16.msra.mxu0 0
      %1057 = vmatprep.subr.bf16.mxu0 0
      %1058 = vmatpush1.bf16.msra.mxu0 0
      %1059 = vmatprep.subr.bf16.mxu0 0
      %1060 = vmatpush1.bf16.msra.mxu0 0
      %1061 = vmatprep.subr.bf16.mxu0 0
      %1062 = vmatpush1.bf16.msra.mxu0 0
      %1063 = vmatprep.subr.bf16.mxu0 0
      %1064 = vmatpush1.bf16.msra.mxu0 0
      %1065 = vmatprep.subr.bf16.mxu0 0
      %1066 = vmatpush1.bf16.msra.mxu0 0
      %1067 = vmatprep.subr.bf16.mxu0 0
      %1068 = vmatpush1.bf16.msra.mxu0 0
      %1069 = vmatprep.subr.bf16.mxu0 0
      %1070 = vmatpush1.bf16.msra.mxu0 0
      %1071 = vmatprep.subr.bf16.mxu0 0
      %1072 = vmatpush1.bf16.msra.mxu0 0
      %1073 = vmatprep.mubr.bf16.mxu0 0
      %1074 = vmatmul.mubr.bf16.gmra.mrb[0].mxu0 %v1039
      %v1075 = vpop.f32.mrb[0].mxu0
      %v1076 = vadd.f32 0.0, %v1075
      %v1077 = vpop.f32.mrb[0].mxu0
      %v1078 = vpop.f32.mrb[0].mxu0
      %v1079 = vpop.f32.mrb[0].mxu0
      %1080 = vdwg.mxu0
      %1082 = vrot.lane.b32.xlu0 %v1076, 96
      %v1083 = vpop.permute.xlu0 %1082
      %vm1085 = vcmask 1048320
      %1086 = vst.msk [vmem:[#allocation2] sm:$0xff] %vm1085, %v1083
      %v1087 = vld [vmem:[#allocation2] sm:$0xff]
      %v1088 = vpack.c.bf16 %v1087, %v1087
      %v1089 = vld [vmem:[%s6] sm:$0xf]
      %v1090 = vld [vmem:[%s6 + $0x4] sm:$0xf]
      %v1091 = vld [vmem:[%s6 + $0x8] sm:$0xf]
      %v1092 = vld [vmem:[%s6 + $0xc] sm:$0xf]
      %v1093 = vld [vmem:[%s6 + $0x10] sm:$0xf]
      %v1094 = vld [vmem:[%s6 + $0x14] sm:$0xf]
      %v1095 = vld [vmem:[%s6 + $0x18] sm:$0xf]
      %v1096 = vld [vmem:[%s6 + $0x1c] sm:$0xf]
      %v1097 = vld [vmem:[%s6 + $0x20] sm:$0xf]
      %v1098 = vld [vmem:[%s6 + $0x24] sm:$0xf]
      %v1099 = vld [vmem:[%s6 + $0x28] sm:$0xf]
      %v1100 = vld [vmem:[%s6 + $0x2c] sm:$0xf]
      %v1101 = vld [vmem:[%s6 + $0x30] sm:$0xf]
      %v1102 = vld [vmem:[%s6 + $0x34] sm:$0xf]
      %v1103 = vld [vmem:[%s6 + $0x38] sm:$0xf]
      %v1104 = vld [vmem:[%s6 + $0x3c] sm:$0xf]
      %v1105 = vld [vmem:[%s7] sm:$0x1]
      %v1107 = vlaneseq
      %v1108 = vshrl.u32 %v1107, 7
      %v1109 = vsub.s32 0, %v1108
      %v1110 = vrot.slane %v1105, %v1109
      %v1128 = vunpack.c.l.b16 %v1089
      %v1129 = vunpack.c.l.b16 %v1090
      %v1130 = vunpack.c.l.b16 %v1091
      %v1131 = vunpack.c.l.b16 %v1092
      %v1132 = vunpack.c.l.b16 %v1093
      %v1133 = vunpack.c.l.b16 %v1094
      %v1134 = vunpack.c.l.b16 %v1095
      %v1135 = vunpack.c.l.b16 %v1096
      %v1136 = vunpack.c.l.b16 %v1097
      %v1137 = vunpack.c.l.b16 %v1098
      %v1138 = vunpack.c.l.b16 %v1099
      %v1139 = vunpack.c.l.b16 %v1100
      %v1140 = vunpack.c.l.b16 %v1101
      %v1141 = vunpack.c.l.b16 %v1102
      %v1142 = vunpack.c.l.b16 %v1103
      %v1143 = vunpack.c.l.b16 %v1104
      %v1144 = vpack.c.b16 %v1129, %v1128
      %v1145 = vpack.c.b16 %v1131, %v1130
      %v1146 = vpack.c.b16 %v1133, %v1132
      %v1147 = vpack.c.b16 %v1135, %v1134
      %v1148 = vpack.c.b16 %v1137, %v1136
      %v1149 = vpack.c.b16 %v1139, %v1138
      %v1150 = vpack.c.b16 %v1141, %v1140
      %v1151 = vpack.c.b16 %v1143, %v1142
      %1160 = vmatprep.subr.bf16.mxu0 0
      %1161 = vmatpush1.bf16.msra.mxu0 %v1144
      %1162 = vmatprep.subr.bf16.mxu0 0
      %1163 = vmatpush1.bf16.msra.mxu0 %v1145
      %1164 = vmatprep.subr.bf16.mxu0 0
      %1165 = vmatpush1.bf16.msra.mxu0 %v1146
      %1166 = vmatprep.subr.bf16.mxu0 0
      %1167 = vmatpush1.bf16.msra.mxu0 %v1147
      %1168 = vmatprep.subr.bf16.mxu0 0
      %1169 = vmatpush1.bf16.msra.mxu0 %v1148
      %1170 = vmatprep.subr.bf16.mxu0 0
      %1171 = vmatpush1.bf16.msra.mxu0 %v1149
      %1172 = vmatprep.subr.bf16.mxu0 0
      %1173 = vmatpush1.bf16.msra.mxu0 %v1150
      %1174 = vmatprep.subr.bf16.mxu0 0
      %1175 = vmatpush1.bf16.msra.mxu0 %v1151
      %1176 = vmatprep.subr.bf16.mxu0 0
      %1177 = vmatpush1.bf16.msra.mxu0 0
      %1178 = vmatprep.subr.bf16.mxu0 0
      %1179 = vmatpush1.bf16.msra.mxu0 0
      %1180 = vmatprep.subr.bf16.mxu0 0
      %1181 = vmatpush1.bf16.msra.mxu0 0
      %1182 = vmatprep.subr.bf16.mxu0 0
      %1183 = vmatpush1.bf16.msra.mxu0 0
      %1184 = vmatprep.subr.bf16.mxu0 0
      %1185 = vmatpush1.bf16.msra.mxu0 0
      %1186 = vmatprep.subr.bf16.mxu0 0
      %1187 = vmatpush1.bf16.msra.mxu0 0
      %1188 = vmatprep.subr.bf16.mxu0 0
      %1189 = vmatpush1.bf16.msra.mxu0 0
      %1190 = vmatprep.subr.bf16.mxu0 0
      %1191 = vmatpush1.bf16.msra.mxu0 0
      %1192 = vmatprep.mubr.bf16.mxu0 0
      %1193 = vmatmul.mubr.bf16.gmra.mrb[0].mxu0 %v1088
      %v1194 = vpop.f32.mrb[0].mxu0
      %v1195 = vadd.f32 %v1110, %v1194
      %v1196 = vpop.f32.mrb[0].mxu0
      %v1197 = vpop.f32.mrb[0].mxu0
      %v1198 = vpop.f32.mrb[0].mxu0
      %1199 = vdwg.mxu0
      %1200 = vst [vmem:[%s356] sm:$0xff] %v1195
      %p1201 = scmp.lt.s32.totalorder %s23, 1
      %s1202 = scalar_select %p1201, %s23, 1
      %p1203 = scmp.lt.s32.totalorder %s24, 1
      %s1204 = scalar_select %p1203, %s24, 1
      %s1205 = smul.addr %s1202, 2
      %s1206 = sadd.s32 %s1204, %s1205
      %s1207 = smul.addr %s1206, 8
      %s1208 = scalar_lea.vmem %s8, %s1207
      // Predicated region
      $region53: #{transformer_decoder_forward.7} parent=51 // pred_check
        %p1209 = pneg %p231
      $region54: #{transformer_decoder_forward.7} parent=51 // pred_check_branch
        %1211 = sbr.rel (%p1209) target = $region56
      $region55: #{transformer_decoder_forward.7} parent=51 // pred_region
        _
      $region56: #{transformer_decoder_forward.7} parent=51 // pred_fallthru
        _
    $region52: #{transformer_decoder_forward.7} parent=5 // pred_fallthru
      _
    %p1212 = scmp.le.s32.totalorder 2, %s14
    // Predicated region
    $region57: #{transformer_decoder_forward.7} parent=5 // pred_check
      %p1213 = pneg %p1212
    $region58: #{transformer_decoder_forward.7} parent=5 // pred_check_branch
      %1215 = sbr.rel (%p1213) target = $region60
    $region59: #{transformer_decoder_forward.7} parent=5 // pred_region
      %s1216 = ssub.s32 %s14, 2
      // Predicated region
      $region61: #{transformer_decoder_forward.7} parent=59 // pred_check
        %p1217 = pneg %p237
      $region62: #{transformer_decoder_forward.7} parent=59 // pred_check_branch
        %1219 = sbr.rel (%p1217) target = $region64
      $region63: #{transformer_decoder_forward.7} parent=59 // pred_region
        %p1220 = scmp.lt.s32.totalorder %s25, 1
        %s1221 = scalar_select %p1220, %s25, 1
        %p1222 = scmp.lt.s32.totalorder %s26, 1
        %s1223 = scalar_select %p1222, %s26, 1
        %s1224 = smul.addr %s1221, 2
        %s1225 = sadd.s32 %s1223, %s1224
        %s1226 = smul.addr %s1225, 8
        %s1227 = scalar_lea.vmem %s8, %s1226
      $region64: #{transformer_decoder_forward.7} parent=59 // pred_fallthru
        _
    $region60: #{transformer_decoder_forward.7} parent=5 // pred_fallthru
      _
  $region6: #{transformer_decoder_forward.7} parent=0 // loop_footer
    %s18 = sadd.s32 1, %s14
  $region7: #{transformer_decoder_forward.7} parent=0 // loop_footer_branch
    %13 = sbr.rel target = $region3
  $region8: #{transformer_decoder_forward.7} parent=0 // loop_exit
    _

// kernel: transformer_decoder_forward.5
$region0: #{transformer_decoder_forward.5}
  #allocation0 [shape = 'u32[]', space=smem, size = 0x4, offset = 0x4, fixed_abs, tag = 'smem constant byte address 0x4 - core index']
  #allocation1 [shape = 'u32[144,128]{1,0:T(1,128)}', space=vmem, size = 0x12000, scoped, tag = 'internal scratch']
  #allocation2 [shape = 'f32[8,128]{1,0:T(8,128)}', space=vmem, size = 0x1000, scoped, tag = 'scratch operand']
  %s0 = inlined_call_operand.vmem [shape: f32[2,16,128], index: 0, kind: input, shape index: {}, may-alias: {0,1}]
  %s1 = inlined_call_operand.vmem [shape: f32[2,16,128], index: 1, kind: input, shape index: {}, may-alias: {0,1}]
  %s2 = inlined_call_operand.vmem [shape: bf16[128,128], index: 2, kind: input, shape index: {}]
  %s3 = inlined_call_operand.vmem [shape: f32[1,128], index: 3, kind: input, shape index: {}]
  %s4 = inlined_call_operand.vmem [shape: bf16[128,256], index: 4, kind: input, shape index: {}]
  %s5 = inlined_call_operand.hbm [shape: f32[1,256], index: 5, kind: input, shape index: {}]
  %s6 = inlined_call_operand.vmem [shape: bf16[128,128], index: 6, kind: input, shape index: {}]
  %s7 = inlined_call_operand.hbm [shape: f32[1,128], index: 7, kind: input, shape index: {}]
  %s8 = inlined_call_operand.vmem [shape: f32[2,16,128], index: 8, kind: output, shape index: {}]
  %s9 = sld [smem:[#allocation0]]
  $region73: #{transformer_decoder_forward.5} parent=0
    _
  %s11 = ssub.s32 1, %s9
  %s12 = scalar_select 0, %s11, %s9
  $region1: #{transformer_decoder_forward.5} parent=0
    #allocation3 [shape = 'u8[1024]{0}', space=vmem, size = 0x400, scoped, tag = 'input window, operand 5, single buffered']
    #allocation4 [shape = 's32[2]{0}', space=sflag, size = 0x8, scoped, tag = 'scoped memory for transformer_decoder_forward.5']
    #allocation5 [shape = 'u8[512]{0}', space=vmem, size = 0x400, scoped, tag = 'input window, operand 7, single buffered']
    #allocation6 [shape = 's32[1]{0}', space=sflag, size = 0x4, scoped, tag = 'scoped memory for transformer_decoder_forward.5']
    %13 = vsyncpa [#allocation4], 0
    %14 = vsyncpa [#allocation6], 0
    loop: start=0, step=1, limit=6
    $region2: #{transformer_decoder_forward.5} parent=1 // loop_pre_header
      _
    $region3: #{transformer_decoder_forward.5} parent=1 // loop_header
      %s16 = sphi 0, %s20
      %p17 = scmp.ge.s32.totalorder %s16, 6
      %s23 = sphi 0, %s35
      %s24 = sphi 0, %s31
      %s25 = sphi 0, %s23
      %s26 = sphi 0, %s24
      %s27 = sphi 0, %s25
      %s28 = sphi 0, %s26
      %s40 = sphi 0, %s42
      %s43 = sphi 0, %s40
      %s44 = sphi 0, %s43
      %s60 = sphi 0, %s44
      %s66 = sphi 0, %s68
      %s69 = sphi 0, %s66
      %s70 = sphi 0, %s69
      %s86 = sphi 0, %s70
      %s90 = sphi 0, %s90
      %s92 = sphi 0, %s90
      %s93 = sphi 0, %s92
      %s107 = sphi 0, %s93
      %s111 = sphi 0, %s111
      %s113 = sphi 0, %s111
      %s114 = sphi 0, %s113
      %s128 = sphi 0, %s114
      %s132 = sphi 0, %s132
      %s134 = sphi 0, %s132
      %s135 = sphi 0, %s134
      %s149 = sphi 0, %s135
      %s153 = sphi 0, %s153
      %s155 = sphi 0, %s153
      %s156 = sphi 0, %s155
      %s170 = sphi 0, %s156
      %s174 = sphi 0, %s174
      %s176 = sphi 0, %s174
      %s177 = sphi 0, %s176
      %s191 = sphi 0, %s177
      %s195 = sphi 0, %s195
      %s197 = sphi 0, %s195
      %s198 = sphi 0, %s197
      %s212 = sphi 0, %s198
      %s220 = sphi 0, %s222
      %s223 = sphi 0, %s220
      %s224 = sphi 0, %s223
      %s240 = sphi 0, %s224
    $region4: #{transformer_decoder_forward.5} parent=1 // loop_header_branch
      %19 = sbr.rel (%p17) target = $region8
    $region5: #{transformer_decoder_forward.5} parent=1 // loop_body
      %s21 = ssub.s32 %s16, 1
      %s22 = ssub.s32 %s16, 2
      %s29 = sadd.s32 1, %s24
      %p30 = scmp.ge.s32.totalorder %s29, 2
      %s31 = scalar_select %p30, 0, %s29
      %s32 = sadd.s32 1, %s23
      %s33 = scalar_select %p30, %s32, %s23
      %p34 = scmp.ge.s32.totalorder %s33, 2
      %s35 = scalar_select %p34, 0, %s33
      %s36 = ssub.s32 %s23, %s35
      %s37 = ssub.s32 %s24, %s31
      %s38 = sor.u32 %s36, %s37
      %p39 = scmp.eq.s32.totalorder %s38, 0
      %s41 = sadd.s32 %s40, 1
      %s42 = scalar_select %p39, %s40, %s41
      %p45 = pneg %p39
      %p46 = scmp.eq.s32.totalorder %s16, 3
      %p47 = por %p45, %p46
      %p48 = scmp.ne.s32.totalorder %s40, %s43
      %p49 = scmp.eq.s32.totalorder %s16, 0
      %p50 = por %p48, %p49
      %p51 = scmp.ne.s32.totalorder %s40, %s43
      %p52 = scmp.eq.s32.totalorder %s21, 3
      %p53 = por %p51, %p52
      %p54 = scmp.ne.s32.totalorder %s43, %s44
      %p55 = scmp.eq.s32.totalorder %s21, 0
      %p56 = por %p54, %p55
      %p57 = scmp.ne.s32.totalorder %s43, %s44
      %p58 = scmp.eq.s32.totalorder %s22, 3
      %p59 = por %p57, %p58
      %p61 = scmp.ne.s32.totalorder %s44, %s60
      %p62 = scmp.eq.s32.totalorder %s22, 0
      %p63 = por %p61, %p62
      %s64 = ssub.s32 %s23, %s35
      %p65 = scmp.eq.s32.totalorder %s64, 0
      %s67 = sadd.s32 %s66, 1
      %s68 = scalar_select %p65, %s66, %s67
      %p71 = pneg %p65
      %p72 = scmp.eq.s32.totalorder %s16, 3
      %p73 = por %p71, %p72
      %p74 = scmp.ne.s32.totalorder %s66, %s69
      %p75 = scmp.eq.s32.totalorder %s16, 0
      %p76 = por %p74, %p75
      %p77 = scmp.ne.s32.totalorder %s66, %s69
      %p78 = scmp.eq.s32.totalorder %s21, 3
      %p79 = por %p77, %p78
      %p80 = scmp.ne.s32.totalorder %s69, %s70
      %p81 = scmp.eq.s32.totalorder %s21, 0
      %p82 = por %p80, %p81
      %p83 = scmp.ne.s32.totalorder %s69, %s70
      %p84 = scmp.eq.s32.totalorder %s22, 3
      %p85 = por %p83, %p84
      %p87 = scmp.ne.s32.totalorder %s70, %s86
      %p88 = scmp.eq.s32.totalorder %s22, 0
      %p89 = por %p87, %p88
      %s91 = sadd.s32 %s90, 1
      %p94 = scmp.eq.s32.totalorder %s16, 3
      %p95 = scmp.ne.s32.totalorder %s90, %s92
      %p96 = scmp.eq.s32.totalorder %s16, 0
      %p97 = por %p95, %p96
      %p98 = scmp.ne.s32.totalorder %s90, %s92
      %p99 = scmp.eq.s32.totalorder %s21, 3
      %p100 = por %p98, %p99
      %p101 = scmp.ne.s32.totalorder %s92, %s93
      %p102 = scmp.eq.s32.totalorder %s21, 0
      %p103 = por %p101, %p102
      %p104 = scmp.ne.s32.totalorder %s92, %s93
      %p105 = scmp.eq.s32.totalorder %s22, 3
      %p106 = por %p104, %p105
      %p108 = scmp.ne.s32.totalorder %s93, %s107
      %p109 = scmp.eq.s32.totalorder %s22, 0
      %p110 = por %p108, %p109
      %s112 = sadd.s32 %s111, 1
      %p115 = scmp.eq.s32.totalorder %s16, 3
      %p116 = scmp.ne.s32.totalorder %s111, %s113
      %p117 = scmp.eq.s32.totalorder %s16, 0
      %p118 = por %p116, %p117
      %p119 = scmp.ne.s32.totalorder %s111, %s113
      %p120 = scmp.eq.s32.totalorder %s21, 3
      %p121 = por %p119, %p120
      %p122 = scmp.ne.s32.totalorder %s113, %s114
      %p123 = scmp.eq.s32.totalorder %s21, 0
      %p124 = por %p122, %p123
      %p125 = scmp.ne.s32.totalorder %s113, %s114
      %p126 = scmp.eq.s32.totalorder %s22, 3
      %p127 = por %p125, %p126
      %p129 = scmp.ne.s32.totalorder %s114, %s128
      %p130 = scmp.eq.s32.totalorder %s22, 0
      %p131 = por %p129, %p130
      %s133 = sadd.s32 %s132, 1
      %p136 = scmp.eq.s32.totalorder %s16, 3
      %p137 = scmp.ne.s32.totalorder %s132, %s134
      %p138 = scmp.eq.s32.totalorder %s16, 0
      %p139 = por %p137, %p138
      %p140 = scmp.ne.s32.totalorder %s132, %s134
      %p141 = scmp.eq.s32.totalorder %s21, 3
      %p142 = por %p140, %p141
      %p143 = scmp.ne.s32.totalorder %s134, %s135
      %p144 = scmp.eq.s32.totalorder %s21, 0
      %p145 = por %p143, %p144
      %p146 = scmp.ne.s32.totalorder %s134, %s135
      %p147 = scmp.eq.s32.totalorder %s22, 3
      %p148 = por %p146, %p147
      %p150 = scmp.ne.s32.totalorder %s135, %s149
      %p151 = scmp.eq.s32.totalorder %s22, 0
      %p152 = por %p150, %p151
      %s154 = sadd.s32 %s153, 1
      %p157 = scmp.eq.s32.totalorder %s16, 3
      %p158 = scmp.ne.s32.totalorder %s153, %s155
      %p159 = scmp.eq.s32.totalorder %s16, 0
      %p160 = por %p158, %p159
      %p161 = scmp.ne.s32.totalorder %s153, %s155
      %p162 = scmp.eq.s32.totalorder %s21, 3
      %p163 = por %p161, %p162
      %p164 = scmp.ne.s32.totalorder %s155, %s156
      %p165 = scmp.eq.s32.totalorder %s21, 0
      %p166 = por %p164, %p165
      %p167 = scmp.ne.s32.totalorder %s155, %s156
      %p168 = scmp.eq.s32.totalorder %s22, 3
      %p169 = por %p167, %p168
      %p171 = scmp.ne.s32.totalorder %s156, %s170
      %p172 = scmp.eq.s32.totalorder %s22, 0
      %p173 = por %p171, %p172
      %s175 = sadd.s32 %s174, 1
      %p178 = scmp.eq.s32.totalorder %s16, 3
      %p179 = scmp.ne.s32.totalorder %s174, %s176
      %p180 = scmp.eq.s32.totalorder %s16, 0
      %p181 = por %p179, %p180
      %p182 = scmp.ne.s32.totalorder %s174, %s176
      %p183 = scmp.eq.s32.totalorder %s21, 3
      %p184 = por %p182, %p183
      %p185 = scmp.ne.s32.totalorder %s176, %s177
      %p186 = scmp.eq.s32.totalorder %s21, 0
      %p187 = por %p185, %p186
      %p188 = scmp.ne.s32.totalorder %s176, %s177
      %p189 = scmp.eq.s32.totalorder %s22, 3
      %p190 = por %p188, %p189
      %p192 = scmp.ne.s32.totalorder %s177, %s191
      %p193 = scmp.eq.s32.totalorder %s22, 0
      %p194 = por %p192, %p193
      %s196 = sadd.s32 %s195, 1
      %p199 = scmp.eq.s32.totalorder %s16, 3
      %p200 = scmp.ne.s32.totalorder %s195, %s197
      %p201 = scmp.eq.s32.totalorder %s16, 0
      %p202 = por %p200, %p201
      %p203 = scmp.ne.s32.totalorder %s195, %s197
      %p204 = scmp.eq.s32.totalorder %s21, 3
      %p205 = por %p203, %p204
      %p206 = scmp.ne.s32.totalorder %s197, %s198
      %p207 = scmp.eq.s32.totalorder %s21, 0
      %p208 = por %p206, %p207
      %p209 = scmp.ne.s32.totalorder %s197, %s198
      %p210 = scmp.eq.s32.totalorder %s22, 3
      %p211 = por %p209, %p210
      %p213 = scmp.ne.s32.totalorder %s198, %s212
      %p214 = scmp.eq.s32.totalorder %s22, 0
      %p215 = por %p213, %p214
      %s216 = ssub.s32 %s23, %s35
      %s217 = ssub.s32 %s24, %s31
      %s218 = sor.u32 %s216, %s217
      %p219 = scmp.eq.s32.totalorder %s218, 0
      %s221 = sadd.s32 %s220, 1
      %s222 = scalar_select %p219, %s220, %s221
      %p225 = pneg %p219
      %p226 = scmp.eq.s32.totalorder %s16, 3
      %p227 = por %p225, %p226
      %p228 = scmp.ne.s32.totalorder %s220, %s223
      %p229 = scmp.eq.s32.totalorder %s16, 0
      %p230 = por %p228, %p229
      %p231 = scmp.ne.s32.totalorder %s220, %s223
      %p232 = scmp.eq.s32.totalorder %s21, 3
      %p233 = por %p231, %p232
      %p234 = scmp.ne.s32.totalorder %s223, %s224
      %p235 = scmp.eq.s32.totalorder %s21, 0
      %p236 = por %p234, %p235
      %p237 = scmp.ne.s32.totalorder %s223, %s224
      %p238 = scmp.eq.s32.totalorder %s22, 3
      %p239 = por %p237, %p238
      %p241 = scmp.ne.s32.totalorder %s224, %s240
      %p242 = scmp.eq.s32.totalorder %s22, 0
      %p243 = por %p241, %p242
      %p244 = scmp.le.s32.totalorder 1, %s16
      %p245 = scmp.lt.s32.totalorder %s16, 5
      %p246 = pnand %p244, %p245
      %p247 = pneg %p246
      // Predicated region
      $region9: #{transformer_decoder_forward.5} parent=5 // pred_check
        _
      $region10: #{transformer_decoder_forward.5} parent=5 // pred_check_branch
        %249 = sbr.rel (%p246) target = $region12
      $region11: #{transformer_decoder_forward.5} parent=5 // pred_region
        %s250 = ssub.s32 %s16, 1
        // Predicated region
        $region13: #{transformer_decoder_forward.5} parent=11 // pred_check
          %p251 = pneg %p103
        $region14: #{transformer_decoder_forward.5} parent=11 // pred_check_branch
          %253 = sbr.rel (%p251) target = $region16
        $region15: #{transformer_decoder_forward.5} parent=11 // pred_region
          _
        $region16: #{transformer_decoder_forward.5} parent=11 // pred_fallthru
          _
        // Predicated region
        $region17: #{transformer_decoder_forward.5} parent=11 // pred_check
          %p254 = pneg %p124
        $region18: #{transformer_decoder_forward.5} parent=11 // pred_check_branch
          %256 = sbr.rel (%p254) target = $region20
        $region19: #{transformer_decoder_forward.5} parent=11 // pred_region
          _
        $region20: #{transformer_decoder_forward.5} parent=11 // pred_fallthru
          _
        // Predicated region
        $region21: #{transformer_decoder_forward.5} parent=11 // pred_check
          %p257 = pneg %p145
        $region22: #{transformer_decoder_forward.5} parent=11 // pred_check_branch
          %259 = sbr.rel (%p257) target = $region24
        $region23: #{transformer_decoder_forward.5} parent=11 // pred_region
          _
        $region24: #{transformer_decoder_forward.5} parent=11 // pred_fallthru
          _
        // Predicated region
        $region25: #{transformer_decoder_forward.5} parent=11 // pred_check
          %p260 = pneg %p166
        $region26: #{transformer_decoder_forward.5} parent=11 // pred_check_branch
          %262 = sbr.rel (%p260) target = $region28
        $region27: #{transformer_decoder_forward.5} parent=11 // pred_region
          %s264 = ssub.s32 32, 32
          %265 = vsyncadd [#allocation4], %s264
          %s267 = sshll.u32 [#allocation3], 4
          %s268 = int_to_ptr.vmem [resolvable:$true] %s267
          %270 = dma.hbm_to_vmem [thread:$0]  %s5, 32, %s268, [#allocation4]
        $region28: #{transformer_decoder_forward.5} parent=11 // pred_fallthru
          _
        // Predicated region
        $region29: #{transformer_decoder_forward.5} parent=11 // pred_check
          %p271 = pneg %p187
        $region30: #{transformer_decoder_forward.5} parent=11 // pred_check_branch
          %273 = sbr.rel (%p271) target = $region32
        $region31: #{transformer_decoder_forward.5} parent=11 // pred_region
          _
        $region32: #{transformer_decoder_forward.5} parent=11 // pred_fallthru
          _
        // Predicated region
        $region33: #{transformer_decoder_forward.5} parent=11 // pred_check
          %p274 = pneg %p208
        $region34: #{transformer_decoder_forward.5} parent=11 // pred_check_branch
          %276 = sbr.rel (%p274) target = $region36
        $region35: #{transformer_decoder_forward.5} parent=11 // pred_region
          %s278 = ssub.s32 16, 16
          %279 = vsyncadd [#allocation6], %s278
          %s281 = sshll.u32 [#allocation5], 4
          %s282 = int_to_ptr.vmem [resolvable:$true] %s281
          %284 = dma.hbm_to_vmem [thread:$0]  %s7, 16, %s282, [#allocation6]
        $region36: #{transformer_decoder_forward.5} parent=11 // pred_fallthru
          _
      $region12: #{transformer_decoder_forward.5} parent=5 // pred_fallthru
        _
      %p285 = scmp.lt.s32.totalorder %s16, 4
      // Predicated region
      $region37: #{transformer_decoder_forward.5} parent=5 // pred_check
        %p286 = pneg %p285
      $region38: #{transformer_decoder_forward.5} parent=5 // pred_check_branch
        %288 = sbr.rel (%p286) target = $region40
      $region39: #{transformer_decoder_forward.5} parent=5 // pred_region
        // Predicated region
        $region41: #{transformer_decoder_forward.5} parent=39 // pred_check
          %p289 = pneg %p50
        $region42: #{transformer_decoder_forward.5} parent=39 // pred_check_branch
          %291 = sbr.rel (%p289) target = $region44
        $region43: #{transformer_decoder_forward.5} parent=39 // pred_region
          %p292 = scmp.lt.s32.totalorder %s23, 1
          %s293 = scalar_select %p292, %s23, 1
          %p294 = scmp.lt.s32.totalorder %s24, 1
          %s295 = scalar_select %p294, %s24, 1
          %s296 = smul.addr %s293, 2
          %s297 = sadd.s32 %s295, %s296
          %s298 = smul.addr %s297, 8
          %s299 = scalar_lea.vmem %s0, %s298
        $region44: #{transformer_decoder_forward.5} parent=39 // pred_fallthru
          _
        // Predicated region
        $region45: #{transformer_decoder_forward.5} parent=39 // pred_check
          %p300 = pneg %p76
        $region46: #{transformer_decoder_forward.5} parent=39 // pred_check_branch
          %302 = sbr.rel (%p300) target = $region48
        $region47: #{transformer_decoder_forward.5} parent=39 // pred_region
          %p303 = scmp.lt.s32.totalorder %s23, 1
          %s304 = scalar_select %p303, %s23, 1
          %s305 = smul.addr %s304, 2
          %s306 = smul.addr %s305, 8
          %s307 = scalar_lea.vmem %s1, %s306
        $region48: #{transformer_decoder_forward.5} parent=39 // pred_fallthru
          _
      $region40: #{transformer_decoder_forward.5} parent=5 // pred_fallthru
        _
      %p308 = scmp.le.s32.totalorder 1, %s16
      %p309 = scmp.lt.s32.totalorder %s16, 5
      %p310 = pnand %p308, %p309
      %p311 = pneg %p310
      // Predicated region
      $region49: #{transformer_decoder_forward.5} parent=5 // pred_check
        _
      $region50: #{transformer_decoder_forward.5} parent=5 // pred_check_branch
        %313 = sbr.rel (%p310) target = $region52
      $region51: #{transformer_decoder_forward.5} parent=5 // pred_region
        %s314 = ssub.s32 %s16, 1
        // Predicated region
        $region53: #{transformer_decoder_forward.5} parent=51 // pred_check
          %p315 = pneg %p166
        $region54: #{transformer_decoder_forward.5} parent=51 // pred_check_branch
          %317 = sbr.rel (%p315) target = $region56
        $region55: #{transformer_decoder_forward.5} parent=51 // pred_region
          %318 = dma.done [#allocation4], 32
        $region56: #{transformer_decoder_forward.5} parent=51 // pred_fallthru
          _
        // Predicated region
        $region57: #{transformer_decoder_forward.5} parent=51 // pred_check
          %p319 = pneg %p208
        $region58: #{transformer_decoder_forward.5} parent=51 // pred_check_branch
          %321 = sbr.rel (%p319) target = $region60
        $region59: #{transformer_decoder_forward.5} parent=51 // pred_region
          %322 = dma.done [#allocation6], 16
        $region60: #{transformer_decoder_forward.5} parent=51 // pred_fallthru
          _
        %p323 = scmp.lt.s32.totalorder %s25, 1
        %s324 = scalar_select %p323, %s25, 1
        %p325 = scmp.lt.s32.totalorder %s26, 1
        %s326 = scalar_select %p325, %s26, 1
        %s327 = smul.addr %s324, 2
        %s328 = sadd.s32 %s326, %s327
        %s329 = smul.addr %s328, 8
        %s330 = scalar_lea.vmem %s0, %s329
        %p331 = pneg %p56
        %p332 = pneg %p53
        %p333 = scmp.lt.s32.totalorder %s25, 1
        %s334 = scalar_select %p333, %s25, 1
        %s335 = smul.addr %s334, 2
        %s336 = smul.addr %s335, 8
        %s337 = scalar_lea.vmem %s1, %s336
        %p338 = pneg %p82
        %p339 = pneg %p79
        %p340 = pneg %p103
        %p341 = pneg %p100
        %p342 = pneg %p124
        %p343 = pneg %p121
        %p344 = pneg %p145
        %p345 = pneg %p142
        %p346 = pneg %p166
        %p347 = pneg %p163
        %p348 = pneg %p187
        %p349 = pneg %p184
        %p350 = pneg %p208
        %p351 = pneg %p205
        %p352 = pneg %p236
        %p353 = pneg %p233
        %p354 = scmp.lt.s32.totalorder %s25, 1
        %s355 = scalar_select %p354, %s25, 1
        %p356 = scmp.lt.s32.totalorder %s26, 1
        %s357 = scalar_select %p356, %s26, 1
        %s358 = smul.addr %s355, 2
        %s359 = sadd.s32 %s357, %s358
        %s360 = smul.addr %s359, 8
        %s361 = scalar_lea.vmem %s8, %s360
        %p362 = scmp.lt.s32.totalorder %s25, 1
        %s363 = scalar_select %p362, %s25, 1
        %p364 = scmp.lt.s32.totalorder %s26, 1
        %s365 = scalar_select %p364, %s26, 1
        %s366 = smul.addr %s363, 2
        %s367 = sadd.s32 %s365, %s366
        %s368 = smul.addr %s367, 8
        %s369 = scalar_lea.vmem %s0, %s368
        %p370 = scmp.lt.s32.totalorder %s25, 1
        %s371 = scalar_select %p370, %s25, 1
        %s372 = smul.addr %s371, 2
        %s373 = smul.addr %s372, 8
        %s374 = scalar_lea.vmem %s1, %s373
        %p375 = scmp.lt.s32.totalorder %s25, 1
        %s376 = scalar_select %p375, %s25, 1
        %p377 = scmp.lt.s32.totalorder %s26, 1
        %s378 = scalar_select %p377, %s26, 1
        %s379 = smul.addr %s376, 2
        %s380 = sadd.s32 %s378, %s379
        %s381 = smul.addr %s380, 8
        %s382 = scalar_lea.vmem %s8, %s381
        %v384 = vld [vmem:[%s369] sm:$0xff]
        %v385 = vpack.c.bf16 %v384, %v384
        %v386 = vld [vmem:[%s374] sm:$0xff]
        %v387 = vld [vmem:[%s374 + $0x8] sm:$0xff]
        %v388 = vpack.c.bf16 %v387, %v386
        %v389 = vld [vmem:[%s2] sm:$0xf]
        %v390 = vld [vmem:[%s2 + $0x4] sm:$0xf]
        %v391 = vld [vmem:[%s2 + $0x8] sm:$0xf]
        %v392 = vld [vmem:[%s2 + $0xc] sm:$0xf]
        %v393 = vld [vmem:[%s2 + $0x10] sm:$0xf]
        %v394 = vld [vmem:[%s2 + $0x14] sm:$0xf]
        %v395 = vld [vmem:[%s2 + $0x18] sm:$0xf]
        %v396 = vld [vmem:[%s2 + $0x1c] sm:$0xf]
        %v397 = vld [vmem:[%s2 + $0x20] sm:$0xf]
        %v398 = vld [vmem:[%s2 + $0x24] sm:$0xf]
        %v399 = vld [vmem:[%s2 + $0x28] sm:$0xf]
        %v400 = vld [vmem:[%s2 + $0x2c] sm:$0xf]
        %v401 = vld [vmem:[%s2 + $0x30] sm:$0xf]
        %v402 = vld [vmem:[%s2 + $0x34] sm:$0xf]
        %v403 = vld [vmem:[%s2 + $0x38] sm:$0xf]
        %v404 = vld [vmem:[%s2 + $0x3c] sm:$0xf]
        %v405 = vld [vmem:[%s3] sm:$0x1]
        %v407 = vlaneseq
        %v408 = vshrl.u32 %v407, 7
        %v409 = vsub.s32 0, %v408
        %v410 = vrot.slane %v405, %v409
        %v428 = vunpack.c.l.b16 %v389
        %v429 = vunpack.c.l.b16 %v390
        %v430 = vunpack.c.l.b16 %v391
        %v431 = vunpack.c.l.b16 %v392
        %v432 = vunpack.c.l.b16 %v393
        %v433 = vunpack.c.l.b16 %v394
        %v434 = vunpack.c.l.b16 %v395
        %v435 = vunpack.c.l.b16 %v396
        %v436 = vunpack.c.l.b16 %v397
        %v437 = vunpack.c.l.b16 %v398
        %v438 = vunpack.c.l.b16 %v399
        %v439 = vunpack.c.l.b16 %v400
        %v440 = vunpack.c.l.b16 %v401
        %v441 = vunpack.c.l.b16 %v402
        %v442 = vunpack.c.l.b16 %v403
        %v443 = vunpack.c.l.b16 %v404
        %v444 = vpack.c.b16 %v429, %v428
        %v445 = vpack.c.b16 %v431, %v430
        %v446 = vpack.c.b16 %v433, %v432
        %v447 = vpack.c.b16 %v435, %v434
        %v448 = vpack.c.b16 %v437, %v436
        %v449 = vpack.c.b16 %v439, %v438
        %v450 = vpack.c.b16 %v441, %v440
        %v451 = vpack.c.b16 %v443, %v442
        %460 = vmatprep.subr.bf16.mxu0 0
        %461 = vmatpush1.bf16.msra.mxu0 %v444
        %462 = vmatprep.subr.bf16.mxu0 0
        %463 = vmatpush1.bf16.msra.mxu0 %v445
        %464 = vmatprep.subr.bf16.mxu0 0
        %465 = vmatpush1.bf16.msra.mxu0 %v446
        %466 = vmatprep.subr.bf16.mxu0 0
        %467 = vmatpush1.bf16.msra.mxu0 %v447
        %468 = vmatprep.subr.bf16.mxu0 0
        %469 = vmatpush1.bf16.msra.mxu0 %v448
        %470 = vmatprep.subr.bf16.mxu0 0
        %471 = vmatpush1.bf16.msra.mxu0 %v449
        %472 = vmatprep.subr.bf16.mxu0 0
        %473 = vmatpush1.bf16.msra.mxu0 %v450
        %474 = vmatprep.subr.bf16.mxu0 0
        %475 = vmatpush1.bf16.msra.mxu0 %v451
        %476 = vmatprep.subr.bf16.mxu0 0
        %477 = vmatpush1.bf16.msra.mxu0 0
        %478 = vmatprep.subr.bf16.mxu0 0
        %479 = vmatpush1.bf16.msra.mxu0 0
        %480 = vmatprep.subr.bf16.mxu0 0
        %481 = vmatpush1.bf16.msra.mxu0 0
        %482 = vmatprep.subr.bf16.mxu0 0
        %483 = vmatpush1.bf16.msra.mxu0 0
        %484 = vmatprep.subr.bf16.mxu0 0
        %485 = vmatpush1.bf16.msra.mxu0 0
        %486 = vmatprep.subr.bf16.mxu0 0
        %487 = vmatpush1.bf16.msra.mxu0 0
        %488 = vmatprep.subr.bf16.mxu0 0
        %489 = vmatpush1.bf16.msra.mxu0 0
        %490 = vmatprep.subr.bf16.mxu0 0
        %491 = vmatpush1.bf16.msra.mxu0 0
        %492 = vmatprep.mubr.bf16.mxu0 0
        %493 = vmatmul.mubr.bf16.gmra.mrb[0].mxu0 %v385
        %v494 = vpop.f32.mrb[0].mxu0
        %v495 = vadd.f32 %v410, %v494
        %v496 = vpop.f32.mrb[0].mxu0
        %v497 = vpop.f32.mrb[0].mxu0
        %v498 = vpop.f32.mrb[0].mxu0
        %499 = vdwg.mxu0
        %v500 = vmul.f32 %v495, 0.17677669
        %v501 = vld [vmem:[%s4] sm:$0xff]
        %v502 = vld [vmem:[%s4 + $0x8] sm:$0xff]
        %v503 = vld [vmem:[%s4 + $0x10] sm:$0xff]
        %v504 = vld [vmem:[%s4 + $0x18] sm:$0xff]
        %v505 = vld [vmem:[%s4 + $0x20] sm:$0xff]
        %v506 = vld [vmem:[%s4 + $0x28] sm:$0xff]
        %v507 = vld [vmem:[%s4 + $0x30] sm:$0xff]
        %v508 = vld [vmem:[%s4 + $0x38] sm:$0xff]
        %v509 = vld [vmem:[%s4 + $0x40] sm:$0xff]
        %v510 = vld [vmem:[%s4 + $0x48] sm:$0xff]
        %v511 = vld [vmem:[%s4 + $0x50] sm:$0xff]
        %v512 = vld [vmem:[%s4 + $0x58] sm:$0xff]
        %v513 = vld [vmem:[%s4 + $0x60] sm:$0xff]
        %v514 = vld [vmem:[%s4 + $0x68] sm:$0xff]
        %v515 = vld [vmem:[%s4 + $0x70] sm:$0xff]
        %v516 = vld [vmem:[%s4 + $0x78] sm:$0xff]
        %v517 = vld [vmem:[#allocation3] sm:$0x3]
        %v519 = vlaneseq
        %v520 = vshrl.u32 %v519, 7
        %v521 = vsub.s32 0, %v520
        %v522 = vrot.slane %v517, %v521
        %v523 = vlaneseq
        %v524 = vshrl.u32 %v523, 7
        %v525 = vsub.s32 1, %v524
        %v526 = vrot.slane %v517, %v525
        %v545 = vunpack.c.l.b16 %v501
        %v546 = vunpack.c.h.b16 %v501
        %v547 = vunpack.c.l.b16 %v502
        %v548 = vunpack.c.h.b16 %v502
        %v549 = vunpack.c.l.b16 %v503
        %v550 = vunpack.c.h.b16 %v503
        %v551 = vunpack.c.l.b16 %v504
        %v552 = vunpack.c.h.b16 %v504
        %v553 = vunpack.c.l.b16 %v505
        %v554 = vunpack.c.h.b16 %v505
        %v555 = vunpack.c.l.b16 %v506
        %v556 = vunpack.c.h.b16 %v506
        %v557 = vunpack.c.l.b16 %v507
        %v558 = vunpack.c.h.b16 %v507
        %v559 = vunpack.c.l.b16 %v508
        %v560 = vunpack.c.h.b16 %v508
        %v561 = vunpack.c.l.b16 %v509
        %v562 = vunpack.c.h.b16 %v509
        %v563 = vunpack.c.l.b16 %v510
        %v564 = vunpack.c.h.b16 %v510
        %v565 = vunpack.c.l.b16 %v511
        %v566 = vunpack.c.h.b16 %v511
        %v567 = vunpack.c.l.b16 %v512
        %v568 = vunpack.c.h.b16 %v512
        %v569 = vunpack.c.l.b16 %v513
        %v570 = vunpack.c.h.b16 %v513
        %v571 = vunpack.c.l.b16 %v514
        %v572 = vunpack.c.h.b16 %v514
        %v573 = vunpack.c.l.b16 %v515
        %v574 = vunpack.c.h.b16 %v515
        %v575 = vunpack.c.l.b16 %v516
        %v576 = vunpack.c.h.b16 %v516
        %v577 = vpack.c.b16 %v547, %v545
        %v578 = vpack.c.b16 %v548, %v546
        %v579 = vpack.c.b16 %v551, %v549
        %v580 = vpack.c.b16 %v552, %v550
        %v581 = vpack.c.b16 %v555, %v553
        %v582 = vpack.c.b16 %v556, %v554
        %v583 = vpack.c.b16 %v559, %v557
        %v584 = vpack.c.b16 %v560, %v558
        %v585 = vpack.c.b16 %v563, %v561
        %v586 = vpack.c.b16 %v564, %v562
        %v587 = vpack.c.b16 %v567, %v565
        %v588 = vpack.c.b16 %v568, %v566
        %v589 = vpack.c.b16 %v571, %v569
        %v590 = vpack.c.b16 %v572, %v570
        %v591 = vpack.c.b16 %v575, %v573
        %v592 = vpack.c.b16 %v576, %v574
        %609 = vmatprep.subr.bf16.mxu0 %v578
        %610 = vmatpush1.bf16.msra.mxu0 %v577
        %611 = vmatprep.subr.bf16.mxu0 %v580
        %612 = vmatpush1.bf16.msra.mxu0 %v579
        %613 = vmatprep.subr.bf16.mxu0 %v582
        %614 = vmatpush1.bf16.msra.mxu0 %v581
        %615 = vmatprep.subr.bf16.mxu0 %v584
        %616 = vmatpush1.bf16.msra.mxu0 %v583
        %617 = vmatprep.subr.bf16.mxu0 %v586
        %618 = vmatpush1.bf16.msra.mxu0 %v585
        %619 = vmatprep.subr.bf16.mxu0 %v588
        %620 = vmatpush1.bf16.msra.mxu0 %v587
        %621 = vmatprep.subr.bf16.mxu0 %v590
        %622 = vmatpush1.bf16.msra.mxu0 %v589
        %623 = vmatprep.subr.bf16.mxu0 %v592
        %624 = vmatpush1.bf16.msra.mxu0 %v591
        %625 = vmatprep.subr.bf16.mxu0 0
        %626 = vmatpush1.bf16.msra.mxu0 0
        %627 = vmatprep.subr.bf16.mxu0 0
        %628 = vmatpush1.bf16.msra.mxu0 0
        %629 = vmatprep.subr.bf16.mxu0 0
        %630 = vmatpush1.bf16.msra.mxu0 0
        %631 = vmatprep.subr.bf16.mxu0 0
        %632 = vmatpush1.bf16.msra.mxu0 0
        %633 = vmatprep.subr.bf16.mxu0 0
        %634 = vmatpush1.bf16.msra.mxu0 0
        %635 = vmatprep.subr.bf16.mxu0 0
        %636 = vmatpush1.bf16.msra.mxu0 0
        %637 = vmatprep.subr.bf16.mxu0 0
        %638 = vmatpush1.bf16.msra.mxu0 0
        %639 = vmatprep.subr.bf16.mxu0 0
        %640 = vmatpush1.bf16.msra.mxu0 0
        %641 = vmatprep.mubr.bf16.mxu0 0
        %642 = vmatmul.mubr.bf16.gmra.mrb[0].mxu0 %v388
        %v643 = vpop.f32.mrb[0].mxu0
        %v644 = vadd.f32 %v522, %v643
        %v645 = vpop.f32.mrb[0].mxu0
        %v646 = vadd.f32 %v526, %v645
        %v647 = vpop.f32.mrb[0].mxu0
        %v648 = vadd.f32 %v522, %v647
        %v649 = vpop.f32.mrb[0].mxu0
        %v650 = vadd.f32 %v526, %v649
        %651 = vdwg.mxu0
        %v652 = vpack.c.bf16 %v500, %v500
        %v653 = vpack.c.bf16 %v648, %v644
        %v654 = vpack.c.bf16 %v650, %v646
        %s655 = smul.u32 %s26, 8
        %v656 = vlaneseq
        %v657 = vshrl.u32 %v656, 7
        %v658 = vstv %s655
        %v659 = vadd.s32 %v658, %v657
        %v660 = vlaneseq
        %v661 = vand.u32 %v660, 127
        %vm662 = vcmp.ge.s32.totalorder %v659, %v661
        %v663 = vsel %vm662, 0.0, -1e+09
        %vm664 = vcmask 261120
        %v666 = vsel %vm664, %v652, 0
        %v669 = vsel %vm664, %v653, 0
        %671 = vmatprep.subr.bf16.mxu0 0
        %672 = vmatpush1.bf16.xpose.msra.mxu0 %v669
        %673 = vmatprep.subr.bf16.mxu0 0
        %674 = vmatpush1.bf16.xpose.msra.mxu0 0
        %675 = vmatprep.subr.bf16.mxu0 0
        %676 = vmatpush1.bf16.xpose.msra.mxu0 0
        %677 = vmatprep.subr.bf16.mxu0 0
        %678 = vmatpush1.bf16.xpose.msra.mxu0 0
        %679 = vmatprep.subr.bf16.mxu0 0
        %680 = vmatpush1.bf16.xpose.msra.mxu0 0
        %681 = vmatprep.subr.bf16.mxu0 0
        %682 = vmatpush1.bf16.xpose.msra.mxu0 0
        %683 = vmatprep.subr.bf16.mxu0 0
        %684 = vmatpush1.bf16.xpose.msra.mxu0 0
        %685 = vmatprep.subr.bf16.mxu0 0
        %686 = vmatpush1.bf16.xpose.msra.mxu0 0
        %687 = vmatprep.subr.bf16.mxu0 0
        %688 = vmatpush1.bf16.xpose.msra.mxu0 0
        %689 = vmatprep.subr.bf16.mxu0 0
        %690 = vmatpush1.bf16.xpose.msra.mxu0 0
        %691 = vmatprep.subr.bf16.mxu0 0
        %692 = vmatpush1.bf16.xpose.msra.mxu0 0
        %693 = vmatprep.subr.bf16.mxu0 0
        %694 = vmatpush1.bf16.xpose.msra.mxu0 0
        %695 = vmatprep.subr.bf16.mxu0 0
        %696 = vmatpush1.bf16.xpose.msra.mxu0 0
        %697 = vmatprep.subr.bf16.mxu0 0
        %698 = vmatpush1.bf16.xpose.msra.mxu0 0
        %699 = vmatprep.subr.bf16.mxu0 0
        %700 = vmatpush1.bf16.xpose.msra.mxu0 0
        %701 = vmatprep.subr.bf16.mxu0 0
        %702 = vmatpush1.bf16.xpose.msra.mxu0 0
        %703 = vmatprep.mubr.bf16.mxu0 0
        %704 = vmatmul.mubr.bf16.gmra.mrb[0].mxu0 %v666
        %v705 = vpop.f32.mrb[0].mxu0
        %v706 = vadd.f32 %v663, %v705
        %v707 = vpop.f32.mrb[0].mxu0
        %v708 = vpop.f32.mrb[0].mxu0
        %v709 = vpop.f32.mrb[0].mxu0
        %710 = vdwg.mxu0
        %vm711 = vcmask 130048
        %v712 = vsel %vm711, %v706, -inf
        %713 = vmax.xlane.f32.xlu0 %v712
        %v714 = vpop.xlane.xlu0 %713
        %v715 = vsub.f32 %v706, %v714
        %v716 = vmul.f32 %v715, 1.442695
        %v717 = vpow.pop %v716
        %v718 = vsel %vm711, %v717, 0.0
        %719 = vadd.xlane.f32.xlu0 %v718
        %v720 = vpop.xlane.xlu0 %719
        %v721 = vrcp.pop %v720
        %v722 = vmul.f32 %v717, %v721
        %v723 = vpack.c.bf16 %v722, %v722
        %v725 = vsel %vm711, %v723, 0
        %727 = vmatprep.subr.bf16.mxu0 0
        %728 = vmatpush1.bf16.msra.mxu0 %v654
        %729 = vmatprep.subr.bf16.mxu0 0
        %730 = vmatpush1.bf16.msra.mxu0 0
        %731 = vmatprep.subr.bf16.mxu0 0
        %732 = vmatpush1.bf16.msra.mxu0 0
        %733 = vmatprep.subr.bf16.mxu0 0
        %734 = vmatpush1.bf16.msra.mxu0 0
        %735 = vmatprep.subr.bf16.mxu0 0
        %736 = vmatpush1.bf16.msra.mxu0 0
        %737 = vmatprep.subr.bf16.mxu0 0
        %738 = vmatpush1.bf16.msra.mxu0 0
        %739 = vmatprep.subr.bf16.mxu0 0
        %740 = vmatpush1.bf16.msra.mxu0 0
        %741 = vmatprep.subr.bf16.mxu0 0
        %742 = vmatpush1.bf16.msra.mxu0 0
        %743 = vmatprep.subr.bf16.mxu0 0
        %744 = vmatpush1.bf16.msra.mxu0 0
        %745 = vmatprep.subr.bf16.mxu0 0
        %746 = vmatpush1.bf16.msra.mxu0 0
        %747 = vmatprep.subr.bf16.mxu0 0
        %748 = vmatpush1.bf16.msra.mxu0 0
        %749 = vmatprep.subr.bf16.mxu0 0
        %750 = vmatpush1.bf16.msra.mxu0 0
        %751 = vmatprep.subr.bf16.mxu0 0
        %752 = vmatpush1.bf16.msra.mxu0 0
        %753 = vmatprep.subr.bf16.mxu0 0
        %754 = vmatpush1.bf16.msra.mxu0 0
        %755 = vmatprep.subr.bf16.mxu0 0
        %756 = vmatpush1.bf16.msra.mxu0 0
        %757 = vmatprep.subr.bf16.mxu0 0
        %758 = vmatpush1.bf16.msra.mxu0 0
        %759 = vmatprep.mubr.bf16.mxu0 0
        %760 = vmatmul.mubr.bf16.gmra.mrb[0].mxu0 %v725
        %v761 = vpop.f32.mrb[0].mxu0
        %v762 = vadd.f32 0.0, %v761
        %v763 = vpop.f32.mrb[0].mxu0
        %v764 = vpop.f32.mrb[0].mxu0
        %v765 = vpop.f32.mrb[0].mxu0
        %766 = vdwg.mxu0
        %767 = vst.msk [vmem:[#allocation2] sm:$0xff] %vm664, %v762
        %769 = vrot.lane.b32.xlu0 %v652, 96
        %v770 = vpop.permute.xlu0 %769
        %772 = vrot.lane.b32.xlu0 %v653, 96
        %v773 = vpop.permute.xlu0 %772
        %v775 = vsel %vm664, %v770, 0
        %v778 = vsel %vm664, %v773, 0
        %780 = vmatprep.subr.bf16.mxu0 0
        %781 = vmatpush1.bf16.xpose.msra.mxu0 %v778
        %782 = vmatprep.subr.bf16.mxu0 0
        %783 = vmatpush1.bf16.xpose.msra.mxu0 0
        %784 = vmatprep.subr.bf16.mxu0 0
        %785 = vmatpush1.bf16.xpose.msra.mxu0 0
        %786 = vmatprep.subr.bf16.mxu0 0
        %787 = vmatpush1.bf16.xpose.msra.mxu0 0
        %788 = vmatprep.subr.bf16.mxu0 0
        %789 = vmatpush1.bf16.xpose.msra.mxu0 0
        %790 = vmatprep.subr.bf16.mxu0 0
        %791 = vmatpush1.bf16.xpose.msra.mxu0 0
        %792 = vmatprep.subr.bf16.mxu0 0
        %793 = vmatpush1.bf16.xpose.msra.mxu0 0
        %794 = vmatprep.subr.bf16.mxu0 0
        %795 = vmatpush1.bf16.xpose.msra.mxu0 0
        %796 = vmatprep.subr.bf16.mxu0 0
        %797 = vmatpush1.bf16.xpose.msra.mxu0 0
        %798 = vmatprep.subr.bf16.mxu0 0
        %799 = vmatpush1.bf16.xpose.msra.mxu0 0
        %800 = vmatprep.subr.bf16.mxu0 0
        %801 = vmatpush1.bf16.xpose.msra.mxu0 0
        %802 = vmatprep.subr.bf16.mxu0 0
        %803 = vmatpush1.bf16.xpose.msra.mxu0 0
        %804 = vmatprep.subr.bf16.mxu0 0
        %805 = vmatpush1.bf16.xpose.msra.mxu0 0
        %806 = vmatprep.subr.bf16.mxu0 0
        %807 = vmatpush1.bf16.xpose.msra.mxu0 0
        %808 = vmatprep.subr.bf16.mxu0 0
        %809 = vmatpush1.bf16.xpose.msra.mxu0 0
        %810 = vmatprep.subr.bf16.mxu0 0
        %811 = vmatpush1.bf16.xpose.msra.mxu0 0
        %812 = vmatprep.mubr.bf16.mxu0 0
        %813 = vmatmul.mubr.bf16.gmra.mrb[0].mxu0 %v775
        %v814 = vpop.f32.mrb[0].mxu0
        %v815 = vadd.f32 %v663, %v814
        %v816 = vpop.f32.mrb[0].mxu0
        %v817 = vpop.f32.mrb[0].mxu0
        %v818 = vpop.f32.mrb[0].mxu0
        %819 = vdwg.mxu0
        %v820 = vsel %vm711, %v815, -inf
        %821 = vmax.xlane.f32.xlu0 %v820
        %v822 = vpop.xlane.xlu0 %821
        %v823 = vsub.f32 %v815, %v822
        %v824 = vmul.f32 %v823, 1.442695
        %v825 = vpow.pop %v824
        %v826 = vsel %vm711, %v825, 0.0
        %827 = vadd.xlane.f32.xlu0 %v826
        %v828 = vpop.xlane.xlu0 %827
        %v829 = vrcp.pop %v828
        %v830 = vmul.f32 %v825, %v829
        %v831 = vpack.c.bf16 %v830, %v830
        %833 = vrot.lane.b32.xlu0 %v654, 96
        %v834 = vpop.permute.xlu0 %833
        %v837 = vsel %vm711, %v831, 0
        %839 = vmatprep.subr.bf16.mxu0 0
        %840 = vmatpush1.bf16.msra.mxu0 %v834
        %841 = vmatprep.subr.bf16.mxu0 0
        %842 = vmatpush1.bf16.msra.mxu0 0
        %843 = vmatprep.subr.bf16.mxu0 0
        %844 = vmatpush1.bf16.msra.mxu0 0
        %845 = vmatprep.subr.bf16.mxu0 0
        %846 = vmatpush1.bf16.msra.mxu0 0
        %847 = vmatprep.subr.bf16.mxu0 0
        %848 = vmatpush1.bf16.msra.mxu0 0
        %849 = vmatprep.subr.bf16.mxu0 0
        %850 = vmatpush1.bf16.msra.mxu0 0
        %851 = vmatprep.subr.bf16.mxu0 0
        %852 = vmatpush1.bf16.msra.mxu0 0
        %853 = vmatprep.subr.bf16.mxu0 0
        %854 = vmatpush1.bf16.msra.mxu0 0
        %855 = vmatprep.subr.bf16.mxu0 0
        %856 = vmatpush1.bf16.msra.mxu0 0
        %857 = vmatprep.subr.bf16.mxu0 0
        %858 = vmatpush1.bf16.msra.mxu0 0
        %859 = vmatprep.subr.bf16.mxu0 0
        %860 = vmatpush1.bf16.msra.mxu0 0
        %861 = vmatprep.subr.bf16.mxu0 0
        %862 = vmatpush1.bf16.msra.mxu0 0
        %863 = vmatprep.subr.bf16.mxu0 0
        %864 = vmatpush1.bf16.msra.mxu0 0
        %865 = vmatprep.subr.bf16.mxu0 0
        %866 = vmatpush1.bf16.msra.mxu0 0
        %867 = vmatprep.subr.bf16.mxu0 0
        %868 = vmatpush1.bf16.msra.mxu0 0
        %869 = vmatprep.subr.bf16.mxu0 0
        %870 = vmatpush1.bf16.msra.mxu0 0
        %871 = vmatprep.mubr.bf16.mxu0 0
        %872 = vmatmul.mubr.bf16.gmra.mrb[0].mxu0 %v837
        %v873 = vpop.f32.mrb[0].mxu0
        %v874 = vadd.f32 0.0, %v873
        %v875 = vpop.f32.mrb[0].mxu0
        %v876 = vpop.f32.mrb[0].mxu0
        %v877 = vpop.f32.mrb[0].mxu0
        %878 = vdwg.mxu0
        %880 = vrot.lane.b32.xlu0 %v874, 32
        %v881 = vpop.permute.xlu0 %880
        %vm883 = vcmask 523520
        %884 = vst.msk [vmem:[#allocation2] sm:$0xff] %vm883, %v881
        %885 = vrot.lane.b32.xlu0 %v652, 64
        %v886 = vpop.permute.xlu0 %885
        %887 = vrot.lane.b32.xlu0 %v653, 64
        %v888 = vpop.permute.xlu0 %887
        %v890 = vsel %vm664, %v886, 0
        %v893 = vsel %vm664, %v888, 0
        %895 = vmatprep.subr.bf16.mxu0 0
        %896 = vmatpush1.bf16.xpose.msra.mxu0 %v893
        %897 = vmatprep.subr.bf16.mxu0 0
        %898 = vmatpush1.bf16.xpose.msra.mxu0 0
        %899 = vmatprep.subr.bf16.mxu0 0
        %900 = vmatpush1.bf16.xpose.msra.mxu0 0
        %901 = vmatprep.subr.bf16.mxu0 0
        %902 = vmatpush1.bf16.xpose.msra.mxu0 0
        %903 = vmatprep.subr.bf16.mxu0 0
        %904 = vmatpush1.bf16.xpose.msra.mxu0 0
        %905 = vmatprep.subr.bf16.mxu0 0
        %906 = vmatpush1.bf16.xpose.msra.mxu0 0
        %907 = vmatprep.subr.bf16.mxu0 0
        %908 = vmatpush1.bf16.xpose.msra.mxu0 0
        %909 = vmatprep.subr.bf16.mxu0 0
        %910 = vmatpush1.bf16.xpose.msra.mxu0 0
        %911 = vmatprep.subr.bf16.mxu0 0
        %912 = vmatpush1.bf16.xpose.msra.mxu0 0
        %913 = vmatprep.subr.bf16.mxu0 0
        %914 = vmatpush1.bf16.xpose.msra.mxu0 0
        %915 = vmatprep.subr.bf16.mxu0 0
        %916 = vmatpush1.bf16.xpose.msra.mxu0 0
        %917 = vmatprep.subr.bf16.mxu0 0
        %918 = vmatpush1.bf16.xpose.msra.mxu0 0
        %919 = vmatprep.subr.bf16.mxu0 0
        %920 = vmatpush1.bf16.xpose.msra.mxu0 0
        %921 = vmatprep.subr.bf16.mxu0 0
        %922 = vmatpush1.bf16.xpose.msra.mxu0 0
        %923 = vmatprep.subr.bf16.mxu0 0
        %924 = vmatpush1.bf16.xpose.msra.mxu0 0
        %925 = vmatprep.subr.bf16.mxu0 0
        %926 = vmatpush1.bf16.xpose.msra.mxu0 0
        %927 = vmatprep.mubr.bf16.mxu0 0
        %928 = vmatmul.mubr.bf16.gmra.mrb[0].mxu0 %v890
        %v929 = vpop.f32.mrb[0].mxu0
        %v930 = vadd.f32 %v663, %v929
        %v931 = vpop.f32.mrb[0].mxu0
        %v932 = vpop.f32.mrb[0].mxu0
        %v933 = vpop.f32.mrb[0].mxu0
        %934 = vdwg.mxu0
        %v935 = vsel %vm711, %v930, -inf
        %936 = vmax.xlane.f32.xlu0 %v935
        %v937 = vpop.xlane.xlu0 %936
        %v938 = vsub.f32 %v930, %v937
        %v939 = vmul.f32 %v938, 1.442695
        %v940 = vpow.pop %v939
        %v941 = vsel %vm711, %v940, 0.0
        %942 = vadd.xlane.f32.xlu0 %v941
        %v943 = vpop.xlane.xlu0 %942
        %v944 = vrcp.pop %v943
        %v945 = vmul.f32 %v940, %v944
        %v946 = vpack.c.bf16 %v945, %v945
        %947 = vrot.lane.b32.xlu0 %v654, 64
        %v948 = vpop.permute.xlu0 %947
        %v951 = vsel %vm711, %v946, 0
        %953 = vmatprep.subr.bf16.mxu0 0
        %954 = vmatpush1.bf16.msra.mxu0 %v948
        %955 = vmatprep.subr.bf16.mxu0 0
        %956 = vmatpush1.bf16.msra.mxu0 0
        %957 = vmatprep.subr.bf16.mxu0 0
        %958 = vmatpush1.bf16.msra.mxu0 0
        %959 = vmatprep.subr.bf16.mxu0 0
        %960 = vmatpush1.bf16.msra.mxu0 0
        %961 = vmatprep.subr.bf16.mxu0 0
        %962 = vmatpush1.bf16.msra.mxu0 0
        %963 = vmatprep.subr.bf16.mxu0 0
        %964 = vmatpush1.bf16.msra.mxu0 0
        %965 = vmatprep.subr.bf16.mxu0 0
        %966 = vmatpush1.bf16.msra.mxu0 0
        %967 = vmatprep.subr.bf16.mxu0 0
        %968 = vmatpush1.bf16.msra.mxu0 0
        %969 = vmatprep.subr.bf16.mxu0 0
        %970 = vmatpush1.bf16.msra.mxu0 0
        %971 = vmatprep.subr.bf16.mxu0 0
        %972 = vmatpush1.bf16.msra.mxu0 0
        %973 = vmatprep.subr.bf16.mxu0 0
        %974 = vmatpush1.bf16.msra.mxu0 0
        %975 = vmatprep.subr.bf16.mxu0 0
        %976 = vmatpush1.bf16.msra.mxu0 0
        %977 = vmatprep.subr.bf16.mxu0 0
        %978 = vmatpush1.bf16.msra.mxu0 0
        %979 = vmatprep.subr.bf16.mxu0 0
        %980 = vmatpush1.bf16.msra.mxu0 0
        %981 = vmatprep.subr.bf16.mxu0 0
        %982 = vmatpush1.bf16.msra.mxu0 0
        %983 = vmatprep.subr.bf16.mxu0 0
        %984 = vmatpush1.bf16.msra.mxu0 0
        %985 = vmatprep.mubr.bf16.mxu0 0
        %986 = vmatmul.mubr.bf16.gmra.mrb[0].mxu0 %v951
        %v987 = vpop.f32.mrb[0].mxu0
        %v988 = vadd.f32 0.0, %v987
        %v989 = vpop.f32.mrb[0].mxu0
        %v990 = vpop.f32.mrb[0].mxu0
        %v991 = vpop.f32.mrb[0].mxu0
        %992 = vdwg.mxu0
        %994 = vrot.lane.b32.xlu0 %v988, 64
        %v995 = vpop.permute.xlu0 %994
        %vm997 = vcmask 785920
        %998 = vst.msk [vmem:[#allocation2] sm:$0xff] %vm997, %v995
        %999 = vrot.lane.b32.xlu0 %v652, 32
        %v1000 = vpop.permute.xlu0 %999
        %1001 = vrot.lane.b32.xlu0 %v653, 32
        %v1002 = vpop.permute.xlu0 %1001
        %v1004 = vsel %vm664, %v1000, 0
        %v1007 = vsel %vm664, %v1002, 0
        %1009 = vmatprep.subr.bf16.mxu0 0
        %1010 = vmatpush1.bf16.xpose.msra.mxu0 %v1007
        %1011 = vmatprep.subr.bf16.mxu0 0
        %1012 = vmatpush1.bf16.xpose.msra.mxu0 0
        %1013 = vmatprep.subr.bf16.mxu0 0
        %1014 = vmatpush1.bf16.xpose.msra.mxu0 0
        %1015 = vmatprep.subr.bf16.mxu0 0
        %1016 = vmatpush1.bf16.xpose.msra.mxu0 0
        %1017 = vmatprep.subr.bf16.mxu0 0
        %1018 = vmatpush1.bf16.xpose.msra.mxu0 0
        %1019 = vmatprep.subr.bf16.mxu0 0
        %1020 = vmatpush1.bf16.xpose.msra.mxu0 0
        %1021 = vmatprep.subr.bf16.mxu0 0
        %1022 = vmatpush1.bf16.xpose.msra.mxu0 0
        %1023 = vmatprep.subr.bf16.mxu0 0
        %1024 = vmatpush1.bf16.xpose.msra.mxu0 0
        %1025 = vmatprep.subr.bf16.mxu0 0
        %1026 = vmatpush1.bf16.xpose.msra.mxu0 0
        %1027 = vmatprep.subr.bf16.mxu0 0
        %1028 = vmatpush1.bf16.xpose.msra.mxu0 0
        %1029 = vmatprep.subr.bf16.mxu0 0
        %1030 = vmatpush1.bf16.xpose.msra.mxu0 0
        %1031 = vmatprep.subr.bf16.mxu0 0
        %1032 = vmatpush1.bf16.xpose.msra.mxu0 0
        %1033 = vmatprep.subr.bf16.mxu0 0
        %1034 = vmatpush1.bf16.xpose.msra.mxu0 0
        %1035 = vmatprep.subr.bf16.mxu0 0
        %1036 = vmatpush1.bf16.xpose.msra.mxu0 0
        %1037 = vmatprep.subr.bf16.mxu0 0
        %1038 = vmatpush1.bf16.xpose.msra.mxu0 0
        %1039 = vmatprep.subr.bf16.mxu0 0
        %1040 = vmatpush1.bf16.xpose.msra.mxu0 0
        %1041 = vmatprep.mubr.bf16.mxu0 0
        %1042 = vmatmul.mubr.bf16.gmra.mrb[0].mxu0 %v1004
        %v1043 = vpop.f32.mrb[0].mxu0
        %v1044 = vadd.f32 %v663, %v1043
        %v1045 = vpop.f32.mrb[0].mxu0
        %v1046 = vpop.f32.mrb[0].mxu0
        %v1047 = vpop.f32.mrb[0].mxu0
        %1048 = vdwg.mxu0
        %v1049 = vsel %vm711, %v1044, -inf
        %1050 = vmax.xlane.f32.xlu0 %v1049
        %v1051 = vpop.xlane.xlu0 %1050
        %v1052 = vsub.f32 %v1044, %v1051
        %v1053 = vmul.f32 %v1052, 1.442695
        %v1054 = vpow.pop %v1053
        %v1055 = vsel %vm711, %v1054, 0.0
        %1056 = vadd.xlane.f32.xlu0 %v1055
        %v1057 = vpop.xlane.xlu0 %1056
        %v1058 = vrcp.pop %v1057
        %v1059 = vmul.f32 %v1054, %v1058
        %v1060 = vpack.c.bf16 %v1059, %v1059
        %1061 = vrot.lane.b32.xlu0 %v654, 32
        %v1062 = vpop.permute.xlu0 %1061
        %v1065 = vsel %vm711, %v1060, 0
        %1067 = vmatprep.subr.bf16.mxu0 0
        %1068 = vmatpush1.bf16.msra.mxu0 %v1062
        %1069 = vmatprep.subr.bf16.mxu0 0
        %1070 = vmatpush1.bf16.msra.mxu0 0
        %1071 = vmatprep.subr.bf16.mxu0 0
        %1072 = vmatpush1.bf16.msra.mxu0 0
        %1073 = vmatprep.subr.bf16.mxu0 0
        %1074 = vmatpush1.bf16.msra.mxu0 0
        %1075 = vmatprep.subr.bf16.mxu0 0
        %1076 = vmatpush1.bf16.msra.mxu0 0
        %1077 = vmatprep.subr.bf16.mxu0 0
        %1078 = vmatpush1.bf16.msra.mxu0 0
        %1079 = vmatprep.subr.bf16.mxu0 0
        %1080 = vmatpush1.bf16.msra.mxu0 0
        %1081 = vmatprep.subr.bf16.mxu0 0
        %1082 = vmatpush1.bf16.msra.mxu0 0
        %1083 = vmatprep.subr.bf16.mxu0 0
        %1084 = vmatpush1.bf16.msra.mxu0 0
        %1085 = vmatprep.subr.bf16.mxu0 0
        %1086 = vmatpush1.bf16.msra.mxu0 0
        %1087 = vmatprep.subr.bf16.mxu0 0
        %1088 = vmatpush1.bf16.msra.mxu0 0
        %1089 = vmatprep.subr.bf16.mxu0 0
        %1090 = vmatpush1.bf16.msra.mxu0 0
        %1091 = vmatprep.subr.bf16.mxu0 0
        %1092 = vmatpush1.bf16.msra.mxu0 0
        %1093 = vmatprep.subr.bf16.mxu0 0
        %1094 = vmatpush1.bf16.msra.mxu0 0
        %1095 = vmatprep.subr.bf16.mxu0 0
        %1096 = vmatpush1.bf16.msra.mxu0 0
        %1097 = vmatprep.subr.bf16.mxu0 0
        %1098 = vmatpush1.bf16.msra.mxu0 0
        %1099 = vmatprep.mubr.bf16.mxu0 0
        %1100 = vmatmul.mubr.bf16.gmra.mrb[0].mxu0 %v1065
        %v1101 = vpop.f32.mrb[0].mxu0
        %v1102 = vadd.f32 0.0, %v1101
        %v1103 = vpop.f32.mrb[0].mxu0
        %v1104 = vpop.f32.mrb[0].mxu0
        %v1105 = vpop.f32.mrb[0].mxu0
        %1106 = vdwg.mxu0
        %1108 = vrot.lane.b32.xlu0 %v1102, 96
        %v1109 = vpop.permute.xlu0 %1108
        %vm1111 = vcmask 1048320
        %1112 = vst.msk [vmem:[#allocation2] sm:$0xff] %vm1111, %v1109
        %v1113 = vld [vmem:[#allocation2] sm:$0xff]
        %v1114 = vpack.c.bf16 %v1113, %v1113
        %v1115 = vld [vmem:[%s6] sm:$0xf]
        %v1116 = vld [vmem:[%s6 + $0x4] sm:$0xf]
        %v1117 = vld [vmem:[%s6 + $0x8] sm:$0xf]
        %v1118 = vld [vmem:[%s6 + $0xc] sm:$0xf]
        %v1119 = vld [vmem:[%s6 + $0x10] sm:$0xf]
        %v1120 = vld [vmem:[%s6 + $0x14] sm:$0xf]
        %v1121 = vld [vmem:[%s6 + $0x18] sm:$0xf]
        %v1122 = vld [vmem:[%s6 + $0x1c] sm:$0xf]
        %v1123 = vld [vmem:[%s6 + $0x20] sm:$0xf]
        %v1124 = vld [vmem:[%s6 + $0x24] sm:$0xf]
        %v1125 = vld [vmem:[%s6 + $0x28] sm:$0xf]
        %v1126 = vld [vmem:[%s6 + $0x2c] sm:$0xf]
        %v1127 = vld [vmem:[%s6 + $0x30] sm:$0xf]
        %v1128 = vld [vmem:[%s6 + $0x34] sm:$0xf]
        %v1129 = vld [vmem:[%s6 + $0x38] sm:$0xf]
        %v1130 = vld [vmem:[%s6 + $0x3c] sm:$0xf]
        %v1131 = vld [vmem:[#allocation5] sm:$0x1]
        %v1133 = vlaneseq
        %v1134 = vshrl.u32 %v1133, 7
        %v1135 = vsub.s32 0, %v1134
        %v1136 = vrot.slane %v1131, %v1135
        %v1154 = vunpack.c.l.b16 %v1115
        %v1155 = vunpack.c.l.b16 %v1116
        %v1156 = vunpack.c.l.b16 %v1117
        %v1157 = vunpack.c.l.b16 %v1118
        %v1158 = vunpack.c.l.b16 %v1119
        %v1159 = vunpack.c.l.b16 %v1120
        %v1160 = vunpack.c.l.b16 %v1121
        %v1161 = vunpack.c.l.b16 %v1122
        %v1162 = vunpack.c.l.b16 %v1123
        %v1163 = vunpack.c.l.b16 %v1124
        %v1164 = vunpack.c.l.b16 %v1125
        %v1165 = vunpack.c.l.b16 %v1126
        %v1166 = vunpack.c.l.b16 %v1127
        %v1167 = vunpack.c.l.b16 %v1128
        %v1168 = vunpack.c.l.b16 %v1129
        %v1169 = vunpack.c.l.b16 %v1130
        %v1170 = vpack.c.b16 %v1155, %v1154
        %v1171 = vpack.c.b16 %v1157, %v1156
        %v1172 = vpack.c.b16 %v1159, %v1158
        %v1173 = vpack.c.b16 %v1161, %v1160
        %v1174 = vpack.c.b16 %v1163, %v1162
        %v1175 = vpack.c.b16 %v1165, %v1164
        %v1176 = vpack.c.b16 %v1167, %v1166
        %v1177 = vpack.c.b16 %v1169, %v1168
        %1186 = vmatprep.subr.bf16.mxu0 0
        %1187 = vmatpush1.bf16.msra.mxu0 %v1170
        %1188 = vmatprep.subr.bf16.mxu0 0
        %1189 = vmatpush1.bf16.msra.mxu0 %v1171
        %1190 = vmatprep.subr.bf16.mxu0 0
        %1191 = vmatpush1.bf16.msra.mxu0 %v1172
        %1192 = vmatprep.subr.bf16.mxu0 0
        %1193 = vmatpush1.bf16.msra.mxu0 %v1173
        %1194 = vmatprep.subr.bf16.mxu0 0
        %1195 = vmatpush1.bf16.msra.mxu0 %v1174
        %1196 = vmatprep.subr.bf16.mxu0 0
        %1197 = vmatpush1.bf16.msra.mxu0 %v1175
        %1198 = vmatprep.subr.bf16.mxu0 0
        %1199 = vmatpush1.bf16.msra.mxu0 %v1176
        %1200 = vmatprep.subr.bf16.mxu0 0
        %1201 = vmatpush1.bf16.msra.mxu0 %v1177
        %1202 = vmatprep.subr.bf16.mxu0 0
        %1203 = vmatpush1.bf16.msra.mxu0 0
        %1204 = vmatprep.subr.bf16.mxu0 0
        %1205 = vmatpush1.bf16.msra.mxu0 0
        %1206 = vmatprep.subr.bf16.mxu0 0
        %1207 = vmatpush1.bf16.msra.mxu0 0
        %1208 = vmatprep.subr.bf16.mxu0 0
        %1209 = vmatpush1.bf16.msra.mxu0 0
        %1210 = vmatprep.subr.bf16.mxu0 0
        %1211 = vmatpush1.bf16.msra.mxu0 0
        %1212 = vmatprep.subr.bf16.mxu0 0
        %1213 = vmatpush1.bf16.msra.mxu0 0
        %1214 = vmatprep.subr.bf16.mxu0 0
        %1215 = vmatpush1.bf16.msra.mxu0 0
        %1216 = vmatprep.subr.bf16.mxu0 0
        %1217 = vmatpush1.bf16.msra.mxu0 0
        %1218 = vmatprep.mubr.bf16.mxu0 0
        %1219 = vmatmul.mubr.bf16.gmra.mrb[0].mxu0 %v1114
        %v1220 = vpop.f32.mrb[0].mxu0
        %v1221 = vadd.f32 %v1136, %v1220
        %v1222 = vpop.f32.mrb[0].mxu0
        %v1223 = vpop.f32.mrb[0].mxu0
        %v1224 = vpop.f32.mrb[0].mxu0
        %1225 = vdwg.mxu0
        %1226 = vst [vmem:[%s382] sm:$0xff] %v1221
        %p1227 = scmp.lt.s32.totalorder %s25, 1
        %s1228 = scalar_select %p1227, %s25, 1
        %p1229 = scmp.lt.s32.totalorder %s26, 1
        %s1230 = scalar_select %p1229, %s26, 1
        %s1231 = smul.addr %s1228, 2
        %s1232 = sadd.s32 %s1230, %s1231
        %s1233 = smul.addr %s1232, 8
        %s1234 = scalar_lea.vmem %s8, %s1233
        // Predicated region
        $region61: #{transformer_decoder_forward.5} parent=51 // pred_check
          %p1235 = pneg %p233
        $region62: #{transformer_decoder_forward.5} parent=51 // pred_check_branch
          %1237 = sbr.rel (%p1235) target = $region64
        $region63: #{transformer_decoder_forward.5} parent=51 // pred_region
          _
        $region64: #{transformer_decoder_forward.5} parent=51 // pred_fallthru
          _
      $region52: #{transformer_decoder_forward.5} parent=5 // pred_fallthru
        _
      %p1238 = scmp.le.s32.totalorder 2, %s16
      // Predicated region
      $region65: #{transformer_decoder_forward.5} parent=5 // pred_check
        %p1239 = pneg %p1238
      $region66: #{transformer_decoder_forward.5} parent=5 // pred_check_branch
        %1241 = sbr.rel (%p1239) target = $region68
      $region67: #{transformer_decoder_forward.5} parent=5 // pred_region
        %s1242 = ssub.s32 %s16, 2
        // Predicated region
        $region69: #{transformer_decoder_forward.5} parent=67 // pred_check
          %p1243 = pneg %p239
        $region70: #{transformer_decoder_forward.5} parent=67 // pred_check_branch
          %1245 = sbr.rel (%p1243) target = $region72
        $region71: #{transformer_decoder_forward.5} parent=67 // pred_region
          %p1246 = scmp.lt.s32.totalorder %s27, 1
          %s1247 = scalar_select %p1246, %s27, 1
          %p1248 = scmp.lt.s32.totalorder %s28, 1
          %s1249 = scalar_select %p1248, %s28, 1
          %s1250 = smul.addr %s1247, 2
          %s1251 = sadd.s32 %s1249, %s1250
          %s1252 = smul.addr %s1251, 8
          %s1253 = scalar_lea.vmem %s8, %s1252
        $region72: #{transformer_decoder_forward.5} parent=67 // pred_fallthru
          _
      $region68: #{transformer_decoder_forward.5} parent=5 // pred_fallthru
        _
    $region6: #{transformer_decoder_forward.5} parent=1 // loop_footer
      %s20 = sadd.s32 1, %s16
    $region7: #{transformer_decoder_forward.5} parent=1 // loop_footer_branch
      %15 = sbr.rel target = $region3
    $region8: #{transformer_decoder_forward.5} parent=1 // loop_exit
      _
    %1254 = vsyncpa [#allocation4], 1
    %s1255 = scalar_lea.sflag [#allocation4], 1
    %1256 = vsyncpa %s1255, 1
    %1257 = vsyncpa [#allocation6], 1

// kernel: transformer_decoder_forward.6
$region0: #{transformer_decoder_forward.6}
  #allocation0 [shape = 'u32[]', space=smem, size = 0x4, offset = 0x4, fixed_abs, tag = 'smem constant byte address 0x4 - core index']
  #allocation1 [shape = 'u32[144,128]{1,0:T(1,128)}', space=vmem, size = 0x12000, scoped, tag = 'internal scratch']
  #allocation2 [shape = 'f32[16,128]{1,0:T(8,128)}', space=vmem, size = 0x2000, scoped, tag = 'scratch operand']
  %s0 = inlined_call_operand.vmem [shape: f32[32,128], index: 0, kind: input, shape index: {}]
  %s1 = inlined_call_operand.vmem [shape: bf16[128,512], index: 1, kind: input, shape index: {}]
  %s2 = inlined_call_operand.vmem [shape: f32[1,512], index: 2, kind: input, shape index: {}]
  %s3 = inlined_call_operand.vmem [shape: bf16[512,128], index: 3, kind: input, shape index: {}]
  %s4 = inlined_call_operand.hbm [shape: f32[1,128], index: 4, kind: input, shape index: {}]
  %s5 = inlined_call_operand.hbm [shape: f32[1,128], index: 5, kind: input, shape index: {}]
  %s6 = inlined_call_operand.hbm [shape: f32[1,128], index: 6, kind: input, shape index: {}]
  %s7 = inlined_call_operand.vmem [shape: f32[32,128], index: 7, kind: output, shape index: {}]
  %s8 = sld [smem:[#allocation0]]
  $region119: #{transformer_decoder_forward.6} parent=0
    _
  %s10 = ssub.s32 1, %s8
  %s11 = scalar_select 0, %s10, %s8
  $region1: #{transformer_decoder_forward.6} parent=0
    #allocation3 [shape = 'u8[131072]{0}', space=vmem, size = 0x20000, scoped, tag = 'input window, operand 1']
    #allocation4 [shape = 'u8[512]{0}', space=vmem, size = 0x400, scoped, tag = 'input window, operand 4, single buffered']
    #allocation5 [shape = 's32[2]{0}', space=sflag, size = 0x8, scoped, tag = 'scoped memory for transformer_decoder_forward.6']
    #allocation6 [shape = 'u8[512]{0}', space=vmem, size = 0x400, scoped, tag = 'input window, operand 5, single buffered']
    #allocation7 [shape = 's32[1]{0}', space=sflag, size = 0x4, scoped, tag = 'scoped memory for transformer_decoder_forward.6']
    #allocation8 [shape = 'u8[512]{0}', space=vmem, size = 0x400, scoped, tag = 'input window, operand 6, single buffered']
    %12 = vsyncpa [#allocation5], 0
    %13 = vsyncpa [#allocation7], 0
    loop: start=0, step=1, limit=6
    $region2: #{transformer_decoder_forward.6} parent=1 // loop_pre_header
      _
    $region3: #{transformer_decoder_forward.6} parent=1 // loop_header
      %s15 = sphi 0, %s19
      %p16 = scmp.ge.s32.totalorder %s15, 6
      %s22 = sphi 0, %s34
      %s23 = sphi 0, %s30
      %s24 = sphi 0, %s22
      %s25 = sphi 0, %s23
      %s26 = sphi 0, %s24
      %s27 = sphi 0, %s25
      %s37 = sphi 0, %s39
      %s40 = sphi 0, %s37
      %s41 = sphi 0, %s40
      %s57 = sphi 0, %s41
      %s63 = sphi 0, %s65
      %s66 = sphi 0, %s63
      %s67 = sphi 0, %s66
      %s83 = sphi 0, %s67
      %s89 = sphi 0, %s91
      %s92 = sphi 0, %s89
      %s93 = sphi 0, %s92
      %s109 = sphi 0, %s93
      %s115 = sphi 0, %s117
      %s118 = sphi 0, %s115
      %s119 = sphi 0, %s118
      %s135 = sphi 0, %s119
      %s139 = sphi 0, %s139
      %s141 = sphi 0, %s139
      %s142 = sphi 0, %s141
      %s156 = sphi 0, %s142
      %s160 = sphi 0, %s160
      %s162 = sphi 0, %s160
      %s163 = sphi 0, %s162
      %s177 = sphi 0, %s163
      %s181 = sphi 0, %s181
      %s183 = sphi 0, %s181
      %s184 = sphi 0, %s183
      %s198 = sphi 0, %s184
      %s204 = sphi 0, %s206
      %s207 = sphi 0, %s204
      %s208 = sphi 0, %s207
      %s224 = sphi 0, %s208
    $region4: #{transformer_decoder_forward.6} parent=1 // loop_header_branch
      %18 = sbr.rel (%p16) target = $region8
    $region5: #{transformer_decoder_forward.6} parent=1 // loop_body
      %s20 = ssub.s32 %s15, 1
      %s21 = ssub.s32 %s15, 2
      %s28 = sadd.s32 1, %s23
      %p29 = scmp.ge.s32.totalorder %s28, 2
      %s30 = scalar_select %p29, 0, %s28
      %s31 = sadd.s32 1, %s22
      %s32 = scalar_select %p29, %s31, %s22
      %p33 = scmp.ge.s32.totalorder %s32, 2
      %s34 = scalar_select %p33, 0, %s32
      %s35 = ssub.s32 %s22, %s34
      %p36 = scmp.eq.s32.totalorder %s35, 0
      %s38 = sadd.s32 %s37, 1
      %s39 = scalar_select %p36, %s37, %s38
      %p42 = pneg %p36
      %p43 = scmp.eq.s32.totalorder %s15, 3
      %p44 = por %p42, %p43
      %p45 = scmp.ne.s32.totalorder %s37, %s40
      %p46 = scmp.eq.s32.totalorder %s15, 0
      %p47 = por %p45, %p46
      %p48 = scmp.ne.s32.totalorder %s37, %s40
      %p49 = scmp.eq.s32.totalorder %s20, 3
      %p50 = por %p48, %p49
      %p51 = scmp.ne.s32.totalorder %s40, %s41
      %p52 = scmp.eq.s32.totalorder %s20, 0
      %p53 = por %p51, %p52
      %p54 = scmp.ne.s32.totalorder %s40, %s41
      %p55 = scmp.eq.s32.totalorder %s21, 3
      %p56 = por %p54, %p55
      %p58 = scmp.ne.s32.totalorder %s41, %s57
      %p59 = scmp.eq.s32.totalorder %s21, 0
      %p60 = por %p58, %p59
      %s61 = ssub.s32 %s23, %s30
      %p62 = scmp.eq.s32.totalorder %s61, 0
      %s64 = sadd.s32 %s63, 1
      %s65 = scalar_select %p62, %s63, %s64
      %p68 = pneg %p62
      %p69 = scmp.eq.s32.totalorder %s15, 3
      %p70 = por %p68, %p69
      %p71 = scmp.ne.s32.totalorder %s63, %s66
      %p72 = scmp.eq.s32.totalorder %s15, 0
      %p73 = por %p71, %p72
      %p74 = scmp.ne.s32.totalorder %s63, %s66
      %p75 = scmp.eq.s32.totalorder %s20, 3
      %p76 = por %p74, %p75
      %p77 = scmp.ne.s32.totalorder %s66, %s67
      %p78 = scmp.eq.s32.totalorder %s20, 0
      %p79 = por %p77, %p78
      %p80 = scmp.ne.s32.totalorder %s66, %s67
      %p81 = scmp.eq.s32.totalorder %s21, 3
      %p82 = por %p80, %p81
      %p84 = scmp.ne.s32.totalorder %s67, %s83
      %p85 = scmp.eq.s32.totalorder %s21, 0
      %p86 = por %p84, %p85
      %s87 = ssub.s32 %s23, %s30
      %p88 = scmp.eq.s32.totalorder %s87, 0
      %s90 = sadd.s32 %s89, 1
      %s91 = scalar_select %p88, %s89, %s90
      %p94 = pneg %p88
      %p95 = scmp.eq.s32.totalorder %s15, 3
      %p96 = por %p94, %p95
      %p97 = scmp.ne.s32.totalorder %s89, %s92
      %p98 = scmp.eq.s32.totalorder %s15, 0
      %p99 = por %p97, %p98
      %p100 = scmp.ne.s32.totalorder %s89, %s92
      %p101 = scmp.eq.s32.totalorder %s20, 3
      %p102 = por %p100, %p101
      %p103 = scmp.ne.s32.totalorder %s92, %s93
      %p104 = scmp.eq.s32.totalorder %s20, 0
      %p105 = por %p103, %p104
      %p106 = scmp.ne.s32.totalorder %s92, %s93
      %p107 = scmp.eq.s32.totalorder %s21, 3
      %p108 = por %p106, %p107
      %p110 = scmp.ne.s32.totalorder %s93, %s109
      %p111 = scmp.eq.s32.totalorder %s21, 0
      %p112 = por %p110, %p111
      %s113 = ssub.s32 %s23, %s30
      %p114 = scmp.eq.s32.totalorder %s113, 0
      %s116 = sadd.s32 %s115, 1
      %s117 = scalar_select %p114, %s115, %s116
      %p120 = pneg %p114
      %p121 = scmp.eq.s32.totalorder %s15, 3
      %p122 = por %p120, %p121
      %p123 = scmp.ne.s32.totalorder %s115, %s118
      %p124 = scmp.eq.s32.totalorder %s15, 0
      %p125 = por %p123, %p124
      %p126 = scmp.ne.s32.totalorder %s115, %s118
      %p127 = scmp.eq.s32.totalorder %s20, 3
      %p128 = por %p126, %p127
      %p129 = scmp.ne.s32.totalorder %s118, %s119
      %p130 = scmp.eq.s32.totalorder %s20, 0
      %p131 = por %p129, %p130
      %p132 = scmp.ne.s32.totalorder %s118, %s119
      %p133 = scmp.eq.s32.totalorder %s21, 3
      %p134 = por %p132, %p133
      %p136 = scmp.ne.s32.totalorder %s119, %s135
      %p137 = scmp.eq.s32.totalorder %s21, 0
      %p138 = por %p136, %p137
      %s140 = sadd.s32 %s139, 1
      %p143 = scmp.eq.s32.totalorder %s15, 3
      %p144 = scmp.ne.s32.totalorder %s139, %s141
      %p145 = scmp.eq.s32.totalorder %s15, 0
      %p146 = por %p144, %p145
      %p147 = scmp.ne.s32.totalorder %s139, %s141
      %p148 = scmp.eq.s32.totalorder %s20, 3
      %p149 = por %p147, %p148
      %p150 = scmp.ne.s32.totalorder %s141, %s142
      %p151 = scmp.eq.s32.totalorder %s20, 0
      %p152 = por %p150, %p151
      %p153 = scmp.ne.s32.totalorder %s141, %s142
      %p154 = scmp.eq.s32.totalorder %s21, 3
      %p155 = por %p153, %p154
      %p157 = scmp.ne.s32.totalorder %s142, %s156
      %p158 = scmp.eq.s32.totalorder %s21, 0
      %p159 = por %p157, %p158
      %s161 = sadd.s32 %s160, 1
      %p164 = scmp.eq.s32.totalorder %s15, 3
      %p165 = scmp.ne.s32.totalorder %s160, %s162
      %p166 = scmp.eq.s32.totalorder %s15, 0
      %p167 = por %p165, %p166
      %p168 = scmp.ne.s32.totalorder %s160, %s162
      %p169 = scmp.eq.s32.totalorder %s20, 3
      %p170 = por %p168, %p169
      %p171 = scmp.ne.s32.totalorder %s162, %s163
      %p172 = scmp.eq.s32.totalorder %s20, 0
      %p173 = por %p171, %p172
      %p174 = scmp.ne.s32.totalorder %s162, %s163
      %p175 = scmp.eq.s32.totalorder %s21, 3
      %p176 = por %p174, %p175
      %p178 = scmp.ne.s32.totalorder %s163, %s177
      %p179 = scmp.eq.s32.totalorder %s21, 0
      %p180 = por %p178, %p179
      %s182 = sadd.s32 %s181, 1
      %p185 = scmp.eq.s32.totalorder %s15, 3
      %p186 = scmp.ne.s32.totalorder %s181, %s183
      %p187 = scmp.eq.s32.totalorder %s15, 0
      %p188 = por %p186, %p187
      %p189 = scmp.ne.s32.totalorder %s181, %s183
      %p190 = scmp.eq.s32.totalorder %s20, 3
      %p191 = por %p189, %p190
      %p192 = scmp.ne.s32.totalorder %s183, %s184
      %p193 = scmp.eq.s32.totalorder %s20, 0
      %p194 = por %p192, %p193
      %p195 = scmp.ne.s32.totalorder %s183, %s184
      %p196 = scmp.eq.s32.totalorder %s21, 3
      %p197 = por %p195, %p196
      %p199 = scmp.ne.s32.totalorder %s184, %s198
      %p200 = scmp.eq.s32.totalorder %s21, 0
      %p201 = por %p199, %p200
      %s202 = ssub.s32 %s22, %s34
      %p203 = scmp.eq.s32.totalorder %s202, 0
      %s205 = sadd.s32 %s204, 1
      %s206 = scalar_select %p203, %s204, %s205
      %p209 = pneg %p203
      %p210 = scmp.eq.s32.totalorder %s15, 3
      %p211 = por %p209, %p210
      %p212 = scmp.ne.s32.totalorder %s204, %s207
      %p213 = scmp.eq.s32.totalorder %s15, 0
      %p214 = por %p212, %p213
      %p215 = scmp.ne.s32.totalorder %s204, %s207
      %p216 = scmp.eq.s32.totalorder %s20, 3
      %p217 = por %p215, %p216
      %p218 = scmp.ne.s32.totalorder %s207, %s208
      %p219 = scmp.eq.s32.totalorder %s20, 0
      %p220 = por %p218, %p219
      %p221 = scmp.ne.s32.totalorder %s207, %s208
      %p222 = scmp.eq.s32.totalorder %s21, 3
      %p223 = por %p221, %p222
      %p225 = scmp.ne.s32.totalorder %s208, %s224
      %p226 = scmp.eq.s32.totalorder %s21, 0
      %p227 = por %p225, %p226
      %p228 = scmp.le.s32.totalorder 1, %s15
      %p229 = scmp.lt.s32.totalorder %s15, 5
      %p230 = pnand %p228, %p229
      %p231 = pneg %p230
      // Predicated region
      $region9: #{transformer_decoder_forward.6} parent=5 // pred_check
        _
      $region10: #{transformer_decoder_forward.6} parent=5 // pred_check_branch
        %233 = sbr.rel (%p230) target = $region12
      $region11: #{transformer_decoder_forward.6} parent=5 // pred_region
        %s234 = ssub.s32 %s15, 1
        // Predicated region
        $region13: #{transformer_decoder_forward.6} parent=11 // pred_check
          %p235 = pneg %p152
        $region14: #{transformer_decoder_forward.6} parent=11 // pred_check_branch
          %237 = sbr.rel (%p235) target = $region16
        $region15: #{transformer_decoder_forward.6} parent=11 // pred_region
          %s239 = ssub.s32 16, 16
          %240 = vsyncadd [#allocation5], %s239
          %s242 = sshll.u32 [#allocation4], 4
          %s243 = int_to_ptr.vmem [resolvable:$true] %s242
          %245 = dma.hbm_to_vmem [thread:$0]  %s4, 16, %s243, [#allocation5]
        $region16: #{transformer_decoder_forward.6} parent=11 // pred_fallthru
          _
        // Predicated region
        $region17: #{transformer_decoder_forward.6} parent=11 // pred_check
          %p246 = pneg %p173
        $region18: #{transformer_decoder_forward.6} parent=11 // pred_check_branch
          %248 = sbr.rel (%p246) target = $region20
        $region19: #{transformer_decoder_forward.6} parent=11 // pred_region
          %s250 = ssub.s32 16, 16
          %251 = vsyncadd [#allocation7], %s250
          %s253 = sshll.u32 [#allocation6], 4
          %s254 = int_to_ptr.vmem [resolvable:$true] %s253
          %256 = dma.hbm_to_vmem [thread:$0]  %s5, 16, %s254, [#allocation7]
        $region20: #{transformer_decoder_forward.6} parent=11 // pred_fallthru
          _
        // Predicated region
        $region21: #{transformer_decoder_forward.6} parent=11 // pred_check
          %p257 = pneg %p194
        $region22: #{transformer_decoder_forward.6} parent=11 // pred_check_branch
          %259 = sbr.rel (%p257) target = $region24
        $region23: #{transformer_decoder_forward.6} parent=11 // pred_region
          %s261 = ssub.s32 16, 16
          %262 = vsyncadd [#allocation7], %s261
          %s264 = sshll.u32 [#allocation8], 4
          %s265 = int_to_ptr.vmem [resolvable:$true] %s264
          %267 = dma.hbm_to_vmem [thread:$0]  %s6, 16, %s265, [#allocation7]
        $region24: #{transformer_decoder_forward.6} parent=11 // pred_fallthru
          _
      $region12: #{transformer_decoder_forward.6} parent=5 // pred_fallthru
        _
      %p268 = scmp.lt.s32.totalorder %s15, 4
      // Predicated region
      $region25: #{transformer_decoder_forward.6} parent=5 // pred_check
        %p269 = pneg %p268
      $region26: #{transformer_decoder_forward.6} parent=5 // pred_check_branch
        %271 = sbr.rel (%p269) target = $region28
      $region27: #{transformer_decoder_forward.6} parent=5 // pred_region
        // Predicated region
        $region29: #{transformer_decoder_forward.6} parent=27 // pred_check
          %p272 = pneg %p47
        $region30: #{transformer_decoder_forward.6} parent=27 // pred_check_branch
          %274 = sbr.rel (%p272) target = $region32
        $region31: #{transformer_decoder_forward.6} parent=27 // pred_region
          %s275 = smul.u32 2, %s22
          %p276 = scmp.lt.s32.totalorder %s275, 3
          %s277 = scalar_select %p276, %s275, 3
          %s278 = smul.addr %s277, 8
          %s279 = scalar_lea.vmem %s0, %s278
          %s280 = smul.u32 2, %s22
        $region32: #{transformer_decoder_forward.6} parent=27 // pred_fallthru
          _
        // Predicated region
        $region33: #{transformer_decoder_forward.6} parent=27 // pred_check
          %p281 = pneg %p73
        $region34: #{transformer_decoder_forward.6} parent=27 // pred_check_branch
          %283 = sbr.rel (%p281) target = $region36
        $region35: #{transformer_decoder_forward.6} parent=27 // pred_region
          %s284 = sand.u32 %s63, 1
          %s285 = sand.u32 %s63, 1
          %s286 = smul.addr %s285, 128
          %s287 = scalar_lea.vmem [#allocation3], %s286
          %s288 = smul.u32 2, %s23
          %s289 = smul.addr %s288, 4
          %s290 = scalar_lea.vmem %s1, %s289
          // Predicated region
          $region37: #{transformer_decoder_forward.6} parent=35 // pred_check
            _
          $region38: #{transformer_decoder_forward.6} parent=35 // pred_check_branch
            %292 = sbr.rel (0) target = $region40
          $region39: #{transformer_decoder_forward.6} parent=35 // pred_region
            // Predicated region
            $region41: #{transformer_decoder_forward.6} parent=39 // pred_check
              _
            $region42: #{transformer_decoder_forward.6} parent=39 // pred_check_branch
              %294 = sbr.rel (0) target = $region44
            $region43: #{transformer_decoder_forward.6} parent=39 // pred_region
              // Predicated region
              $region56: #{transformer_decoder_forward.6} parent=43 // pred_check
                _
              $region57: #{transformer_decoder_forward.6} parent=43 // pred_check_branch
                %339 = sbr.rel (0) target = $region59
              $region58: #{transformer_decoder_forward.6} parent=43 // pred_region
                loop: start=0, step=1, limit=1
                $region60: #{transformer_decoder_forward.6} parent=58 // loop_pre_header
                  _
                $region61: #{transformer_decoder_forward.6} parent=58 // loop_header
                  %s341 = sphi 0, %s345
                  %p342 = scmp.ge.s32.totalorder %s341, 1
                  %s346 = sphi %s290, %s290
                  %s347 = sphi %s287, %s287
                $region62: #{transformer_decoder_forward.6} parent=58 // loop_header_branch
                  %344 = sbr.rel (%p342) target = $region66
                $region63: #{transformer_decoder_forward.6} parent=58 // loop_body
                  %v348 = vld [vmem:[%s346] sm:$0xff]
                  %349 = vst [vmem:[%s347] sm:$0xff] %v348
                  %v350 = vld [vmem:[%s346 + $0x10] sm:$0xff]
                  %351 = vst [vmem:[%s347 + $0x8] sm:$0xff] %v350
                  %v352 = vld [vmem:[%s346 + $0x20] sm:$0xff]
                  %353 = vst [vmem:[%s347 + $0x10] sm:$0xff] %v352
                  %v354 = vld [vmem:[%s346 + $0x30] sm:$0xff]
                  %355 = vst [vmem:[%s347 + $0x18] sm:$0xff] %v354
                  %v356 = vld [vmem:[%s346 + $0x40] sm:$0xff]
                  %357 = vst [vmem:[%s347 + $0x20] sm:$0xff] %v356
                  %v358 = vld [vmem:[%s346 + $0x50] sm:$0xff]
                  %359 = vst [vmem:[%s347 + $0x28] sm:$0xff] %v358
                  %v360 = vld [vmem:[%s346 + $0x60] sm:$0xff]
                  %361 = vst [vmem:[%s347 + $0x30] sm:$0xff] %v360
                  %v362 = vld [vmem:[%s346 + $0x70] sm:$0xff]
                  %363 = vst [vmem:[%s347 + $0x38] sm:$0xff] %v362
                  %v364 = vld [vmem:[%s346 + $0x80] sm:$0xff]
                  %365 = vst [vmem:[%s347 + $0x40] sm:$0xff] %v364
                  %v366 = vld [vmem:[%s346 + $0x90] sm:$0xff]
                  %367 = vst [vmem:[%s347 + $0x48] sm:$0xff] %v366
                  %v368 = vld [vmem:[%s346 + $0xa0] sm:$0xff]
                  %369 = vst [vmem:[%s347 + $0x50] sm:$0xff] %v368
                  %v370 = vld [vmem:[%s346 + $0xb0] sm:$0xff]
                  %371 = vst [vmem:[%s347 + $0x58] sm:$0xff] %v370
                  %v372 = vld [vmem:[%s346 + $0xc0] sm:$0xff]
                  %373 = vst [vmem:[%s347 + $0x60] sm:$0xff] %v372
                  %v374 = vld [vmem:[%s346 + $0xd0] sm:$0xff]
                  %375 = vst [vmem:[%s347 + $0x68] sm:$0xff] %v374
                  %v376 = vld [vmem:[%s346 + $0xe0] sm:$0xff]
                  %377 = vst [vmem:[%s347 + $0x70] sm:$0xff] %v376
                  %v378 = vld [vmem:[%s346 + $0xf0] sm:$0xff]
                  %379 = vst [vmem:[%s347 + $0x78] sm:$0xff] %v378
                $region64: #{transformer_decoder_forward.6} parent=58 // loop_footer
                  %s345 = sadd.s32 1, %s341
                $region65: #{transformer_decoder_forward.6} parent=58 // loop_footer_branch
                  %340 = sbr.rel target = $region61
                $region66: #{transformer_decoder_forward.6} parent=58 // loop_exit
                  _
              $region59: #{transformer_decoder_forward.6} parent=43 // pred_fallthru
                _
              // Predicated region
              $region67: #{transformer_decoder_forward.6} parent=43 // pred_check
                _
              $region68: #{transformer_decoder_forward.6} parent=43 // pred_check_branch
                %381 = sbr.rel target = $region70
              $region69: #{transformer_decoder_forward.6} parent=43 // pred_region
                _
              $region70: #{transformer_decoder_forward.6} parent=43 // pred_fallthru
                _
            $region44: #{transformer_decoder_forward.6} parent=39 // pred_fallthru
              _
            // Predicated region
            $region45: #{transformer_decoder_forward.6} parent=39 // pred_check
              _
            $region46: #{transformer_decoder_forward.6} parent=39 // pred_check_branch
              %296 = sbr.rel target = $region48
            $region47: #{transformer_decoder_forward.6} parent=39 // pred_region
              loop: start=0, step=1, limit=1
              $region49: #{transformer_decoder_forward.6} parent=47 // loop_pre_header
                _
              $region50: #{transformer_decoder_forward.6} parent=47 // loop_header
                %s299 = sphi 0, %s303
                %p300 = scmp.ge.s32.totalorder %s299, 1
                %s304 = sphi %s290, %s290
                %s305 = sphi %s287, %s287
              $region51: #{transformer_decoder_forward.6} parent=47 // loop_header_branch
                %302 = sbr.rel (%p300) target = $region55
              $region52: #{transformer_decoder_forward.6} parent=47 // loop_body
                %v306 = vld [vmem:[%s304] sm:$0xff]
                %307 = vst [vmem:[%s305] sm:$0xff] %v306
                %v308 = vld [vmem:[%s304 + $0x10] sm:$0xff]
                %309 = vst [vmem:[%s305 + $0x8] sm:$0xff] %v308
                %v310 = vld [vmem:[%s304 + $0x20] sm:$0xff]
                %311 = vst [vmem:[%s305 + $0x10] sm:$0xff] %v310
                %v312 = vld [vmem:[%s304 + $0x30] sm:$0xff]
                %313 = vst [vmem:[%s305 + $0x18] sm:$0xff] %v312
                %v314 = vld [vmem:[%s304 + $0x40] sm:$0xff]
                %315 = vst [vmem:[%s305 + $0x20] sm:$0xff] %v314
                %v316 = vld [vmem:[%s304 + $0x50] sm:$0xff]
                %317 = vst [vmem:[%s305 + $0x28] sm:$0xff] %v316
                %v318 = vld [vmem:[%s304 + $0x60] sm:$0xff]
                %319 = vst [vmem:[%s305 + $0x30] sm:$0xff] %v318
                %v320 = vld [vmem:[%s304 + $0x70] sm:$0xff]
                %321 = vst [vmem:[%s305 + $0x38] sm:$0xff] %v320
                %v322 = vld [vmem:[%s304 + $0x80] sm:$0xff]
                %323 = vst [vmem:[%s305 + $0x40] sm:$0xff] %v322
                %v324 = vld [vmem:[%s304 + $0x90] sm:$0xff]
                %325 = vst [vmem:[%s305 + $0x48] sm:$0xff] %v324
                %v326 = vld [vmem:[%s304 + $0xa0] sm:$0xff]
                %327 = vst [vmem:[%s305 + $0x50] sm:$0xff] %v326
                %v328 = vld [vmem:[%s304 + $0xb0] sm:$0xff]
                %329 = vst [vmem:[%s305 + $0x58] sm:$0xff] %v328
                %v330 = vld [vmem:[%s304 + $0xc0] sm:$0xff]
                %331 = vst [vmem:[%s305 + $0x60] sm:$0xff] %v330
                %v332 = vld [vmem:[%s304 + $0xd0] sm:$0xff]
                %333 = vst [vmem:[%s305 + $0x68] sm:$0xff] %v332
                %v334 = vld [vmem:[%s304 + $0xe0] sm:$0xff]
                %335 = vst [vmem:[%s305 + $0x70] sm:$0xff] %v334
                %v336 = vld [vmem:[%s304 + $0xf0] sm:$0xff]
                %337 = vst [vmem:[%s305 + $0x78] sm:$0xff] %v336
              $region53: #{transformer_decoder_forward.6} parent=47 // loop_footer
                %s303 = sadd.s32 1, %s299
              $region54: #{transformer_decoder_forward.6} parent=47 // loop_footer_branch
                %298 = sbr.rel target = $region50
              $region55: #{transformer_decoder_forward.6} parent=47 // loop_exit
                _
            $region48: #{transformer_decoder_forward.6} parent=39 // pred_fallthru
              _
          $region40: #{transformer_decoder_forward.6} parent=35 // pred_fallthru
            _
          %382 = vnop
        $region36: #{transformer_decoder_forward.6} parent=27 // pred_fallthru
          _
        // Predicated region
        $region71: #{transformer_decoder_forward.6} parent=27 // pred_check
          %p383 = pneg %p99
        $region72: #{transformer_decoder_forward.6} parent=27 // pred_check_branch
          %385 = sbr.rel (%p383) target = $region74
        $region73: #{transformer_decoder_forward.6} parent=27 // pred_region
          %s386 = smul.u32 2, %s23
          %p387 = scmp.lt.s32.totalorder %s386, 3
          %s388 = scalar_select %p387, %s386, 3
          %s389 = scalar_lea.vmem %s2, %s388
          %s390 = smul.u32 2, %s23
        $region74: #{transformer_decoder_forward.6} parent=27 // pred_fallthru
          _
        // Predicated region
        $region75: #{transformer_decoder_forward.6} parent=27 // pred_check
          %p391 = pneg %p125
        $region76: #{transformer_decoder_forward.6} parent=27 // pred_check_branch
          %393 = sbr.rel (%p391) target = $region78
        $region77: #{transformer_decoder_forward.6} parent=27 // pred_region
          %s394 = smul.u32 32, %s23
          %p395 = scmp.lt.s32.totalorder %s394, 63
          %s396 = scalar_select %p395, %s394, 63
          %s397 = smul.addr %s396, 4
          %s398 = scalar_lea.vmem %s3, %s397
          %s399 = smul.u32 32, %s23
        $region78: #{transformer_decoder_forward.6} parent=27 // pred_fallthru
          _
      $region28: #{transformer_decoder_forward.6} parent=5 // pred_fallthru
        _
      %p400 = scmp.le.s32.totalorder 1, %s15
      %p401 = scmp.lt.s32.totalorder %s15, 5
      %p402 = pnand %p400, %p401
      %p403 = pneg %p402
      // Predicated region
      $region79: #{transformer_decoder_forward.6} parent=5 // pred_check
        _
      $region80: #{transformer_decoder_forward.6} parent=5 // pred_check_branch
        %405 = sbr.rel (%p402) target = $region82
      $region81: #{transformer_decoder_forward.6} parent=5 // pred_region
        %s406 = ssub.s32 %s15, 1
        %s407 = sand.u32 %s66, 1
        %s408 = sand.u32 %s66, 1
        %s409 = smul.addr %s408, 128
        %s410 = scalar_lea.vmem [#allocation3], %s409
        // Predicated region
        $region83: #{transformer_decoder_forward.6} parent=81 // pred_check
          %p411 = pneg %p79
        $region84: #{transformer_decoder_forward.6} parent=81 // pred_check_branch
          %413 = sbr.rel (%p411) target = $region86
        $region85: #{transformer_decoder_forward.6} parent=81 // pred_region
          _
        $region86: #{transformer_decoder_forward.6} parent=81 // pred_fallthru
          _
        // Predicated region
        $region87: #{transformer_decoder_forward.6} parent=81 // pred_check
          %p414 = pneg %p152
        $region88: #{transformer_decoder_forward.6} parent=81 // pred_check_branch
          %416 = sbr.rel (%p414) target = $region90
        $region89: #{transformer_decoder_forward.6} parent=81 // pred_region
          %417 = dma.done [#allocation5], 16
        $region90: #{transformer_decoder_forward.6} parent=81 // pred_fallthru
          _
        // Predicated region
        $region91: #{transformer_decoder_forward.6} parent=81 // pred_check
          %p418 = pneg %p173
        $region92: #{transformer_decoder_forward.6} parent=81 // pred_check_branch
          %420 = sbr.rel (%p418) target = $region94
        $region93: #{transformer_decoder_forward.6} parent=81 // pred_region
          %421 = dma.done [#allocation7], 16
        $region94: #{transformer_decoder_forward.6} parent=81 // pred_fallthru
          _
        // Predicated region
        $region95: #{transformer_decoder_forward.6} parent=81 // pred_check
          %p422 = pneg %p194
        $region96: #{transformer_decoder_forward.6} parent=81 // pred_check_branch
          %424 = sbr.rel (%p422) target = $region98
        $region97: #{transformer_decoder_forward.6} parent=81 // pred_region
          %425 = dma.done [#allocation7], 16
        $region98: #{transformer_decoder_forward.6} parent=81 // pred_fallthru
          _
        %s426 = smul.u32 2, %s24
        %p427 = scmp.lt.s32.totalorder %s426, 3
        %s428 = scalar_select %p427, %s426, 3
        %s429 = smul.addr %s428, 8
        %s430 = scalar_lea.vmem %s0, %s429
        %p431 = pneg %p53
        %p432 = pneg %p50
        %s433 = sand.u32 %s66, 1
        %s434 = sand.u32 %s66, 1
        %s435 = smul.addr %s434, 128
        %s436 = scalar_lea.vmem [#allocation3], %s435
        %p437 = pneg %p79
        %p438 = pneg %p76
        %s439 = smul.u32 2, %s25
        %p440 = scmp.lt.s32.totalorder %s439, 3
        %s441 = scalar_select %p440, %s439, 3
        %s442 = scalar_lea.vmem %s2, %s441
        %p443 = pneg %p105
        %p444 = pneg %p102
        %s445 = smul.u32 32, %s25
        %p446 = scmp.lt.s32.totalorder %s445, 63
        %s447 = scalar_select %p446, %s445, 63
        %s448 = smul.addr %s447, 4
        %s449 = scalar_lea.vmem %s3, %s448
        %p450 = pneg %p131
        %p451 = pneg %p128
        %p452 = pneg %p152
        %p453 = pneg %p149
        %p454 = pneg %p173
        %p455 = pneg %p170
        %p456 = pneg %p194
        %p457 = pneg %p191
        %p458 = pneg %p220
        %p459 = pneg %p217
        %s460 = smul.u32 2, %s24
        %p461 = scmp.lt.s32.totalorder %s460, 3
        %s462 = scalar_select %p461, %s460, 3
        %s463 = smul.addr %s462, 8
        %s464 = scalar_lea.vmem %s7, %s463
        %s465 = smul.u32 2, %s24
        %p466 = scmp.lt.s32.totalorder %s465, 3
        %s467 = scalar_select %p466, %s465, 3
        %s468 = smul.addr %s467, 8
        %s469 = scalar_lea.vmem %s0, %s468
        %s470 = smul.u32 2, %s24
        %s471 = smul.u32 2, %s25
        %s472 = smul.u32 2, %s25
        %p473 = scmp.lt.s32.totalorder %s472, 3
        %s474 = scalar_select %p473, %s472, 3
        %s475 = scalar_lea.vmem %s2, %s474
        %s476 = smul.u32 2, %s25
        %s477 = smul.u32 32, %s25
        %p478 = scmp.lt.s32.totalorder %s477, 63
        %s479 = scalar_select %p478, %s477, 63
        %s480 = smul.addr %s479, 4
        %s481 = scalar_lea.vmem %s3, %s480
        %s482 = smul.u32 32, %s25
        %s483 = smul.u32 2, %s24
        %p484 = scmp.lt.s32.totalorder %s483, 3
        %s485 = scalar_select %p484, %s483, 3
        %s486 = smul.addr %s485, 8
        %s487 = scalar_lea.vmem %s7, %s486
        %s488 = smul.u32 2, %s24
        %p490 = scmp.eq.s32.totalorder %s25, 0
        // Predicated region
        $region99: #{transformer_decoder_forward.6} parent=81 // pred_check
          %p491 = pneg %p490
        $region100: #{transformer_decoder_forward.6} parent=81 // pred_check_branch
          %493 = sbr.rel (%p491) target = $region102
        $region101: #{transformer_decoder_forward.6} parent=81 // pred_region
          %494 = vst [vmem:[#allocation2] sm:$0xff] 0.0
          %495 = vst [vmem:[#allocation2 + $0x8] sm:$0xff] 0.0
        $region102: #{transformer_decoder_forward.6} parent=81 // pred_fallthru
          _
        %v496 = vld [vmem:[%s469] sm:$0xff]
        %v497 = vld [vmem:[%s469 + $0x8] sm:$0xff]
        %v498 = vpack.c.bf16 %v497, %v496
        %v499 = vld [vmem:[%s410] sm:$0xff]
        %v500 = vld [vmem:[%s410 + $0x8] sm:$0xff]
        %v501 = vld [vmem:[%s410 + $0x10] sm:$0xff]
        %v502 = vld [vmem:[%s410 + $0x18] sm:$0xff]
        %v503 = vld [vmem:[%s410 + $0x20] sm:$0xff]
        %v504 = vld [vmem:[%s410 + $0x28] sm:$0xff]
        %v505 = vld [vmem:[%s410 + $0x30] sm:$0xff]
        %v506 = vld [vmem:[%s410 + $0x38] sm:$0xff]
        %v507 = vld [vmem:[%s410 + $0x40] sm:$0xff]
        %v508 = vld [vmem:[%s410 + $0x48] sm:$0xff]
        %v509 = vld [vmem:[%s410 + $0x50] sm:$0xff]
        %v510 = vld [vmem:[%s410 + $0x58] sm:$0xff]
        %v511 = vld [vmem:[%s410 + $0x60] sm:$0xff]
        %v512 = vld [vmem:[%s410 + $0x68] sm:$0xff]
        %v513 = vld [vmem:[%s410 + $0x70] sm:$0xff]
        %v514 = vld [vmem:[%s410 + $0x78] sm:$0xff]
        %v515 = vld [vmem:[%s475] sm:$0x3]
        %v517 = vlaneseq
        %v518 = vshrl.u32 %v517, 7
        %v519 = vsub.s32 0, %v518
        %v520 = vrot.slane %v515, %v519
        %v521 = vlaneseq
        %v522 = vshrl.u32 %v521, 7
        %v523 = vsub.s32 1, %v522
        %v524 = vrot.slane %v515, %v523
        %v543 = vunpack.c.l.b16 %v499
        %v544 = vunpack.c.h.b16 %v499
        %v545 = vunpack.c.l.b16 %v500
        %v546 = vunpack.c.h.b16 %v500
        %v547 = vunpack.c.l.b16 %v501
        %v548 = vunpack.c.h.b16 %v501
        %v549 = vunpack.c.l.b16 %v502
        %v550 = vunpack.c.h.b16 %v502
        %v551 = vunpack.c.l.b16 %v503
        %v552 = vunpack.c.h.b16 %v503
        %v553 = vunpack.c.l.b16 %v504
        %v554 = vunpack.c.h.b16 %v504
        %v555 = vunpack.c.l.b16 %v505
        %v556 = vunpack.c.h.b16 %v505
        %v557 = vunpack.c.l.b16 %v506
        %v558 = vunpack.c.h.b16 %v506
        %v559 = vunpack.c.l.b16 %v507
        %v560 = vunpack.c.h.b16 %v507
        %v561 = vunpack.c.l.b16 %v508
        %v562 = vunpack.c.h.b16 %v508
        %v563 = vunpack.c.l.b16 %v509
        %v564 = vunpack.c.h.b16 %v509
        %v565 = vunpack.c.l.b16 %v510
        %v566 = vunpack.c.h.b16 %v510
        %v567 = vunpack.c.l.b16 %v511
        %v568 = vunpack.c.h.b16 %v511
        %v569 = vunpack.c.l.b16 %v512
        %v570 = vunpack.c.h.b16 %v512
        %v571 = vunpack.c.l.b16 %v513
        %v572 = vunpack.c.h.b16 %v513
        %v573 = vunpack.c.l.b16 %v514
        %v574 = vunpack.c.h.b16 %v514
        %v575 = vpack.c.b16 %v545, %v543
        %v576 = vpack.c.b16 %v546, %v544
        %v577 = vpack.c.b16 %v549, %v547
        %v578 = vpack.c.b16 %v550, %v548
        %v579 = vpack.c.b16 %v553, %v551
        %v580 = vpack.c.b16 %v554, %v552
        %v581 = vpack.c.b16 %v557, %v555
        %v582 = vpack.c.b16 %v558, %v556
        %v583 = vpack.c.b16 %v561, %v559
        %v584 = vpack.c.b16 %v562, %v560
        %v585 = vpack.c.b16 %v565, %v563
        %v586 = vpack.c.b16 %v566, %v564
        %v587 = vpack.c.b16 %v569, %v567
        %v588 = vpack.c.b16 %v570, %v568
        %v589 = vpack.c.b16 %v573, %v571
        %v590 = vpack.c.b16 %v574, %v572
        %607 = vmatprep.subr.bf16.mxu0 %v576
        %608 = vmatpush1.bf16.msra.mxu0 %v575
        %609 = vmatprep.subr.bf16.mxu0 %v578
        %610 = vmatpush1.bf16.msra.mxu0 %v577
        %611 = vmatprep.subr.bf16.mxu0 %v580
        %612 = vmatpush1.bf16.msra.mxu0 %v579
        %613 = vmatprep.subr.bf16.mxu0 %v582
        %614 = vmatpush1.bf16.msra.mxu0 %v581
        %615 = vmatprep.subr.bf16.mxu0 %v584
        %616 = vmatpush1.bf16.msra.mxu0 %v583
        %617 = vmatprep.subr.bf16.mxu0 %v586
        %618 = vmatpush1.bf16.msra.mxu0 %v585
        %619 = vmatprep.subr.bf16.mxu0 %v588
        %620 = vmatpush1.bf16.msra.mxu0 %v587
        %621 = vmatprep.subr.bf16.mxu0 %v590
        %622 = vmatpush1.bf16.msra.mxu0 %v589
        %623 = vmatprep.subr.bf16.mxu0 0
        %624 = vmatpush1.bf16.msra.mxu0 0
        %625 = vmatprep.subr.bf16.mxu0 0
        %626 = vmatpush1.bf16.msra.mxu0 0
        %627 = vmatprep.subr.bf16.mxu0 0
        %628 = vmatpush1.bf16.msra.mxu0 0
        %629 = vmatprep.subr.bf16.mxu0 0
        %630 = vmatpush1.bf16.msra.mxu0 0
        %631 = vmatprep.subr.bf16.mxu0 0
        %632 = vmatpush1.bf16.msra.mxu0 0
        %633 = vmatprep.subr.bf16.mxu0 0
        %634 = vmatpush1.bf16.msra.mxu0 0
        %635 = vmatprep.subr.bf16.mxu0 0
        %636 = vmatpush1.bf16.msra.mxu0 0
        %637 = vmatprep.subr.bf16.mxu0 0
        %638 = vmatpush1.bf16.msra.mxu0 0
        %639 = vmatprep.mubr.bf16.mxu0 0
        %640 = vmatmul.mubr.bf16.gmra.mrb[0].mxu0 %v498
        %v641 = vpop.f32.mrb[0].mxu0
        %v642 = vadd.f32 %v520, %v641
        %v643 = vpop.f32.mrb[0].mxu0
        %v644 = vadd.f32 %v524, %v643
        %v645 = vpop.f32.mrb[0].mxu0
        %v646 = vadd.f32 %v520, %v645
        %v647 = vpop.f32.mrb[0].mxu0
        %v648 = vadd.f32 %v524, %v647
        %649 = vdwg.mxu0
        %v650 = vmax.f32 %v642, 0.0
        %v651 = vmax.f32 %v644, 0.0
        %v652 = vmax.f32 %v646, 0.0
        %v653 = vmax.f32 %v648, 0.0
        %v654 = vld [vmem:[#allocation2] sm:$0xff]
        %v655 = vld [vmem:[#allocation2 + $0x8] sm:$0xff]
        %v656 = vpack.c.bf16 %v652, %v650
        %v657 = vpack.c.bf16 %v653, %v651
        %v658 = vld [vmem:[%s481] sm:$0xf]
        %v659 = vld [vmem:[%s481 + $0x4] sm:$0xf]
        %v660 = vld [vmem:[%s481 + $0x8] sm:$0xf]
        %v661 = vld [vmem:[%s481 + $0xc] sm:$0xf]
        %v662 = vld [vmem:[%s481 + $0x10] sm:$0xf]
        %v663 = vld [vmem:[%s481 + $0x14] sm:$0xf]
        %v664 = vld [vmem:[%s481 + $0x18] sm:$0xf]
        %v665 = vld [vmem:[%s481 + $0x1c] sm:$0xf]
        %v666 = vld [vmem:[%s481 + $0x20] sm:$0xf]
        %v667 = vld [vmem:[%s481 + $0x24] sm:$0xf]
        %v668 = vld [vmem:[%s481 + $0x28] sm:$0xf]
        %v669 = vld [vmem:[%s481 + $0x2c] sm:$0xf]
        %v670 = vld [vmem:[%s481 + $0x30] sm:$0xf]
        %v671 = vld [vmem:[%s481 + $0x34] sm:$0xf]
        %v672 = vld [vmem:[%s481 + $0x38] sm:$0xf]
        %v673 = vld [vmem:[%s481 + $0x3c] sm:$0xf]
        %v674 = vld [vmem:[%s481 + $0x40] sm:$0xf]
        %v675 = vld [vmem:[%s481 + $0x44] sm:$0xf]
        %v676 = vld [vmem:[%s481 + $0x48] sm:$0xf]
        %v677 = vld [vmem:[%s481 + $0x4c] sm:$0xf]
        %v678 = vld [vmem:[%s481 + $0x50] sm:$0xf]
        %v679 = vld [vmem:[%s481 + $0x54] sm:$0xf]
        %v680 = vld [vmem:[%s481 + $0x58] sm:$0xf]
        %v681 = vld [vmem:[%s481 + $0x5c] sm:$0xf]
        %v682 = vld [vmem:[%s481 + $0x60] sm:$0xf]
        %v683 = vld [vmem:[%s481 + $0x64] sm:$0xf]
        %v684 = vld [vmem:[%s481 + $0x68] sm:$0xf]
        %v685 = vld [vmem:[%s481 + $0x6c] sm:$0xf]
        %v686 = vld [vmem:[%s481 + $0x70] sm:$0xf]
        %v687 = vld [vmem:[%s481 + $0x74] sm:$0xf]
        %v688 = vld [vmem:[%s481 + $0x78] sm:$0xf]
        %v689 = vld [vmem:[%s481 + $0x7c] sm:$0xf]
        %v722 = vunpack.c.l.b16 %v658
        %v723 = vunpack.c.l.b16 %v659
        %v724 = vunpack.c.l.b16 %v660
        %v725 = vunpack.c.l.b16 %v661
        %v726 = vunpack.c.l.b16 %v662
        %v727 = vunpack.c.l.b16 %v663
        %v728 = vunpack.c.l.b16 %v664
        %v729 = vunpack.c.l.b16 %v665
        %v730 = vunpack.c.l.b16 %v666
        %v731 = vunpack.c.l.b16 %v667
        %v732 = vunpack.c.l.b16 %v668
        %v733 = vunpack.c.l.b16 %v669
        %v734 = vunpack.c.l.b16 %v670
        %v735 = vunpack.c.l.b16 %v671
        %v736 = vunpack.c.l.b16 %v672
        %v737 = vunpack.c.l.b16 %v673
        %v738 = vunpack.c.l.b16 %v674
        %v739 = vunpack.c.l.b16 %v675
        %v740 = vunpack.c.l.b16 %v676
        %v741 = vunpack.c.l.b16 %v677
        %v742 = vunpack.c.l.b16 %v678
        %v743 = vunpack.c.l.b16 %v679
        %v744 = vunpack.c.l.b16 %v680
        %v745 = vunpack.c.l.b16 %v681
        %v746 = vunpack.c.l.b16 %v682
        %v747 = vunpack.c.l.b16 %v683
        %v748 = vunpack.c.l.b16 %v684
        %v749 = vunpack.c.l.b16 %v685
        %v750 = vunpack.c.l.b16 %v686
        %v751 = vunpack.c.l.b16 %v687
        %v752 = vunpack.c.l.b16 %v688
        %v753 = vunpack.c.l.b16 %v689
        %v754 = vpack.c.b16 %v723, %v722
        %v755 = vpack.c.b16 %v725, %v724
        %v756 = vpack.c.b16 %v727, %v726
        %v757 = vpack.c.b16 %v729, %v728
        %v758 = vpack.c.b16 %v731, %v730
        %v759 = vpack.c.b16 %v733, %v732
        %v760 = vpack.c.b16 %v735, %v734
        %v761 = vpack.c.b16 %v737, %v736
        %v762 = vpack.c.b16 %v739, %v738
        %v763 = vpack.c.b16 %v741, %v740
        %v764 = vpack.c.b16 %v743, %v742
        %v765 = vpack.c.b16 %v745, %v744
        %v766 = vpack.c.b16 %v747, %v746
        %v767 = vpack.c.b16 %v749, %v748
        %v768 = vpack.c.b16 %v751, %v750
        %v769 = vpack.c.b16 %v753, %v752
        %786 = vmatprep.subr.bf16.mxu0 0
        %787 = vmatpush1.bf16.msra.mxu0 %v754
        %788 = vmatprep.subr.bf16.mxu0 0
        %789 = vmatpush1.bf16.msra.mxu0 %v755
        %790 = vmatprep.subr.bf16.mxu0 0
        %791 = vmatpush1.bf16.msra.mxu0 %v756
        %792 = vmatprep.subr.bf16.mxu0 0
        %793 = vmatpush1.bf16.msra.mxu0 %v757
        %794 = vmatprep.subr.bf16.mxu0 0
        %795 = vmatpush1.bf16.msra.mxu0 %v758
        %796 = vmatprep.subr.bf16.mxu0 0
        %797 = vmatpush1.bf16.msra.mxu0 %v759
        %798 = vmatprep.subr.bf16.mxu0 0
        %799 = vmatpush1.bf16.msra.mxu0 %v760
        %800 = vmatprep.subr.bf16.mxu0 0
        %801 = vmatpush1.bf16.msra.mxu0 %v761
        %802 = vmatprep.subr.bf16.mxu0 0
        %803 = vmatpush1.bf16.msra.mxu0 %v762
        %804 = vmatprep.subr.bf16.mxu0 0
        %805 = vmatpush1.bf16.msra.mxu0 %v763
        %806 = vmatprep.subr.bf16.mxu0 0
        %807 = vmatpush1.bf16.msra.mxu0 %v764
        %808 = vmatprep.subr.bf16.mxu0 0
        %809 = vmatpush1.bf16.msra.mxu0 %v765
        %810 = vmatprep.subr.bf16.mxu0 0
        %811 = vmatpush1.bf16.msra.mxu0 %v766
        %812 = vmatprep.subr.bf16.mxu0 0
        %813 = vmatpush1.bf16.msra.mxu0 %v767
        %814 = vmatprep.subr.bf16.mxu0 0
        %815 = vmatpush1.bf16.msra.mxu0 %v768
        %816 = vmatprep.subr.bf16.mxu0 0
        %817 = vmatpush1.bf16.msra.mxu0 %v769
        %818 = vmatprep.mubr.bf16.mxu0 %v657
        %819 = vmatmul.mubr.bf16.gmra.mrb[0].mxu0 %v656
        %v820 = vpop.f32.mrb[0].mxu0
        %v821 = vadd.f32 0.0, %v820
        %v822 = vpop.f32.mrb[0].mxu0
        %v823 = vpop.f32.mrb[0].mxu0
        %v824 = vadd.f32 0.0, %v823
        %v825 = vpop.f32.mrb[0].mxu0
        %826 = vdwg.mxu0
        %v827 = vadd.f32 %v654, %v821
        %v828 = vadd.f32 %v655, %v824
        %829 = vst [vmem:[#allocation2] sm:$0xff] %v827
        %830 = vst [vmem:[#allocation2 + $0x8] sm:$0xff] %v828
        %p831 = scmp.eq.s32.totalorder %s25, 1
        // Predicated region
        $region103: #{transformer_decoder_forward.6} parent=81 // pred_check
          %p832 = pneg %p831
        $region104: #{transformer_decoder_forward.6} parent=81 // pred_check_branch
          %834 = sbr.rel (%p832) target = $region106
        $region105: #{transformer_decoder_forward.6} parent=81 // pred_region
          %v835 = vld [vmem:[%s469] sm:$0xff]
          %v836 = vld [vmem:[%s469 + $0x8] sm:$0xff]
          %v837 = vld [vmem:[#allocation2] sm:$0xff]
          %v838 = vld [vmem:[#allocation2 + $0x8] sm:$0xff]
          %v839 = vadd.f32 %v835, %v837
          %v840 = vadd.f32 %v836, %v838
          %v841 = vld [vmem:[#allocation4] sm:$0x1]
          %v843 = vlaneseq
          %v844 = vshrl.u32 %v843, 7
          %v845 = vsub.s32 0, %v844
          %v846 = vrot.slane %v841, %v845
          %v848 = vadd.f32 %v839, %v846
          %v849 = vadd.f32 %v840, %v846
          %850 = vadd.xlane.f32.xlu0 %v848
          %v851 = vpop.xlane.xlu0 %850
          %852 = vadd.xlane.f32.xlu0 %v849
          %v853 = vpop.xlane.xlu0 %852
          %v854 = vrcp.pop 128.0
          %v855 = vmul.f32 %v851, %v854
          %v856 = vmul.f32 %v853, %v854
          %v857 = vsub.f32 %v848, %v855
          %v858 = vsub.f32 %v849, %v856
          %v859 = vmul.f32 %v857, %v857
          %v860 = vmul.f32 %v858, %v858
          %861 = vadd.xlane.f32.xlu0 %v859
          %v862 = vpop.xlane.xlu0 %861
          %863 = vadd.xlane.f32.xlu0 %v860
          %v864 = vpop.xlane.xlu0 %863
          %v865 = vmul.f32 %v862, %v854
          %v866 = vmul.f32 %v864, %v854
          %v867 = vadd.f32 %v865, 1e-05
          %v868 = vadd.f32 %v866, 1e-05
          %v869 = vrsqrt.pop %v867
          %v870 = vrsqrt.pop %v868
          %v871 = vmul.f32 %v857, %v869
          %v872 = vmul.f32 %v858, %v870
          %v873 = vld [vmem:[#allocation6] sm:$0x1]
          %v875 = vlaneseq
          %v876 = vshrl.u32 %v875, 7
          %v877 = vsub.s32 0, %v876
          %v878 = vrot.slane %v873, %v877
          %v880 = vmul.f32 %v871, %v878
          %v881 = vmul.f32 %v872, %v878
          %v882 = vld [vmem:[#allocation8] sm:$0x1]
          %v884 = vlaneseq
          %v885 = vshrl.u32 %v884, 7
          %v886 = vsub.s32 0, %v885
          %v887 = vrot.slane %v882, %v886
          %v889 = vadd.f32 %v880, %v887
          %v890 = vadd.f32 %v881, %v887
          %891 = vst [vmem:[%s487] sm:$0xff] %v889
          %892 = vst [vmem:[%s487 + $0x8] sm:$0xff] %v890
        $region106: #{transformer_decoder_forward.6} parent=81 // pred_fallthru
          _
        %s893 = smul.u32 2, %s24
        %p894 = scmp.lt.s32.totalorder %s893, 3
        %s895 = scalar_select %p894, %s893, 3
        %s896 = smul.addr %s895, 8
        %s897 = scalar_lea.vmem %s7, %s896
        // Predicated region
        $region107: #{transformer_decoder_forward.6} parent=81 // pred_check
          %p898 = pneg %p217
        $region108: #{transformer_decoder_forward.6} parent=81 // pred_check_branch
          %900 = sbr.rel (%p898) target = $region110
        $region109: #{transformer_decoder_forward.6} parent=81 // pred_region
          %s901 = smul.u32 2, %s24
        $region110: #{transformer_decoder_forward.6} parent=81 // pred_fallthru
          _
      $region82: #{transformer_decoder_forward.6} parent=5 // pred_fallthru
        _
      %p902 = scmp.le.s32.totalorder 2, %s15
      // Predicated region
      $region111: #{transformer_decoder_forward.6} parent=5 // pred_check
        %p903 = pneg %p902
      $region112: #{transformer_decoder_forward.6} parent=5 // pred_check_branch
        %905 = sbr.rel (%p903) target = $region114
      $region113: #{transformer_decoder_forward.6} parent=5 // pred_region
        %s906 = ssub.s32 %s15, 2
        // Predicated region
        $region115: #{transformer_decoder_forward.6} parent=113 // pred_check
          %p907 = pneg %p223
        $region116: #{transformer_decoder_forward.6} parent=113 // pred_check_branch
          %909 = sbr.rel (%p907) target = $region118
        $region117: #{transformer_decoder_forward.6} parent=113 // pred_region
          %s910 = smul.u32 2, %s26
          %p911 = scmp.lt.s32.totalorder %s910, 3
          %s912 = scalar_select %p911, %s910, 3
          %s913 = smul.addr %s912, 8
          %s914 = scalar_lea.vmem %s7, %s913
        $region118: #{transformer_decoder_forward.6} parent=113 // pred_fallthru
          _
      $region114: #{transformer_decoder_forward.6} parent=5 // pred_fallthru
        _
    $region6: #{transformer_decoder_forward.6} parent=1 // loop_footer
      %s19 = sadd.s32 1, %s15
    $region7: #{transformer_decoder_forward.6} parent=1 // loop_footer_branch
      %14 = sbr.rel target = $region3
    $region8: #{transformer_decoder_forward.6} parent=1 // loop_exit
      _
    %915 = vsyncpa [#allocation5], 1
    %s916 = scalar_lea.sflag [#allocation5], 1
    %917 = vsyncpa %s916, 1
    %918 = vsyncpa [#allocation7], 1

// kernel: transformer_decoder_forward.8
$region0: #{transformer_decoder_forward.8}
  #allocation0 [shape = 'u32[]', space=smem, size = 0x4, offset = 0x4, fixed_abs, tag = 'smem constant byte address 0x4 - core index']
  #allocation1 [shape = 'u32[144,128]{1,0:T(1,128)}', space=vmem, size = 0x12000, scoped, tag = 'internal scratch']
  #allocation2 [shape = 'f32[16,128]{1,0:T(8,128)}', space=vmem, size = 0x2000, scoped, tag = 'scratch operand']
  %s0 = inlined_call_operand.vmem [shape: f32[32,128], index: 0, kind: input, shape index: {}]
  %s1 = inlined_call_operand.vmem [shape: bf16[128,512], index: 1, kind: input, shape index: {}]
  %s2 = inlined_call_operand.vmem [shape: f32[1,512], index: 2, kind: input, shape index: {}]
  %s3 = inlined_call_operand.vmem [shape: bf16[512,128], index: 3, kind: input, shape index: {}]
  %s4 = inlined_call_operand.vmem [shape: f32[1,128], index: 4, kind: input, shape index: {}]
  %s5 = inlined_call_operand.vmem [shape: f32[1,128], index: 5, kind: input, shape index: {}]
  %s6 = inlined_call_operand.vmem [shape: f32[1,128], index: 6, kind: input, shape index: {}]
  %s7 = inlined_call_operand.vmem [shape: f32[32,128], index: 7, kind: output, shape index: {}]
  %s8 = sld [smem:[#allocation0]]
  $region107: #{transformer_decoder_forward.8} parent=0
    _
  %s10 = ssub.s32 1, %s8
  %s11 = scalar_select 0, %s10, %s8
  $region1: #{transformer_decoder_forward.8} parent=0
    #allocation3 [shape = 'u8[131072]{0}', space=vmem, size = 0x20000, scoped, tag = 'input window, operand 1']
    loop: start=0, step=1, limit=6
    $region2: #{transformer_decoder_forward.8} parent=1 // loop_pre_header
      _
    $region3: #{transformer_decoder_forward.8} parent=1 // loop_header
      %s13 = sphi 0, %s17
      %p14 = scmp.ge.s32.totalorder %s13, 6
      %s20 = sphi 0, %s32
      %s21 = sphi 0, %s28
      %s22 = sphi 0, %s20
      %s23 = sphi 0, %s21
      %s24 = sphi 0, %s22
      %s25 = sphi 0, %s23
      %s35 = sphi 0, %s37
      %s38 = sphi 0, %s35
      %s39 = sphi 0, %s38
      %s55 = sphi 0, %s39
      %s61 = sphi 0, %s63
      %s64 = sphi 0, %s61
      %s65 = sphi 0, %s64
      %s81 = sphi 0, %s65
      %s87 = sphi 0, %s89
      %s90 = sphi 0, %s87
      %s91 = sphi 0, %s90
      %s107 = sphi 0, %s91
      %s113 = sphi 0, %s115
      %s116 = sphi 0, %s113
      %s117 = sphi 0, %s116
      %s133 = sphi 0, %s117
      %s137 = sphi 0, %s137
      %s139 = sphi 0, %s137
      %s140 = sphi 0, %s139
      %s154 = sphi 0, %s140
      %s158 = sphi 0, %s158
      %s160 = sphi 0, %s158
      %s161 = sphi 0, %s160
      %s175 = sphi 0, %s161
      %s179 = sphi 0, %s179
      %s181 = sphi 0, %s179
      %s182 = sphi 0, %s181
      %s196 = sphi 0, %s182
      %s202 = sphi 0, %s204
      %s205 = sphi 0, %s202
      %s206 = sphi 0, %s205
      %s222 = sphi 0, %s206
    $region4: #{transformer_decoder_forward.8} parent=1 // loop_header_branch
      %16 = sbr.rel (%p14) target = $region8
    $region5: #{transformer_decoder_forward.8} parent=1 // loop_body
      %s18 = ssub.s32 %s13, 1
      %s19 = ssub.s32 %s13, 2
      %s26 = sadd.s32 1, %s21
      %p27 = scmp.ge.s32.totalorder %s26, 2
      %s28 = scalar_select %p27, 0, %s26
      %s29 = sadd.s32 1, %s20
      %s30 = scalar_select %p27, %s29, %s20
      %p31 = scmp.ge.s32.totalorder %s30, 2
      %s32 = scalar_select %p31, 0, %s30
      %s33 = ssub.s32 %s20, %s32
      %p34 = scmp.eq.s32.totalorder %s33, 0
      %s36 = sadd.s32 %s35, 1
      %s37 = scalar_select %p34, %s35, %s36
      %p40 = pneg %p34
      %p41 = scmp.eq.s32.totalorder %s13, 3
      %p42 = por %p40, %p41
      %p43 = scmp.ne.s32.totalorder %s35, %s38
      %p44 = scmp.eq.s32.totalorder %s13, 0
      %p45 = por %p43, %p44
      %p46 = scmp.ne.s32.totalorder %s35, %s38
      %p47 = scmp.eq.s32.totalorder %s18, 3
      %p48 = por %p46, %p47
      %p49 = scmp.ne.s32.totalorder %s38, %s39
      %p50 = scmp.eq.s32.totalorder %s18, 0
      %p51 = por %p49, %p50
      %p52 = scmp.ne.s32.totalorder %s38, %s39
      %p53 = scmp.eq.s32.totalorder %s19, 3
      %p54 = por %p52, %p53
      %p56 = scmp.ne.s32.totalorder %s39, %s55
      %p57 = scmp.eq.s32.totalorder %s19, 0
      %p58 = por %p56, %p57
      %s59 = ssub.s32 %s21, %s28
      %p60 = scmp.eq.s32.totalorder %s59, 0
      %s62 = sadd.s32 %s61, 1
      %s63 = scalar_select %p60, %s61, %s62
      %p66 = pneg %p60
      %p67 = scmp.eq.s32.totalorder %s13, 3
      %p68 = por %p66, %p67
      %p69 = scmp.ne.s32.totalorder %s61, %s64
      %p70 = scmp.eq.s32.totalorder %s13, 0
      %p71 = por %p69, %p70
      %p72 = scmp.ne.s32.totalorder %s61, %s64
      %p73 = scmp.eq.s32.totalorder %s18, 3
      %p74 = por %p72, %p73
      %p75 = scmp.ne.s32.totalorder %s64, %s65
      %p76 = scmp.eq.s32.totalorder %s18, 0
      %p77 = por %p75, %p76
      %p78 = scmp.ne.s32.totalorder %s64, %s65
      %p79 = scmp.eq.s32.totalorder %s19, 3
      %p80 = por %p78, %p79
      %p82 = scmp.ne.s32.totalorder %s65, %s81
      %p83 = scmp.eq.s32.totalorder %s19, 0
      %p84 = por %p82, %p83
      %s85 = ssub.s32 %s21, %s28
      %p86 = scmp.eq.s32.totalorder %s85, 0
      %s88 = sadd.s32 %s87, 1
      %s89 = scalar_select %p86, %s87, %s88
      %p92 = pneg %p86
      %p93 = scmp.eq.s32.totalorder %s13, 3
      %p94 = por %p92, %p93
      %p95 = scmp.ne.s32.totalorder %s87, %s90
      %p96 = scmp.eq.s32.totalorder %s13, 0
      %p97 = por %p95, %p96
      %p98 = scmp.ne.s32.totalorder %s87, %s90
      %p99 = scmp.eq.s32.totalorder %s18, 3
      %p100 = por %p98, %p99
      %p101 = scmp.ne.s32.totalorder %s90, %s91
      %p102 = scmp.eq.s32.totalorder %s18, 0
      %p103 = por %p101, %p102
      %p104 = scmp.ne.s32.totalorder %s90, %s91
      %p105 = scmp.eq.s32.totalorder %s19, 3
      %p106 = por %p104, %p105
      %p108 = scmp.ne.s32.totalorder %s91, %s107
      %p109 = scmp.eq.s32.totalorder %s19, 0
      %p110 = por %p108, %p109
      %s111 = ssub.s32 %s21, %s28
      %p112 = scmp.eq.s32.totalorder %s111, 0
      %s114 = sadd.s32 %s113, 1
      %s115 = scalar_select %p112, %s113, %s114
      %p118 = pneg %p112
      %p119 = scmp.eq.s32.totalorder %s13, 3
      %p120 = por %p118, %p119
      %p121 = scmp.ne.s32.totalorder %s113, %s116
      %p122 = scmp.eq.s32.totalorder %s13, 0
      %p123 = por %p121, %p122
      %p124 = scmp.ne.s32.totalorder %s113, %s116
      %p125 = scmp.eq.s32.totalorder %s18, 3
      %p126 = por %p124, %p125
      %p127 = scmp.ne.s32.totalorder %s116, %s117
      %p128 = scmp.eq.s32.totalorder %s18, 0
      %p129 = por %p127, %p128
      %p130 = scmp.ne.s32.totalorder %s116, %s117
      %p131 = scmp.eq.s32.totalorder %s19, 3
      %p132 = por %p130, %p131
      %p134 = scmp.ne.s32.totalorder %s117, %s133
      %p135 = scmp.eq.s32.totalorder %s19, 0
      %p136 = por %p134, %p135
      %s138 = sadd.s32 %s137, 1
      %p141 = scmp.eq.s32.totalorder %s13, 3
      %p142 = scmp.ne.s32.totalorder %s137, %s139
      %p143 = scmp.eq.s32.totalorder %s13, 0
      %p144 = por %p142, %p143
      %p145 = scmp.ne.s32.totalorder %s137, %s139
      %p146 = scmp.eq.s32.totalorder %s18, 3
      %p147 = por %p145, %p146
      %p148 = scmp.ne.s32.totalorder %s139, %s140
      %p149 = scmp.eq.s32.totalorder %s18, 0
      %p150 = por %p148, %p149
      %p151 = scmp.ne.s32.totalorder %s139, %s140
      %p152 = scmp.eq.s32.totalorder %s19, 3
      %p153 = por %p151, %p152
      %p155 = scmp.ne.s32.totalorder %s140, %s154
      %p156 = scmp.eq.s32.totalorder %s19, 0
      %p157 = por %p155, %p156
      %s159 = sadd.s32 %s158, 1
      %p162 = scmp.eq.s32.totalorder %s13, 3
      %p163 = scmp.ne.s32.totalorder %s158, %s160
      %p164 = scmp.eq.s32.totalorder %s13, 0
      %p165 = por %p163, %p164
      %p166 = scmp.ne.s32.totalorder %s158, %s160
      %p167 = scmp.eq.s32.totalorder %s18, 3
      %p168 = por %p166, %p167
      %p169 = scmp.ne.s32.totalorder %s160, %s161
      %p170 = scmp.eq.s32.totalorder %s18, 0
      %p171 = por %p169, %p170
      %p172 = scmp.ne.s32.totalorder %s160, %s161
      %p173 = scmp.eq.s32.totalorder %s19, 3
      %p174 = por %p172, %p173
      %p176 = scmp.ne.s32.totalorder %s161, %s175
      %p177 = scmp.eq.s32.totalorder %s19, 0
      %p178 = por %p176, %p177
      %s180 = sadd.s32 %s179, 1
      %p183 = scmp.eq.s32.totalorder %s13, 3
      %p184 = scmp.ne.s32.totalorder %s179, %s181
      %p185 = scmp.eq.s32.totalorder %s13, 0
      %p186 = por %p184, %p185
      %p187 = scmp.ne.s32.totalorder %s179, %s181
      %p188 = scmp.eq.s32.totalorder %s18, 3
      %p189 = por %p187, %p188
      %p190 = scmp.ne.s32.totalorder %s181, %s182
      %p191 = scmp.eq.s32.totalorder %s18, 0
      %p192 = por %p190, %p191
      %p193 = scmp.ne.s32.totalorder %s181, %s182
      %p194 = scmp.eq.s32.totalorder %s19, 3
      %p195 = por %p193, %p194
      %p197 = scmp.ne.s32.totalorder %s182, %s196
      %p198 = scmp.eq.s32.totalorder %s19, 0
      %p199 = por %p197, %p198
      %s200 = ssub.s32 %s20, %s32
      %p201 = scmp.eq.s32.totalorder %s200, 0
      %s203 = sadd.s32 %s202, 1
      %s204 = scalar_select %p201, %s202, %s203
      %p207 = pneg %p201
      %p208 = scmp.eq.s32.totalorder %s13, 3
      %p209 = por %p207, %p208
      %p210 = scmp.ne.s32.totalorder %s202, %s205
      %p211 = scmp.eq.s32.totalorder %s13, 0
      %p212 = por %p210, %p211
      %p213 = scmp.ne.s32.totalorder %s202, %s205
      %p214 = scmp.eq.s32.totalorder %s18, 3
      %p215 = por %p213, %p214
      %p216 = scmp.ne.s32.totalorder %s205, %s206
      %p217 = scmp.eq.s32.totalorder %s18, 0
      %p218 = por %p216, %p217
      %p219 = scmp.ne.s32.totalorder %s205, %s206
      %p220 = scmp.eq.s32.totalorder %s19, 3
      %p221 = por %p219, %p220
      %p223 = scmp.ne.s32.totalorder %s206, %s222
      %p224 = scmp.eq.s32.totalorder %s19, 0
      %p225 = por %p223, %p224
      %p226 = scmp.le.s32.totalorder 1, %s13
      %p227 = scmp.lt.s32.totalorder %s13, 5
      %p228 = pnand %p226, %p227
      %p229 = pneg %p228
      // Predicated region
      $region9: #{transformer_decoder_forward.8} parent=5 // pred_check
        _
      $region10: #{transformer_decoder_forward.8} parent=5 // pred_check_branch
        %231 = sbr.rel (%p228) target = $region12
      $region11: #{transformer_decoder_forward.8} parent=5 // pred_region
        %s232 = ssub.s32 %s13, 1
        // Predicated region
        $region13: #{transformer_decoder_forward.8} parent=11 // pred_check
          %p233 = pneg %p150
        $region14: #{transformer_decoder_forward.8} parent=11 // pred_check_branch
          %235 = sbr.rel (%p233) target = $region16
        $region15: #{transformer_decoder_forward.8} parent=11 // pred_region
          _
        $region16: #{transformer_decoder_forward.8} parent=11 // pred_fallthru
          _
        // Predicated region
        $region17: #{transformer_decoder_forward.8} parent=11 // pred_check
          %p236 = pneg %p171
        $region18: #{transformer_decoder_forward.8} parent=11 // pred_check_branch
          %238 = sbr.rel (%p236) target = $region20
        $region19: #{transformer_decoder_forward.8} parent=11 // pred_region
          _
        $region20: #{transformer_decoder_forward.8} parent=11 // pred_fallthru
          _
        // Predicated region
        $region21: #{transformer_decoder_forward.8} parent=11 // pred_check
          %p239 = pneg %p192
        $region22: #{transformer_decoder_forward.8} parent=11 // pred_check_branch
          %241 = sbr.rel (%p239) target = $region24
        $region23: #{transformer_decoder_forward.8} parent=11 // pred_region
          _
        $region24: #{transformer_decoder_forward.8} parent=11 // pred_fallthru
          _
      $region12: #{transformer_decoder_forward.8} parent=5 // pred_fallthru
        _
      %p242 = scmp.lt.s32.totalorder %s13, 4
      // Predicated region
      $region25: #{transformer_decoder_forward.8} parent=5 // pred_check
        %p243 = pneg %p242
      $region26: #{transformer_decoder_forward.8} parent=5 // pred_check_branch
        %245 = sbr.rel (%p243) target = $region28
      $region27: #{transformer_decoder_forward.8} parent=5 // pred_region
        // Predicated region
        $region29: #{transformer_decoder_forward.8} parent=27 // pred_check
          %p246 = pneg %p45
        $region30: #{transformer_decoder_forward.8} parent=27 // pred_check_branch
          %248 = sbr.rel (%p246) target = $region32
        $region31: #{transformer_decoder_forward.8} parent=27 // pred_region
          %s249 = smul.u32 2, %s20
          %p250 = scmp.lt.s32.totalorder %s249, 3
          %s251 = scalar_select %p250, %s249, 3
          %s252 = smul.addr %s251, 8
          %s253 = scalar_lea.vmem %s0, %s252
          %s254 = smul.u32 2, %s20
        $region32: #{transformer_decoder_forward.8} parent=27 // pred_fallthru
          _
        // Predicated region
        $region33: #{transformer_decoder_forward.8} parent=27 // pred_check
          %p255 = pneg %p71
        $region34: #{transformer_decoder_forward.8} parent=27 // pred_check_branch
          %257 = sbr.rel (%p255) target = $region36
        $region35: #{transformer_decoder_forward.8} parent=27 // pred_region
          %s258 = sand.u32 %s61, 1
          %s259 = sand.u32 %s61, 1
          %s260 = smul.addr %s259, 128
          %s261 = scalar_lea.vmem [#allocation3], %s260
          %s262 = smul.u32 2, %s21
          %s263 = smul.addr %s262, 4
          %s264 = scalar_lea.vmem %s1, %s263
          // Predicated region
          $region37: #{transformer_decoder_forward.8} parent=35 // pred_check
            _
          $region38: #{transformer_decoder_forward.8} parent=35 // pred_check_branch
            %266 = sbr.rel (0) target = $region40
          $region39: #{transformer_decoder_forward.8} parent=35 // pred_region
            // Predicated region
            $region41: #{transformer_decoder_forward.8} parent=39 // pred_check
              _
            $region42: #{transformer_decoder_forward.8} parent=39 // pred_check_branch
              %268 = sbr.rel (0) target = $region44
            $region43: #{transformer_decoder_forward.8} parent=39 // pred_region
              // Predicated region
              $region56: #{transformer_decoder_forward.8} parent=43 // pred_check
                _
              $region57: #{transformer_decoder_forward.8} parent=43 // pred_check_branch
                %313 = sbr.rel (0) target = $region59
              $region58: #{transformer_decoder_forward.8} parent=43 // pred_region
                loop: start=0, step=1, limit=1
                $region60: #{transformer_decoder_forward.8} parent=58 // loop_pre_header
                  _
                $region61: #{transformer_decoder_forward.8} parent=58 // loop_header
                  %s315 = sphi 0, %s319
                  %p316 = scmp.ge.s32.totalorder %s315, 1
                  %s320 = sphi %s264, %s264
                  %s321 = sphi %s261, %s261
                $region62: #{transformer_decoder_forward.8} parent=58 // loop_header_branch
                  %318 = sbr.rel (%p316) target = $region66
                $region63: #{transformer_decoder_forward.8} parent=58 // loop_body
                  %v322 = vld [vmem:[%s320] sm:$0xff]
                  %323 = vst [vmem:[%s321] sm:$0xff] %v322
                  %v324 = vld [vmem:[%s320 + $0x10] sm:$0xff]
                  %325 = vst [vmem:[%s321 + $0x8] sm:$0xff] %v324
                  %v326 = vld [vmem:[%s320 + $0x20] sm:$0xff]
                  %327 = vst [vmem:[%s321 + $0x10] sm:$0xff] %v326
                  %v328 = vld [vmem:[%s320 + $0x30] sm:$0xff]
                  %329 = vst [vmem:[%s321 + $0x18] sm:$0xff] %v328
                  %v330 = vld [vmem:[%s320 + $0x40] sm:$0xff]
                  %331 = vst [vmem:[%s321 + $0x20] sm:$0xff] %v330
                  %v332 = vld [vmem:[%s320 + $0x50] sm:$0xff]
                  %333 = vst [vmem:[%s321 + $0x28] sm:$0xff] %v332
                  %v334 = vld [vmem:[%s320 + $0x60] sm:$0xff]
                  %335 = vst [vmem:[%s321 + $0x30] sm:$0xff] %v334
                  %v336 = vld [vmem:[%s320 + $0x70] sm:$0xff]
                  %337 = vst [vmem:[%s321 + $0x38] sm:$0xff] %v336
                  %v338 = vld [vmem:[%s320 + $0x80] sm:$0xff]
                  %339 = vst [vmem:[%s321 + $0x40] sm:$0xff] %v338
                  %v340 = vld [vmem:[%s320 + $0x90] sm:$0xff]
                  %341 = vst [vmem:[%s321 + $0x48] sm:$0xff] %v340
                  %v342 = vld [vmem:[%s320 + $0xa0] sm:$0xff]
                  %343 = vst [vmem:[%s321 + $0x50] sm:$0xff] %v342
                  %v344 = vld [vmem:[%s320 + $0xb0] sm:$0xff]
                  %345 = vst [vmem:[%s321 + $0x58] sm:$0xff] %v344
                  %v346 = vld [vmem:[%s320 + $0xc0] sm:$0xff]
                  %347 = vst [vmem:[%s321 + $0x60] sm:$0xff] %v346
                  %v348 = vld [vmem:[%s320 + $0xd0] sm:$0xff]
                  %349 = vst [vmem:[%s321 + $0x68] sm:$0xff] %v348
                  %v350 = vld [vmem:[%s320 + $0xe0] sm:$0xff]
                  %351 = vst [vmem:[%s321 + $0x70] sm:$0xff] %v350
                  %v352 = vld [vmem:[%s320 + $0xf0] sm:$0xff]
                  %353 = vst [vmem:[%s321 + $0x78] sm:$0xff] %v352
                $region64: #{transformer_decoder_forward.8} parent=58 // loop_footer
                  %s319 = sadd.s32 1, %s315
                $region65: #{transformer_decoder_forward.8} parent=58 // loop_footer_branch
                  %314 = sbr.rel target = $region61
                $region66: #{transformer_decoder_forward.8} parent=58 // loop_exit
                  _
              $region59: #{transformer_decoder_forward.8} parent=43 // pred_fallthru
                _
              // Predicated region
              $region67: #{transformer_decoder_forward.8} parent=43 // pred_check
                _
              $region68: #{transformer_decoder_forward.8} parent=43 // pred_check_branch
                %355 = sbr.rel target = $region70
              $region69: #{transformer_decoder_forward.8} parent=43 // pred_region
                _
              $region70: #{transformer_decoder_forward.8} parent=43 // pred_fallthru
                _
            $region44: #{transformer_decoder_forward.8} parent=39 // pred_fallthru
              _
            // Predicated region
            $region45: #{transformer_decoder_forward.8} parent=39 // pred_check
              _
            $region46: #{transformer_decoder_forward.8} parent=39 // pred_check_branch
              %270 = sbr.rel target = $region48
            $region47: #{transformer_decoder_forward.8} parent=39 // pred_region
              loop: start=0, step=1, limit=1
              $region49: #{transformer_decoder_forward.8} parent=47 // loop_pre_header
                _
              $region50: #{transformer_decoder_forward.8} parent=47 // loop_header
                %s273 = sphi 0, %s277
                %p274 = scmp.ge.s32.totalorder %s273, 1
                %s278 = sphi %s264, %s264
                %s279 = sphi %s261, %s261
              $region51: #{transformer_decoder_forward.8} parent=47 // loop_header_branch
                %276 = sbr.rel (%p274) target = $region55
              $region52: #{transformer_decoder_forward.8} parent=47 // loop_body
                %v280 = vld [vmem:[%s278] sm:$0xff]
                %281 = vst [vmem:[%s279] sm:$0xff] %v280
                %v282 = vld [vmem:[%s278 + $0x10] sm:$0xff]
                %283 = vst [vmem:[%s279 + $0x8] sm:$0xff] %v282
                %v284 = vld [vmem:[%s278 + $0x20] sm:$0xff]
                %285 = vst [vmem:[%s279 + $0x10] sm:$0xff] %v284
                %v286 = vld [vmem:[%s278 + $0x30] sm:$0xff]
                %287 = vst [vmem:[%s279 + $0x18] sm:$0xff] %v286
                %v288 = vld [vmem:[%s278 + $0x40] sm:$0xff]
                %289 = vst [vmem:[%s279 + $0x20] sm:$0xff] %v288
                %v290 = vld [vmem:[%s278 + $0x50] sm:$0xff]
                %291 = vst [vmem:[%s279 + $0x28] sm:$0xff] %v290
                %v292 = vld [vmem:[%s278 + $0x60] sm:$0xff]
                %293 = vst [vmem:[%s279 + $0x30] sm:$0xff] %v292
                %v294 = vld [vmem:[%s278 + $0x70] sm:$0xff]
                %295 = vst [vmem:[%s279 + $0x38] sm:$0xff] %v294
                %v296 = vld [vmem:[%s278 + $0x80] sm:$0xff]
                %297 = vst [vmem:[%s279 + $0x40] sm:$0xff] %v296
                %v298 = vld [vmem:[%s278 + $0x90] sm:$0xff]
                %299 = vst [vmem:[%s279 + $0x48] sm:$0xff] %v298
                %v300 = vld [vmem:[%s278 + $0xa0] sm:$0xff]
                %301 = vst [vmem:[%s279 + $0x50] sm:$0xff] %v300
                %v302 = vld [vmem:[%s278 + $0xb0] sm:$0xff]
                %303 = vst [vmem:[%s279 + $0x58] sm:$0xff] %v302
                %v304 = vld [vmem:[%s278 + $0xc0] sm:$0xff]
                %305 = vst [vmem:[%s279 + $0x60] sm:$0xff] %v304
                %v306 = vld [vmem:[%s278 + $0xd0] sm:$0xff]
                %307 = vst [vmem:[%s279 + $0x68] sm:$0xff] %v306
                %v308 = vld [vmem:[%s278 + $0xe0] sm:$0xff]
                %309 = vst [vmem:[%s279 + $0x70] sm:$0xff] %v308
                %v310 = vld [vmem:[%s278 + $0xf0] sm:$0xff]
                %311 = vst [vmem:[%s279 + $0x78] sm:$0xff] %v310
              $region53: #{transformer_decoder_forward.8} parent=47 // loop_footer
                %s277 = sadd.s32 1, %s273
              $region54: #{transformer_decoder_forward.8} parent=47 // loop_footer_branch
                %272 = sbr.rel target = $region50
              $region55: #{transformer_decoder_forward.8} parent=47 // loop_exit
                _
            $region48: #{transformer_decoder_forward.8} parent=39 // pred_fallthru
              _
          $region40: #{transformer_decoder_forward.8} parent=35 // pred_fallthru
            _
          %356 = vnop
        $region36: #{transformer_decoder_forward.8} parent=27 // pred_fallthru
          _
        // Predicated region
        $region71: #{transformer_decoder_forward.8} parent=27 // pred_check
          %p357 = pneg %p97
        $region72: #{transformer_decoder_forward.8} parent=27 // pred_check_branch
          %359 = sbr.rel (%p357) target = $region74
        $region73: #{transformer_decoder_forward.8} parent=27 // pred_region
          %s360 = smul.u32 2, %s21
          %p361 = scmp.lt.s32.totalorder %s360, 3
          %s362 = scalar_select %p361, %s360, 3
          %s363 = scalar_lea.vmem %s2, %s362
          %s364 = smul.u32 2, %s21
        $region74: #{transformer_decoder_forward.8} parent=27 // pred_fallthru
          _
        // Predicated region
        $region75: #{transformer_decoder_forward.8} parent=27 // pred_check
          %p365 = pneg %p123
        $region76: #{transformer_decoder_forward.8} parent=27 // pred_check_branch
          %367 = sbr.rel (%p365) target = $region78
        $region77: #{transformer_decoder_forward.8} parent=27 // pred_region
          %s368 = smul.u32 32, %s21
          %p369 = scmp.lt.s32.totalorder %s368, 63
          %s370 = scalar_select %p369, %s368, 63
          %s371 = smul.addr %s370, 4
          %s372 = scalar_lea.vmem %s3, %s371
          %s373 = smul.u32 32, %s21
        $region78: #{transformer_decoder_forward.8} parent=27 // pred_fallthru
          _
      $region28: #{transformer_decoder_forward.8} parent=5 // pred_fallthru
        _
      %p374 = scmp.le.s32.totalorder 1, %s13
      %p375 = scmp.lt.s32.totalorder %s13, 5
      %p376 = pnand %p374, %p375
      %p377 = pneg %p376
      // Predicated region
      $region79: #{transformer_decoder_forward.8} parent=5 // pred_check
        _
      $region80: #{transformer_decoder_forward.8} parent=5 // pred_check_branch
        %379 = sbr.rel (%p376) target = $region82
      $region81: #{transformer_decoder_forward.8} parent=5 // pred_region
        %s380 = ssub.s32 %s13, 1
        %s381 = sand.u32 %s64, 1
        %s382 = sand.u32 %s64, 1
        %s383 = smul.addr %s382, 128
        %s384 = scalar_lea.vmem [#allocation3], %s383
        // Predicated region
        $region83: #{transformer_decoder_forward.8} parent=81 // pred_check
          %p385 = pneg %p77
        $region84: #{transformer_decoder_forward.8} parent=81 // pred_check_branch
          %387 = sbr.rel (%p385) target = $region86
        $region85: #{transformer_decoder_forward.8} parent=81 // pred_region
          _
        $region86: #{transformer_decoder_forward.8} parent=81 // pred_fallthru
          _
        %s388 = smul.u32 2, %s22
        %p389 = scmp.lt.s32.totalorder %s388, 3
        %s390 = scalar_select %p389, %s388, 3
        %s391 = smul.addr %s390, 8
        %s392 = scalar_lea.vmem %s0, %s391
        %p393 = pneg %p51
        %p394 = pneg %p48
        %s395 = sand.u32 %s64, 1
        %s396 = sand.u32 %s64, 1
        %s397 = smul.addr %s396, 128
        %s398 = scalar_lea.vmem [#allocation3], %s397
        %p399 = pneg %p77
        %p400 = pneg %p74
        %s401 = smul.u32 2, %s23
        %p402 = scmp.lt.s32.totalorder %s401, 3
        %s403 = scalar_select %p402, %s401, 3
        %s404 = scalar_lea.vmem %s2, %s403
        %p405 = pneg %p103
        %p406 = pneg %p100
        %s407 = smul.u32 32, %s23
        %p408 = scmp.lt.s32.totalorder %s407, 63
        %s409 = scalar_select %p408, %s407, 63
        %s410 = smul.addr %s409, 4
        %s411 = scalar_lea.vmem %s3, %s410
        %p412 = pneg %p129
        %p413 = pneg %p126
        %p414 = pneg %p150
        %p415 = pneg %p147
        %p416 = pneg %p171
        %p417 = pneg %p168
        %p418 = pneg %p192
        %p419 = pneg %p189
        %p420 = pneg %p218
        %p421 = pneg %p215
        %s422 = smul.u32 2, %s22
        %p423 = scmp.lt.s32.totalorder %s422, 3
        %s424 = scalar_select %p423, %s422, 3
        %s425 = smul.addr %s424, 8
        %s426 = scalar_lea.vmem %s7, %s425
        %s427 = smul.u32 2, %s22
        %p428 = scmp.lt.s32.totalorder %s427, 3
        %s429 = scalar_select %p428, %s427, 3
        %s430 = smul.addr %s429, 8
        %s431 = scalar_lea.vmem %s0, %s430
        %s432 = smul.u32 2, %s22
        %s433 = smul.u32 2, %s23
        %s434 = smul.u32 2, %s23
        %p435 = scmp.lt.s32.totalorder %s434, 3
        %s436 = scalar_select %p435, %s434, 3
        %s437 = scalar_lea.vmem %s2, %s436
        %s438 = smul.u32 2, %s23
        %s439 = smul.u32 32, %s23
        %p440 = scmp.lt.s32.totalorder %s439, 63
        %s441 = scalar_select %p440, %s439, 63
        %s442 = smul.addr %s441, 4
        %s443 = scalar_lea.vmem %s3, %s442
        %s444 = smul.u32 32, %s23
        %s445 = smul.u32 2, %s22
        %p446 = scmp.lt.s32.totalorder %s445, 3
        %s447 = scalar_select %p446, %s445, 3
        %s448 = smul.addr %s447, 8
        %s449 = scalar_lea.vmem %s7, %s448
        %s450 = smul.u32 2, %s22
        %p452 = scmp.eq.s32.totalorder %s23, 0
        // Predicated region
        $region87: #{transformer_decoder_forward.8} parent=81 // pred_check
          %p453 = pneg %p452
        $region88: #{transformer_decoder_forward.8} parent=81 // pred_check_branch
          %455 = sbr.rel (%p453) target = $region90
        $region89: #{transformer_decoder_forward.8} parent=81 // pred_region
          %456 = vst [vmem:[#allocation2] sm:$0xff] 0.0
          %457 = vst [vmem:[#allocation2 + $0x8] sm:$0xff] 0.0
        $region90: #{transformer_decoder_forward.8} parent=81 // pred_fallthru
          _
        %v458 = vld [vmem:[%s431] sm:$0xff]
        %v459 = vld [vmem:[%s431 + $0x8] sm:$0xff]
        %v460 = vpack.c.bf16 %v459, %v458
        %v461 = vld [vmem:[%s384] sm:$0xff]
        %v462 = vld [vmem:[%s384 + $0x8] sm:$0xff]
        %v463 = vld [vmem:[%s384 + $0x10] sm:$0xff]
        %v464 = vld [vmem:[%s384 + $0x18] sm:$0xff]
        %v465 = vld [vmem:[%s384 + $0x20] sm:$0xff]
        %v466 = vld [vmem:[%s384 + $0x28] sm:$0xff]
        %v467 = vld [vmem:[%s384 + $0x30] sm:$0xff]
        %v468 = vld [vmem:[%s384 + $0x38] sm:$0xff]
        %v469 = vld [vmem:[%s384 + $0x40] sm:$0xff]
        %v470 = vld [vmem:[%s384 + $0x48] sm:$0xff]
        %v471 = vld [vmem:[%s384 + $0x50] sm:$0xff]
        %v472 = vld [vmem:[%s384 + $0x58] sm:$0xff]
        %v473 = vld [vmem:[%s384 + $0x60] sm:$0xff]
        %v474 = vld [vmem:[%s384 + $0x68] sm:$0xff]
        %v475 = vld [vmem:[%s384 + $0x70] sm:$0xff]
        %v476 = vld [vmem:[%s384 + $0x78] sm:$0xff]
        %v477 = vld [vmem:[%s437] sm:$0x3]
        %v479 = vlaneseq
        %v480 = vshrl.u32 %v479, 7
        %v481 = vsub.s32 0, %v480
        %v482 = vrot.slane %v477, %v481
        %v483 = vlaneseq
        %v484 = vshrl.u32 %v483, 7
        %v485 = vsub.s32 1, %v484
        %v486 = vrot.slane %v477, %v485
        %v505 = vunpack.c.l.b16 %v461
        %v506 = vunpack.c.h.b16 %v461
        %v507 = vunpack.c.l.b16 %v462
        %v508 = vunpack.c.h.b16 %v462
        %v509 = vunpack.c.l.b16 %v463
        %v510 = vunpack.c.h.b16 %v463
        %v511 = vunpack.c.l.b16 %v464
        %v512 = vunpack.c.h.b16 %v464
        %v513 = vunpack.c.l.b16 %v465
        %v514 = vunpack.c.h.b16 %v465
        %v515 = vunpack.c.l.b16 %v466
        %v516 = vunpack.c.h.b16 %v466
        %v517 = vunpack.c.l.b16 %v467
        %v518 = vunpack.c.h.b16 %v467
        %v519 = vunpack.c.l.b16 %v468
        %v520 = vunpack.c.h.b16 %v468
        %v521 = vunpack.c.l.b16 %v469
        %v522 = vunpack.c.h.b16 %v469
        %v523 = vunpack.c.l.b16 %v470
        %v524 = vunpack.c.h.b16 %v470
        %v525 = vunpack.c.l.b16 %v471
        %v526 = vunpack.c.h.b16 %v471
        %v527 = vunpack.c.l.b16 %v472
        %v528 = vunpack.c.h.b16 %v472
        %v529 = vunpack.c.l.b16 %v473
        %v530 = vunpack.c.h.b16 %v473
        %v531 = vunpack.c.l.b16 %v474
        %v532 = vunpack.c.h.b16 %v474
        %v533 = vunpack.c.l.b16 %v475
        %v534 = vunpack.c.h.b16 %v475
        %v535 = vunpack.c.l.b16 %v476
        %v536 = vunpack.c.h.b16 %v476
        %v537 = vpack.c.b16 %v507, %v505
        %v538 = vpack.c.b16 %v508, %v506
        %v539 = vpack.c.b16 %v511, %v509
        %v540 = vpack.c.b16 %v512, %v510
        %v541 = vpack.c.b16 %v515, %v513
        %v542 = vpack.c.b16 %v516, %v514
        %v543 = vpack.c.b16 %v519, %v517
        %v544 = vpack.c.b16 %v520, %v518
        %v545 = vpack.c.b16 %v523, %v521
        %v546 = vpack.c.b16 %v524, %v522
        %v547 = vpack.c.b16 %v527, %v525
        %v548 = vpack.c.b16 %v528, %v526
        %v549 = vpack.c.b16 %v531, %v529
        %v550 = vpack.c.b16 %v532, %v530
        %v551 = vpack.c.b16 %v535, %v533
        %v552 = vpack.c.b16 %v536, %v534
        %569 = vmatprep.subr.bf16.mxu0 %v538
        %570 = vmatpush1.bf16.msra.mxu0 %v537
        %571 = vmatprep.subr.bf16.mxu0 %v540
        %572 = vmatpush1.bf16.msra.mxu0 %v539
        %573 = vmatprep.subr.bf16.mxu0 %v542
        %574 = vmatpush1.bf16.msra.mxu0 %v541
        %575 = vmatprep.subr.bf16.mxu0 %v544
        %576 = vmatpush1.bf16.msra.mxu0 %v543
        %577 = vmatprep.subr.bf16.mxu0 %v546
        %578 = vmatpush1.bf16.msra.mxu0 %v545
        %579 = vmatprep.subr.bf16.mxu0 %v548
        %580 = vmatpush1.bf16.msra.mxu0 %v547
        %581 = vmatprep.subr.bf16.mxu0 %v550
        %582 = vmatpush1.bf16.msra.mxu0 %v549
        %583 = vmatprep.subr.bf16.mxu0 %v552
        %584 = vmatpush1.bf16.msra.mxu0 %v551
        %585 = vmatprep.subr.bf16.mxu0 0
        %586 = vmatpush1.bf16.msra.mxu0 0
        %587 = vmatprep.subr.bf16.mxu0 0
        %588 = vmatpush1.bf16.msra.mxu0 0
        %589 = vmatprep.subr.bf16.mxu0 0
        %590 = vmatpush1.bf16.msra.mxu0 0
        %591 = vmatprep.subr.bf16.mxu0 0
        %592 = vmatpush1.bf16.msra.mxu0 0
        %593 = vmatprep.subr.bf16.mxu0 0
        %594 = vmatpush1.bf16.msra.mxu0 0
        %595 = vmatprep.subr.bf16.mxu0 0
        %596 = vmatpush1.bf16.msra.mxu0 0
        %597 = vmatprep.subr.bf16.mxu0 0
        %598 = vmatpush1.bf16.msra.mxu0 0
        %599 = vmatprep.subr.bf16.mxu0 0
        %600 = vmatpush1.bf16.msra.mxu0 0
        %601 = vmatprep.mubr.bf16.mxu0 0
        %602 = vmatmul.mubr.bf16.gmra.mrb[0].mxu0 %v460
        %v603 = vpop.f32.mrb[0].mxu0
        %v604 = vadd.f32 %v482, %v603
        %v605 = vpop.f32.mrb[0].mxu0
        %v606 = vadd.f32 %v486, %v605
        %v607 = vpop.f32.mrb[0].mxu0
        %v608 = vadd.f32 %v482, %v607
        %v609 = vpop.f32.mrb[0].mxu0
        %v610 = vadd.f32 %v486, %v609
        %611 = vdwg.mxu0
        %v612 = vmax.f32 %v604, 0.0
        %v613 = vmax.f32 %v606, 0.0
        %v614 = vmax.f32 %v608, 0.0
        %v615 = vmax.f32 %v610, 0.0
        %v616 = vld [vmem:[#allocation2] sm:$0xff]
        %v617 = vld [vmem:[#allocation2 + $0x8] sm:$0xff]
        %v618 = vpack.c.bf16 %v614, %v612
        %v619 = vpack.c.bf16 %v615, %v613
        %v620 = vld [vmem:[%s443] sm:$0xf]
        %v621 = vld [vmem:[%s443 + $0x4] sm:$0xf]
        %v622 = vld [vmem:[%s443 + $0x8] sm:$0xf]
        %v623 = vld [vmem:[%s443 + $0xc] sm:$0xf]
        %v624 = vld [vmem:[%s443 + $0x10] sm:$0xf]
        %v625 = vld [vmem:[%s443 + $0x14] sm:$0xf]
        %v626 = vld [vmem:[%s443 + $0x18] sm:$0xf]
        %v627 = vld [vmem:[%s443 + $0x1c] sm:$0xf]
        %v628 = vld [vmem:[%s443 + $0x20] sm:$0xf]
        %v629 = vld [vmem:[%s443 + $0x24] sm:$0xf]
        %v630 = vld [vmem:[%s443 + $0x28] sm:$0xf]
        %v631 = vld [vmem:[%s443 + $0x2c] sm:$0xf]
        %v632 = vld [vmem:[%s443 + $0x30] sm:$0xf]
        %v633 = vld [vmem:[%s443 + $0x34] sm:$0xf]
        %v634 = vld [vmem:[%s443 + $0x38] sm:$0xf]
        %v635 = vld [vmem:[%s443 + $0x3c] sm:$0xf]
        %v636 = vld [vmem:[%s443 + $0x40] sm:$0xf]
        %v637 = vld [vmem:[%s443 + $0x44] sm:$0xf]
        %v638 = vld [vmem:[%s443 + $0x48] sm:$0xf]
        %v639 = vld [vmem:[%s443 + $0x4c] sm:$0xf]
        %v640 = vld [vmem:[%s443 + $0x50] sm:$0xf]
        %v641 = vld [vmem:[%s443 + $0x54] sm:$0xf]
        %v642 = vld [vmem:[%s443 + $0x58] sm:$0xf]
        %v643 = vld [vmem:[%s443 + $0x5c] sm:$0xf]
        %v644 = vld [vmem:[%s443 + $0x60] sm:$0xf]
        %v645 = vld [vmem:[%s443 + $0x64] sm:$0xf]
        %v646 = vld [vmem:[%s443 + $0x68] sm:$0xf]
        %v647 = vld [vmem:[%s443 + $0x6c] sm:$0xf]
        %v648 = vld [vmem:[%s443 + $0x70] sm:$0xf]
        %v649 = vld [vmem:[%s443 + $0x74] sm:$0xf]
        %v650 = vld [vmem:[%s443 + $0x78] sm:$0xf]
        %v651 = vld [vmem:[%s443 + $0x7c] sm:$0xf]
        %v684 = vunpack.c.l.b16 %v620
        %v685 = vunpack.c.l.b16 %v621
        %v686 = vunpack.c.l.b16 %v622
        %v687 = vunpack.c.l.b16 %v623
        %v688 = vunpack.c.l.b16 %v624
        %v689 = vunpack.c.l.b16 %v625
        %v690 = vunpack.c.l.b16 %v626
        %v691 = vunpack.c.l.b16 %v627
        %v692 = vunpack.c.l.b16 %v628
        %v693 = vunpack.c.l.b16 %v629
        %v694 = vunpack.c.l.b16 %v630
        %v695 = vunpack.c.l.b16 %v631
        %v696 = vunpack.c.l.b16 %v632
        %v697 = vunpack.c.l.b16 %v633
        %v698 = vunpack.c.l.b16 %v634
        %v699 = vunpack.c.l.b16 %v635
        %v700 = vunpack.c.l.b16 %v636
        %v701 = vunpack.c.l.b16 %v637
        %v702 = vunpack.c.l.b16 %v638
        %v703 = vunpack.c.l.b16 %v639
        %v704 = vunpack.c.l.b16 %v640
        %v705 = vunpack.c.l.b16 %v641
        %v706 = vunpack.c.l.b16 %v642
        %v707 = vunpack.c.l.b16 %v643
        %v708 = vunpack.c.l.b16 %v644
        %v709 = vunpack.c.l.b16 %v645
        %v710 = vunpack.c.l.b16 %v646
        %v711 = vunpack.c.l.b16 %v647
        %v712 = vunpack.c.l.b16 %v648
        %v713 = vunpack.c.l.b16 %v649
        %v714 = vunpack.c.l.b16 %v650
        %v715 = vunpack.c.l.b16 %v651
        %v716 = vpack.c.b16 %v685, %v684
        %v717 = vpack.c.b16 %v687, %v686
        %v718 = vpack.c.b16 %v689, %v688
        %v719 = vpack.c.b16 %v691, %v690
        %v720 = vpack.c.b16 %v693, %v692
        %v721 = vpack.c.b16 %v695, %v694
        %v722 = vpack.c.b16 %v697, %v696
        %v723 = vpack.c.b16 %v699, %v698
        %v724 = vpack.c.b16 %v701, %v700
        %v725 = vpack.c.b16 %v703, %v702
        %v726 = vpack.c.b16 %v705, %v704
        %v727 = vpack.c.b16 %v707, %v706
        %v728 = vpack.c.b16 %v709, %v708
        %v729 = vpack.c.b16 %v711, %v710
        %v730 = vpack.c.b16 %v713, %v712
        %v731 = vpack.c.b16 %v715, %v714
        %748 = vmatprep.subr.bf16.mxu0 0
        %749 = vmatpush1.bf16.msra.mxu0 %v716
        %750 = vmatprep.subr.bf16.mxu0 0
        %751 = vmatpush1.bf16.msra.mxu0 %v717
        %752 = vmatprep.subr.bf16.mxu0 0
        %753 = vmatpush1.bf16.msra.mxu0 %v718
        %754 = vmatprep.subr.bf16.mxu0 0
        %755 = vmatpush1.bf16.msra.mxu0 %v719
        %756 = vmatprep.subr.bf16.mxu0 0
        %757 = vmatpush1.bf16.msra.mxu0 %v720
        %758 = vmatprep.subr.bf16.mxu0 0
        %759 = vmatpush1.bf16.msra.mxu0 %v721
        %760 = vmatprep.subr.bf16.mxu0 0
        %761 = vmatpush1.bf16.msra.mxu0 %v722
        %762 = vmatprep.subr.bf16.mxu0 0
        %763 = vmatpush1.bf16.msra.mxu0 %v723
        %764 = vmatprep.subr.bf16.mxu0 0
        %765 = vmatpush1.bf16.msra.mxu0 %v724
        %766 = vmatprep.subr.bf16.mxu0 0
        %767 = vmatpush1.bf16.msra.mxu0 %v725
        %768 = vmatprep.subr.bf16.mxu0 0
        %769 = vmatpush1.bf16.msra.mxu0 %v726
        %770 = vmatprep.subr.bf16.mxu0 0
        %771 = vmatpush1.bf16.msra.mxu0 %v727
        %772 = vmatprep.subr.bf16.mxu0 0
        %773 = vmatpush1.bf16.msra.mxu0 %v728
        %774 = vmatprep.subr.bf16.mxu0 0
        %775 = vmatpush1.bf16.msra.mxu0 %v729
        %776 = vmatprep.subr.bf16.mxu0 0
        %777 = vmatpush1.bf16.msra.mxu0 %v730
        %778 = vmatprep.subr.bf16.mxu0 0
        %779 = vmatpush1.bf16.msra.mxu0 %v731
        %780 = vmatprep.mubr.bf16.mxu0 %v619
        %781 = vmatmul.mubr.bf16.gmra.mrb[0].mxu0 %v618
        %v782 = vpop.f32.mrb[0].mxu0
        %v783 = vadd.f32 0.0, %v782
        %v784 = vpop.f32.mrb[0].mxu0
        %v785 = vpop.f32.mrb[0].mxu0
        %v786 = vadd.f32 0.0, %v785
        %v787 = vpop.f32.mrb[0].mxu0
        %788 = vdwg.mxu0
        %v789 = vadd.f32 %v616, %v783
        %v790 = vadd.f32 %v617, %v786
        %791 = vst [vmem:[#allocation2] sm:$0xff] %v789
        %792 = vst [vmem:[#allocation2 + $0x8] sm:$0xff] %v790
        %p793 = scmp.eq.s32.totalorder %s23, 1
        // Predicated region
        $region91: #{transformer_decoder_forward.8} parent=81 // pred_check
          %p794 = pneg %p793
        $region92: #{transformer_decoder_forward.8} parent=81 // pred_check_branch
          %796 = sbr.rel (%p794) target = $region94
        $region93: #{transformer_decoder_forward.8} parent=81 // pred_region
          %v797 = vld [vmem:[%s431] sm:$0xff]
          %v798 = vld [vmem:[%s431 + $0x8] sm:$0xff]
          %v799 = vld [vmem:[#allocation2] sm:$0xff]
          %v800 = vld [vmem:[#allocation2 + $0x8] sm:$0xff]
          %v801 = vadd.f32 %v797, %v799
          %v802 = vadd.f32 %v798, %v800
          %v803 = vld [vmem:[%s4] sm:$0x1]
          %v805 = vlaneseq
          %v806 = vshrl.u32 %v805, 7
          %v807 = vsub.s32 0, %v806
          %v808 = vrot.slane %v803, %v807
          %v810 = vadd.f32 %v801, %v808
          %v811 = vadd.f32 %v802, %v808
          %812 = vadd.xlane.f32.xlu0 %v810
          %v813 = vpop.xlane.xlu0 %812
          %814 = vadd.xlane.f32.xlu0 %v811
          %v815 = vpop.xlane.xlu0 %814
          %v816 = vrcp.pop 128.0
          %v817 = vmul.f32 %v813, %v816
          %v818 = vmul.f32 %v815, %v816
          %v819 = vsub.f32 %v810, %v817
          %v820 = vsub.f32 %v811, %v818
          %v821 = vmul.f32 %v819, %v819
          %v822 = vmul.f32 %v820, %v820
          %823 = vadd.xlane.f32.xlu0 %v821
          %v824 = vpop.xlane.xlu0 %823
          %825 = vadd.xlane.f32.xlu0 %v822
          %v826 = vpop.xlane.xlu0 %825
          %v827 = vmul.f32 %v824, %v816
          %v828 = vmul.f32 %v826, %v816
          %v829 = vadd.f32 %v827, 1e-05
          %v830 = vadd.f32 %v828, 1e-05
          %v831 = vrsqrt.pop %v829
          %v832 = vrsqrt.pop %v830
          %v833 = vmul.f32 %v819, %v831
          %v834 = vmul.f32 %v820, %v832
          %v835 = vld [vmem:[%s5] sm:$0x1]
          %v837 = vlaneseq
          %v838 = vshrl.u32 %v837, 7
          %v839 = vsub.s32 0, %v838
          %v840 = vrot.slane %v835, %v839
          %v842 = vmul.f32 %v833, %v840
          %v843 = vmul.f32 %v834, %v840
          %v844 = vld [vmem:[%s6] sm:$0x1]
          %v846 = vlaneseq
          %v847 = vshrl.u32 %v846, 7
          %v848 = vsub.s32 0, %v847
          %v849 = vrot.slane %v844, %v848
          %v851 = vadd.f32 %v842, %v849
          %v852 = vadd.f32 %v843, %v849
          %853 = vst [vmem:[%s449] sm:$0xff] %v851
          %854 = vst [vmem:[%s449 + $0x8] sm:$0xff] %v852
        $region94: #{transformer_decoder_forward.8} parent=81 // pred_fallthru
          _
        %s855 = smul.u32 2, %s22
        %p856 = scmp.lt.s32.totalorder %s855, 3
        %s857 = scalar_select %p856, %s855, 3
        %s858 = smul.addr %s857, 8
        %s859 = scalar_lea.vmem %s7, %s858
        // Predicated region
        $region95: #{transformer_decoder_forward.8} parent=81 // pred_check
          %p860 = pneg %p215
        $region96: #{transformer_decoder_forward.8} parent=81 // pred_check_branch
          %862 = sbr.rel (%p860) target = $region98
        $region97: #{transformer_decoder_forward.8} parent=81 // pred_region
          %s863 = smul.u32 2, %s22
        $region98: #{transformer_decoder_forward.8} parent=81 // pred_fallthru
          _
      $region82: #{transformer_decoder_forward.8} parent=5 // pred_fallthru
        _
      %p864 = scmp.le.s32.totalorder 2, %s13
      // Predicated region
      $region99: #{transformer_decoder_forward.8} parent=5 // pred_check
        %p865 = pneg %p864
      $region100: #{transformer_decoder_forward.8} parent=5 // pred_check_branch
        %867 = sbr.rel (%p865) target = $region102
      $region101: #{transformer_decoder_forward.8} parent=5 // pred_region
        %s868 = ssub.s32 %s13, 2
        // Predicated region
        $region103: #{transformer_decoder_forward.8} parent=101 // pred_check
          %p869 = pneg %p221
        $region104: #{transformer_decoder_forward.8} parent=101 // pred_check_branch
          %871 = sbr.rel (%p869) target = $region106
        $region105: #{transformer_decoder_forward.8} parent=101 // pred_region
          %s872 = smul.u32 2, %s24
          %p873 = scmp.lt.s32.totalorder %s872, 3
          %s874 = scalar_select %p873, %s872, 3
          %s875 = smul.addr %s874, 8
          %s876 = scalar_lea.vmem %s7, %s875
        $region106: #{transformer_decoder_forward.8} parent=101 // pred_fallthru
          _
      $region102: #{transformer_decoder_forward.8} parent=5 // pred_fallthru
        _
    $region6: #{transformer_decoder_forward.8} parent=1 // loop_footer
      %s17 = sadd.s32 1, %s13
    $region7: #{transformer_decoder_forward.8} parent=1 // loop_footer_branch
      %12 = sbr.rel target = $region3
    $region8: #{transformer_decoder_forward.8} parent=1 // loop_exit
      _

// kernel: transformer_decoder_forward.9
$region0: #{transformer_decoder_forward.9}
  #allocation0 [shape = 'u32[]', space=smem, size = 0x4, offset = 0x4, fixed_abs, tag = 'smem constant byte address 0x4 - core index']
  #allocation1 [shape = 'u32[144,128]{1,0:T(1,128)}', space=vmem, size = 0x12000, scoped, tag = 'internal scratch']
  %s0 = inlined_call_operand.vmem [shape: f32[32,128], index: 0, kind: input, shape index: {}]
  %s1 = inlined_call_operand.vmem [shape: bf16[128,256], index: 1, kind: input, shape index: {}]
  %s2 = inlined_call_operand.vmem [shape: f32[1,256], index: 2, kind: input, shape index: {}]
  %s3 = inlined_call_operand.hbm [shape: f32[32,256], index: 3, kind: output, shape index: {}]
  %s4 = sld [smem:[#allocation0]]
  $region86: #{transformer_decoder_forward.9} parent=0
    _
  %s6 = ssub.s32 1, %s4
  %s7 = scalar_select 0, %s6, %s4
  $region1: #{transformer_decoder_forward.9} parent=0
    #allocation2 [shape = 'u8[65536]{0}', space=vmem, size = 0x10000, scoped, tag = 'input window, operand 1']
    #allocation3 [shape = 'u8[16384]{0}', space=vmem, size = 0x4000, scoped, tag = 'output window, operand 0']
    #allocation4 [shape = 's32[2]{0}', space=sflag, size = 0x8, scoped, tag = 'scoped memory for transformer_decoder_forward.9']
    %8 = vsyncpa [#allocation4], 0
    %s9 = scalar_lea.sflag [#allocation4], 1
    %10 = vsyncpa %s9, 0
    loop: start=0, step=1, limit=6
    $region2: #{transformer_decoder_forward.9} parent=1 // loop_pre_header
      _
    $region3: #{transformer_decoder_forward.9} parent=1 // loop_header
      %s12 = sphi 0, %s16
      %p13 = scmp.ge.s32.totalorder %s12, 6
      %s19 = sphi 0, %s31
      %s20 = sphi 0, %s27
      %s21 = sphi 0, %s19
      %s22 = sphi 0, %s20
      %s23 = sphi 0, %s21
      %s24 = sphi 0, %s22
      %s34 = sphi 0, %s36
      %s37 = sphi 0, %s34
      %s38 = sphi 0, %s37
      %s54 = sphi 0, %s38
      %s60 = sphi 0, %s62
      %s63 = sphi 0, %s60
      %s64 = sphi 0, %s63
      %s80 = sphi 0, %s64
      %s86 = sphi 0, %s88
      %s89 = sphi 0, %s86
      %s90 = sphi 0, %s89
      %s106 = sphi 0, %s90
      %s114 = sphi 0, %s116
      %s117 = sphi 0, %s114
      %s118 = sphi 0, %s117
      %s134 = sphi 0, %s118
    $region4: #{transformer_decoder_forward.9} parent=1 // loop_header_branch
      %15 = sbr.rel (%p13) target = $region8
    $region5: #{transformer_decoder_forward.9} parent=1 // loop_body
      %s17 = ssub.s32 %s12, 1
      %s18 = ssub.s32 %s12, 2
      %s25 = sadd.s32 1, %s20
      %p26 = scmp.ge.s32.totalorder %s25, 2
      %s27 = scalar_select %p26, 0, %s25
      %s28 = sadd.s32 1, %s19
      %s29 = scalar_select %p26, %s28, %s19
      %p30 = scmp.ge.s32.totalorder %s29, 2
      %s31 = scalar_select %p30, 0, %s29
      %s32 = ssub.s32 %s19, %s31
      %p33 = scmp.eq.s32.totalorder %s32, 0
      %s35 = sadd.s32 %s34, 1
      %s36 = scalar_select %p33, %s34, %s35
      %p39 = pneg %p33
      %p40 = scmp.eq.s32.totalorder %s12, 3
      %p41 = por %p39, %p40
      %p42 = scmp.ne.s32.totalorder %s34, %s37
      %p43 = scmp.eq.s32.totalorder %s12, 0
      %p44 = por %p42, %p43
      %p45 = scmp.ne.s32.totalorder %s34, %s37
      %p46 = scmp.eq.s32.totalorder %s17, 3
      %p47 = por %p45, %p46
      %p48 = scmp.ne.s32.totalorder %s37, %s38
      %p49 = scmp.eq.s32.totalorder %s17, 0
      %p50 = por %p48, %p49
      %p51 = scmp.ne.s32.totalorder %s37, %s38
      %p52 = scmp.eq.s32.totalorder %s18, 3
      %p53 = por %p51, %p52
      %p55 = scmp.ne.s32.totalorder %s38, %s54
      %p56 = scmp.eq.s32.totalorder %s18, 0
      %p57 = por %p55, %p56
      %s58 = ssub.s32 %s20, %s27
      %p59 = scmp.eq.s32.totalorder %s58, 0
      %s61 = sadd.s32 %s60, 1
      %s62 = scalar_select %p59, %s60, %s61
      %p65 = pneg %p59
      %p66 = scmp.eq.s32.totalorder %s12, 3
      %p67 = por %p65, %p66
      %p68 = scmp.ne.s32.totalorder %s60, %s63
      %p69 = scmp.eq.s32.totalorder %s12, 0
      %p70 = por %p68, %p69
      %p71 = scmp.ne.s32.totalorder %s60, %s63
      %p72 = scmp.eq.s32.totalorder %s17, 3
      %p73 = por %p71, %p72
      %p74 = scmp.ne.s32.totalorder %s63, %s64
      %p75 = scmp.eq.s32.totalorder %s17, 0
      %p76 = por %p74, %p75
      %p77 = scmp.ne.s32.totalorder %s63, %s64
      %p78 = scmp.eq.s32.totalorder %s18, 3
      %p79 = por %p77, %p78
      %p81 = scmp.ne.s32.totalorder %s64, %s80
      %p82 = scmp.eq.s32.totalorder %s18, 0
      %p83 = por %p81, %p82
      %s84 = ssub.s32 %s20, %s27
      %p85 = scmp.eq.s32.totalorder %s84, 0
      %s87 = sadd.s32 %s86, 1
      %s88 = scalar_select %p85, %s86, %s87
      %p91 = pneg %p85
      %p92 = scmp.eq.s32.totalorder %s12, 3
      %p93 = por %p91, %p92
      %p94 = scmp.ne.s32.totalorder %s86, %s89
      %p95 = scmp.eq.s32.totalorder %s12, 0
      %p96 = por %p94, %p95
      %p97 = scmp.ne.s32.totalorder %s86, %s89
      %p98 = scmp.eq.s32.totalorder %s17, 3
      %p99 = por %p97, %p98
      %p100 = scmp.ne.s32.totalorder %s89, %s90
      %p101 = scmp.eq.s32.totalorder %s17, 0
      %p102 = por %p100, %p101
      %p103 = scmp.ne.s32.totalorder %s89, %s90
      %p104 = scmp.eq.s32.totalorder %s18, 3
      %p105 = por %p103, %p104
      %p107 = scmp.ne.s32.totalorder %s90, %s106
      %p108 = scmp.eq.s32.totalorder %s18, 0
      %p109 = por %p107, %p108
      %s110 = ssub.s32 %s19, %s31
      %s111 = ssub.s32 %s20, %s27
      %s112 = sor.u32 %s110, %s111
      %p113 = scmp.eq.s32.totalorder %s112, 0
      %s115 = sadd.s32 %s114, 1
      %s116 = scalar_select %p113, %s114, %s115
      %p119 = pneg %p113
      %p120 = scmp.eq.s32.totalorder %s12, 3
      %p121 = por %p119, %p120
      %p122 = scmp.ne.s32.totalorder %s114, %s117
      %p123 = scmp.eq.s32.totalorder %s12, 0
      %p124 = por %p122, %p123
      %p125 = scmp.ne.s32.totalorder %s114, %s117
      %p126 = scmp.eq.s32.totalorder %s17, 3
      %p127 = por %p125, %p126
      %p128 = scmp.ne.s32.totalorder %s117, %s118
      %p129 = scmp.eq.s32.totalorder %s17, 0
      %p130 = por %p128, %p129
      %p131 = scmp.ne.s32.totalorder %s117, %s118
      %p132 = scmp.eq.s32.totalorder %s18, 3
      %p133 = por %p131, %p132
      %p135 = scmp.ne.s32.totalorder %s118, %s134
      %p136 = scmp.eq.s32.totalorder %s18, 0
      %p137 = por %p135, %p136
      %p138 = scmp.le.s32.totalorder 1, %s12
      %p139 = scmp.lt.s32.totalorder %s12, 5
      %p140 = pnand %p138, %p139
      %p141 = pneg %p140
      // Predicated region
      $region9: #{transformer_decoder_forward.9} parent=5 // pred_check
        _
      $region10: #{transformer_decoder_forward.9} parent=5 // pred_check_branch
        %143 = sbr.rel (%p140) target = $region12
      $region11: #{transformer_decoder_forward.9} parent=5 // pred_region
        %s144 = ssub.s32 %s12, 1
      $region12: #{transformer_decoder_forward.9} parent=5 // pred_fallthru
        _
      %p145 = scmp.lt.s32.totalorder %s12, 4
      // Predicated region
      $region13: #{transformer_decoder_forward.9} parent=5 // pred_check
        %p146 = pneg %p145
      $region14: #{transformer_decoder_forward.9} parent=5 // pred_check_branch
        %148 = sbr.rel (%p146) target = $region16
      $region15: #{transformer_decoder_forward.9} parent=5 // pred_region
        // Predicated region
        $region17: #{transformer_decoder_forward.9} parent=15 // pred_check
          %p149 = pneg %p44
        $region18: #{transformer_decoder_forward.9} parent=15 // pred_check_branch
          %151 = sbr.rel (%p149) target = $region20
        $region19: #{transformer_decoder_forward.9} parent=15 // pred_region
          %s152 = smul.u32 2, %s19
          %p153 = scmp.lt.s32.totalorder %s152, 3
          %s154 = scalar_select %p153, %s152, 3
          %s155 = smul.addr %s154, 8
          %s156 = scalar_lea.vmem %s0, %s155
          %s157 = smul.u32 2, %s19
        $region20: #{transformer_decoder_forward.9} parent=15 // pred_fallthru
          _
        // Predicated region
        $region21: #{transformer_decoder_forward.9} parent=15 // pred_check
          %p158 = pneg %p70
        $region22: #{transformer_decoder_forward.9} parent=15 // pred_check_branch
          %160 = sbr.rel (%p158) target = $region24
        $region23: #{transformer_decoder_forward.9} parent=15 // pred_region
          %s161 = sand.u32 %s60, 1
          %s162 = sand.u32 %s60, 1
          %s163 = smul.addr %s162, 64
          %s164 = scalar_lea.vmem [#allocation2], %s163
          %s165 = smul.addr %s20, 4
          %s166 = scalar_lea.vmem %s1, %s165
          // Predicated region
          $region25: #{transformer_decoder_forward.9} parent=23 // pred_check
            _
          $region26: #{transformer_decoder_forward.9} parent=23 // pred_check_branch
            %168 = sbr.rel (0) target = $region28
          $region27: #{transformer_decoder_forward.9} parent=23 // pred_region
            // Predicated region
            $region29: #{transformer_decoder_forward.9} parent=27 // pred_check
              _
            $region30: #{transformer_decoder_forward.9} parent=27 // pred_check_branch
              %170 = sbr.rel target = $region32
            $region31: #{transformer_decoder_forward.9} parent=27 // pred_region
              // Predicated region
              $region44: #{transformer_decoder_forward.9} parent=31 // pred_check
                _
              $region45: #{transformer_decoder_forward.9} parent=31 // pred_check_branch
                %215 = sbr.rel (0) target = $region47
              $region46: #{transformer_decoder_forward.9} parent=31 // pred_region
                loop: start=0, step=1, limit=1
                $region48: #{transformer_decoder_forward.9} parent=46 // loop_pre_header
                  _
                $region49: #{transformer_decoder_forward.9} parent=46 // loop_header
                  %s217 = sphi 0, %s221
                  %p218 = scmp.ge.s32.totalorder %s217, 1
                  %s222 = sphi %s166, %s166
                  %s223 = sphi %s164, %s164
                $region50: #{transformer_decoder_forward.9} parent=46 // loop_header_branch
                  %220 = sbr.rel (%p218) target = $region54
                $region51: #{transformer_decoder_forward.9} parent=46 // loop_body
                  _
                $region52: #{transformer_decoder_forward.9} parent=46 // loop_footer
                  %s221 = sadd.s32 1, %s217
                $region53: #{transformer_decoder_forward.9} parent=46 // loop_footer_branch
                  %216 = sbr.rel target = $region49
                $region54: #{transformer_decoder_forward.9} parent=46 // loop_exit
                  _
                loop: start=0, step=1, limit=1
                $region55: #{transformer_decoder_forward.9} parent=46 // loop_pre_header
                  _
                $region56: #{transformer_decoder_forward.9} parent=46 // loop_header
                  %s226 = sphi 0, %s230
                  %p227 = scmp.ge.s32.totalorder %s226, 1
                  %s231 = sphi %s166, %s166
                  %s232 = sphi %s164, %s164
                $region57: #{transformer_decoder_forward.9} parent=46 // loop_header_branch
                  %229 = sbr.rel (%p227) target = $region61
                $region58: #{transformer_decoder_forward.9} parent=46 // loop_body
                  %v233 = vld [vmem:[%s231] sm:$0xf]
                  %234 = vst [vmem:[%s232] sm:$0xf] %v233
                  %v235 = vld [vmem:[%s231 + $0x8] sm:$0xf]
                  %236 = vst [vmem:[%s232 + $0x4] sm:$0xf] %v235
                  %v237 = vld [vmem:[%s231 + $0x10] sm:$0xf]
                  %238 = vst [vmem:[%s232 + $0x8] sm:$0xf] %v237
                  %v239 = vld [vmem:[%s231 + $0x18] sm:$0xf]
                  %240 = vst [vmem:[%s232 + $0xc] sm:$0xf] %v239
                  %v241 = vld [vmem:[%s231 + $0x20] sm:$0xf]
                  %242 = vst [vmem:[%s232 + $0x10] sm:$0xf] %v241
                  %v243 = vld [vmem:[%s231 + $0x28] sm:$0xf]
                  %244 = vst [vmem:[%s232 + $0x14] sm:$0xf] %v243
                  %v245 = vld [vmem:[%s231 + $0x30] sm:$0xf]
                  %246 = vst [vmem:[%s232 + $0x18] sm:$0xf] %v245
                  %v247 = vld [vmem:[%s231 + $0x38] sm:$0xf]
                  %248 = vst [vmem:[%s232 + $0x1c] sm:$0xf] %v247
                  %v249 = vld [vmem:[%s231 + $0x40] sm:$0xf]
                  %250 = vst [vmem:[%s232 + $0x20] sm:$0xf] %v249
                  %v251 = vld [vmem:[%s231 + $0x48] sm:$0xf]
                  %252 = vst [vmem:[%s232 + $0x24] sm:$0xf] %v251
                  %v253 = vld [vmem:[%s231 + $0x50] sm:$0xf]
                  %254 = vst [vmem:[%s232 + $0x28] sm:$0xf] %v253
                  %v255 = vld [vmem:[%s231 + $0x58] sm:$0xf]
                  %256 = vst [vmem:[%s232 + $0x2c] sm:$0xf] %v255
                  %v257 = vld [vmem:[%s231 + $0x60] sm:$0xf]
                  %258 = vst [vmem:[%s232 + $0x30] sm:$0xf] %v257
                  %v259 = vld [vmem:[%s231 + $0x68] sm:$0xf]
                  %260 = vst [vmem:[%s232 + $0x34] sm:$0xf] %v259
                  %v261 = vld [vmem:[%s231 + $0x70] sm:$0xf]
                  %262 = vst [vmem:[%s232 + $0x38] sm:$0xf] %v261
                  %v263 = vld [vmem:[%s231 + $0x78] sm:$0xf]
                  %264 = vst [vmem:[%s232 + $0x3c] sm:$0xf] %v263
                $region59: #{transformer_decoder_forward.9} parent=46 // loop_footer
                  %s230 = sadd.s32 1, %s226
                $region60: #{transformer_decoder_forward.9} parent=46 // loop_footer_branch
                  %225 = sbr.rel target = $region56
                $region61: #{transformer_decoder_forward.9} parent=46 // loop_exit
                  _
              $region47: #{transformer_decoder_forward.9} parent=31 // pred_fallthru
                _
            $region32: #{transformer_decoder_forward.9} parent=27 // pred_fallthru
              _
            // Predicated region
            $region33: #{transformer_decoder_forward.9} parent=27 // pred_check
              _
            $region34: #{transformer_decoder_forward.9} parent=27 // pred_check_branch
              %172 = sbr.rel (0) target = $region36
            $region35: #{transformer_decoder_forward.9} parent=27 // pred_region
              loop: start=0, step=1, limit=1
              $region37: #{transformer_decoder_forward.9} parent=35 // loop_pre_header
                _
              $region38: #{transformer_decoder_forward.9} parent=35 // loop_header
                %s175 = sphi 0, %s179
                %p176 = scmp.ge.s32.totalorder %s175, 1
                %s180 = sphi %s166, %s166
                %s181 = sphi %s164, %s164
              $region39: #{transformer_decoder_forward.9} parent=35 // loop_header_branch
                %178 = sbr.rel (%p176) target = $region43
              $region40: #{transformer_decoder_forward.9} parent=35 // loop_body
                %v182 = vld [vmem:[%s180] sm:$0xf]
                %183 = vst [vmem:[%s181] sm:$0xf] %v182
                %v184 = vld [vmem:[%s180 + $0x8] sm:$0xf]
                %185 = vst [vmem:[%s181 + $0x4] sm:$0xf] %v184
                %v186 = vld [vmem:[%s180 + $0x10] sm:$0xf]
                %187 = vst [vmem:[%s181 + $0x8] sm:$0xf] %v186
                %v188 = vld [vmem:[%s180 + $0x18] sm:$0xf]
                %189 = vst [vmem:[%s181 + $0xc] sm:$0xf] %v188
                %v190 = vld [vmem:[%s180 + $0x20] sm:$0xf]
                %191 = vst [vmem:[%s181 + $0x10] sm:$0xf] %v190
                %v192 = vld [vmem:[%s180 + $0x28] sm:$0xf]
                %193 = vst [vmem:[%s181 + $0x14] sm:$0xf] %v192
                %v194 = vld [vmem:[%s180 + $0x30] sm:$0xf]
                %195 = vst [vmem:[%s181 + $0x18] sm:$0xf] %v194
                %v196 = vld [vmem:[%s180 + $0x38] sm:$0xf]
                %197 = vst [vmem:[%s181 + $0x1c] sm:$0xf] %v196
                %v198 = vld [vmem:[%s180 + $0x40] sm:$0xf]
                %199 = vst [vmem:[%s181 + $0x20] sm:$0xf] %v198
                %v200 = vld [vmem:[%s180 + $0x48] sm:$0xf]
                %201 = vst [vmem:[%s181 + $0x24] sm:$0xf] %v200
                %v202 = vld [vmem:[%s180 + $0x50] sm:$0xf]
                %203 = vst [vmem:[%s181 + $0x28] sm:$0xf] %v202
                %v204 = vld [vmem:[%s180 + $0x58] sm:$0xf]
                %205 = vst [vmem:[%s181 + $0x2c] sm:$0xf] %v204
                %v206 = vld [vmem:[%s180 + $0x60] sm:$0xf]
                %207 = vst [vmem:[%s181 + $0x30] sm:$0xf] %v206
                %v208 = vld [vmem:[%s180 + $0x68] sm:$0xf]
                %209 = vst [vmem:[%s181 + $0x34] sm:$0xf] %v208
                %v210 = vld [vmem:[%s180 + $0x70] sm:$0xf]
                %211 = vst [vmem:[%s181 + $0x38] sm:$0xf] %v210
                %v212 = vld [vmem:[%s180 + $0x78] sm:$0xf]
                %213 = vst [vmem:[%s181 + $0x3c] sm:$0xf] %v212
              $region41: #{transformer_decoder_forward.9} parent=35 // loop_footer
                %s179 = sadd.s32 1, %s175
              $region42: #{transformer_decoder_forward.9} parent=35 // loop_footer_branch
                %174 = sbr.rel target = $region38
              $region43: #{transformer_decoder_forward.9} parent=35 // loop_exit
                _
            $region36: #{transformer_decoder_forward.9} parent=27 // pred_fallthru
              _
          $region28: #{transformer_decoder_forward.9} parent=23 // pred_fallthru
            _
          %265 = vnop
        $region24: #{transformer_decoder_forward.9} parent=15 // pred_fallthru
          _
        // Predicated region
        $region62: #{transformer_decoder_forward.9} parent=15 // pred_check
          %p266 = pneg %p96
        $region63: #{transformer_decoder_forward.9} parent=15 // pred_check_branch
          %268 = sbr.rel (%p266) target = $region65
        $region64: #{transformer_decoder_forward.9} parent=15 // pred_region
          %p269 = scmp.lt.s32.totalorder %s20, 1
          %s270 = scalar_select %p269, %s20, 1
          %s271 = scalar_lea.vmem %s2, %s270
        $region65: #{transformer_decoder_forward.9} parent=15 // pred_fallthru
          _
      $region16: #{transformer_decoder_forward.9} parent=5 // pred_fallthru
        _
      %p272 = scmp.le.s32.totalorder 1, %s12
      %p273 = scmp.lt.s32.totalorder %s12, 5
      %p274 = pnand %p272, %p273
      %p275 = pneg %p274
      // Predicated region
      $region66: #{transformer_decoder_forward.9} parent=5 // pred_check
        _
      $region67: #{transformer_decoder_forward.9} parent=5 // pred_check_branch
        %277 = sbr.rel (%p274) target = $region69
      $region68: #{transformer_decoder_forward.9} parent=5 // pred_region
        %s278 = ssub.s32 %s12, 1
        %s279 = sand.u32 %s63, 1
        %s280 = sand.u32 %s63, 1
        %s281 = smul.addr %s280, 64
        %s282 = scalar_lea.vmem [#allocation2], %s281
        // Predicated region
        $region70: #{transformer_decoder_forward.9} parent=68 // pred_check
          %p283 = pneg %p76
        $region71: #{transformer_decoder_forward.9} parent=68 // pred_check_branch
          %285 = sbr.rel (%p283) target = $region73
        $region72: #{transformer_decoder_forward.9} parent=68 // pred_region
          _
        $region73: #{transformer_decoder_forward.9} parent=68 // pred_fallthru
          _
        %s286 = smul.u32 2, %s21
        %p287 = scmp.lt.s32.totalorder %s286, 3
        %s288 = scalar_select %p287, %s286, 3
        %s289 = smul.addr %s288, 8
        %s290 = scalar_lea.vmem %s0, %s289
        %p291 = pneg %p50
        %p292 = pneg %p47
        %s293 = sand.u32 %s63, 1
        %s294 = sand.u32 %s63, 1
        %s295 = smul.addr %s294, 64
        %s296 = scalar_lea.vmem [#allocation2], %s295
        %p297 = pneg %p76
        %p298 = pneg %p73
        %p299 = scmp.lt.s32.totalorder %s22, 1
        %s300 = scalar_select %p299, %s22, 1
        %s301 = scalar_lea.vmem %s2, %s300
        %p302 = pneg %p102
        %p303 = pneg %p99
        %p304 = pneg %p130
        %p305 = pneg %p127
        %s306 = sand.u32 %s117, 1
        %s307 = scalar_lea.sflag [#allocation4], %s306
        %s308 = sand.u32 %s117, 1
        %s309 = smul.addr %s308, 16
        %s310 = scalar_lea.vmem [#allocation3], %s309
        %s311 = smul.u32 2, %s21
        %p312 = scmp.lt.s32.totalorder %s311, 3
        %s313 = scalar_select %p312, %s311, 3
        %s314 = smul.addr %s313, 8
        %s315 = scalar_lea.vmem %s0, %s314
        %s316 = smul.u32 2, %s21
        %p317 = scmp.lt.s32.totalorder %s22, 1
        %s318 = scalar_select %p317, %s22, 1
        %s319 = scalar_lea.vmem %s2, %s318
        %s320 = smul.u32 2, %s21
        %v322 = vld [vmem:[%s315] sm:$0xff]
        %v323 = vld [vmem:[%s315 + $0x8] sm:$0xff]
        %v324 = vpack.c.bf16 %v323, %v322
        %v325 = vld [vmem:[%s282] sm:$0xf]
        %v326 = vld [vmem:[%s282 + $0x4] sm:$0xf]
        %v327 = vld [vmem:[%s282 + $0x8] sm:$0xf]
        %v328 = vld [vmem:[%s282 + $0xc] sm:$0xf]
        %v329 = vld [vmem:[%s282 + $0x10] sm:$0xf]
        %v330 = vld [vmem:[%s282 + $0x14] sm:$0xf]
        %v331 = vld [vmem:[%s282 + $0x18] sm:$0xf]
        %v332 = vld [vmem:[%s282 + $0x1c] sm:$0xf]
        %v333 = vld [vmem:[%s282 + $0x20] sm:$0xf]
        %v334 = vld [vmem:[%s282 + $0x24] sm:$0xf]
        %v335 = vld [vmem:[%s282 + $0x28] sm:$0xf]
        %v336 = vld [vmem:[%s282 + $0x2c] sm:$0xf]
        %v337 = vld [vmem:[%s282 + $0x30] sm:$0xf]
        %v338 = vld [vmem:[%s282 + $0x34] sm:$0xf]
        %v339 = vld [vmem:[%s282 + $0x38] sm:$0xf]
        %v340 = vld [vmem:[%s282 + $0x3c] sm:$0xf]
        %v341 = vld [vmem:[%s319] sm:$0x1]
        %v343 = vlaneseq
        %v344 = vshrl.u32 %v343, 7
        %v345 = vsub.s32 0, %v344
        %v346 = vrot.slane %v341, %v345
        %v364 = vunpack.c.l.b16 %v325
        %v365 = vunpack.c.l.b16 %v326
        %v366 = vunpack.c.l.b16 %v327
        %v367 = vunpack.c.l.b16 %v328
        %v368 = vunpack.c.l.b16 %v329
        %v369 = vunpack.c.l.b16 %v330
        %v370 = vunpack.c.l.b16 %v331
        %v371 = vunpack.c.l.b16 %v332
        %v372 = vunpack.c.l.b16 %v333
        %v373 = vunpack.c.l.b16 %v334
        %v374 = vunpack.c.l.b16 %v335
        %v375 = vunpack.c.l.b16 %v336
        %v376 = vunpack.c.l.b16 %v337
        %v377 = vunpack.c.l.b16 %v338
        %v378 = vunpack.c.l.b16 %v339
        %v379 = vunpack.c.l.b16 %v340
        %v380 = vpack.c.b16 %v365, %v364
        %v381 = vpack.c.b16 %v367, %v366
        %v382 = vpack.c.b16 %v369, %v368
        %v383 = vpack.c.b16 %v371, %v370
        %v384 = vpack.c.b16 %v373, %v372
        %v385 = vpack.c.b16 %v375, %v374
        %v386 = vpack.c.b16 %v377, %v376
        %v387 = vpack.c.b16 %v379, %v378
        %396 = vmatprep.subr.bf16.mxu0 0
        %397 = vmatpush1.bf16.msra.mxu0 %v380
        %398 = vmatprep.subr.bf16.mxu0 0
        %399 = vmatpush1.bf16.msra.mxu0 %v381
        %400 = vmatprep.subr.bf16.mxu0 0
        %401 = vmatpush1.bf16.msra.mxu0 %v382
        %402 = vmatprep.subr.bf16.mxu0 0
        %403 = vmatpush1.bf16.msra.mxu0 %v383
        %404 = vmatprep.subr.bf16.mxu0 0
        %405 = vmatpush1.bf16.msra.mxu0 %v384
        %406 = vmatprep.subr.bf16.mxu0 0
        %407 = vmatpush1.bf16.msra.mxu0 %v385
        %408 = vmatprep.subr.bf16.mxu0 0
        %409 = vmatpush1.bf16.msra.mxu0 %v386
        %410 = vmatprep.subr.bf16.mxu0 0
        %411 = vmatpush1.bf16.msra.mxu0 %v387
        %412 = vmatprep.subr.bf16.mxu0 0
        %413 = vmatpush1.bf16.msra.mxu0 0
        %414 = vmatprep.subr.bf16.mxu0 0
        %415 = vmatpush1.bf16.msra.mxu0 0
        %416 = vmatprep.subr.bf16.mxu0 0
        %417 = vmatpush1.bf16.msra.mxu0 0
        %418 = vmatprep.subr.bf16.mxu0 0
        %419 = vmatpush1.bf16.msra.mxu0 0
        %420 = vmatprep.subr.bf16.mxu0 0
        %421 = vmatpush1.bf16.msra.mxu0 0
        %422 = vmatprep.subr.bf16.mxu0 0
        %423 = vmatpush1.bf16.msra.mxu0 0
        %424 = vmatprep.subr.bf16.mxu0 0
        %425 = vmatpush1.bf16.msra.mxu0 0
        %426 = vmatprep.subr.bf16.mxu0 0
        %427 = vmatpush1.bf16.msra.mxu0 0
        %428 = vmatprep.mubr.bf16.mxu0 0
        %429 = vmatmul.mubr.bf16.gmra.mrb[0].mxu0 %v324
        %v430 = vpop.f32.mrb[0].mxu0
        %v431 = vadd.f32 %v346, %v430
        %v432 = vpop.f32.mrb[0].mxu0
        %v433 = vpop.f32.mrb[0].mxu0
        %v434 = vadd.f32 %v346, %v433
        %v435 = vpop.f32.mrb[0].mxu0
        %436 = vdwg.mxu0
        %437 = vst [vmem:[%s310] sm:$0xff] %v431
        %438 = vst [vmem:[%s310 + $0x8] sm:$0xff] %v434
        %s439 = sand.u32 %s117, 1
        %s440 = scalar_lea.sflag [#allocation4], %s439
        %s441 = sand.u32 %s117, 1
        %s442 = smul.addr %s441, 16
        %s443 = scalar_lea.vmem [#allocation3], %s442
        // Predicated region
        $region74: #{transformer_decoder_forward.9} parent=68 // pred_check
          %p444 = pneg %p127
        $region75: #{transformer_decoder_forward.9} parent=68 // pred_check_branch
          %446 = sbr.rel (%p444) target = $region77
        $region76: #{transformer_decoder_forward.9} parent=68 // pred_region
          %s447 = smul.u32 2, %s21
          %s449 = ssub.s32 256, 256
          %450 = vsyncadd %s440, %s449
          %s451 = smul.addr %s447, 2
          %s452 = sadd.s32 %s22, %s451
          %s453 = smul.addr %s452, 128
          %s454 = scalar_lea.hbm %s3, %s453
          %s455 = sshll.u32 %s443, 4
          %s456 = int_to_ptr.vmem [resolvable:$true] %s455
          %461 = dma.vmem_to_hbm [thread:$0]  %s456, 256, %s454, %s440, 128, 256, 8
        $region77: #{transformer_decoder_forward.9} parent=68 // pred_fallthru
          _
      $region69: #{transformer_decoder_forward.9} parent=5 // pred_fallthru
        _
      %p462 = scmp.le.s32.totalorder 2, %s12
      // Predicated region
      $region78: #{transformer_decoder_forward.9} parent=5 // pred_check
        %p463 = pneg %p462
      $region79: #{transformer_decoder_forward.9} parent=5 // pred_check_branch
        %465 = sbr.rel (%p463) target = $region81
      $region80: #{transformer_decoder_forward.9} parent=5 // pred_region
        %s466 = ssub.s32 %s12, 2
        // Predicated region
        $region82: #{transformer_decoder_forward.9} parent=80 // pred_check
          %p467 = pneg %p133
        $region83: #{transformer_decoder_forward.9} parent=80 // pred_check_branch
          %469 = sbr.rel (%p467) target = $region85
        $region84: #{transformer_decoder_forward.9} parent=80 // pred_region
          %s470 = sand.u32 %s118, 1
          %s471 = scalar_lea.sflag [#allocation4], %s470
          %s472 = sand.u32 %s118, 1
          %s473 = smul.addr %s472, 16
          %s474 = scalar_lea.vmem [#allocation3], %s473
          %475 = dma.done %s471, 256
        $region85: #{transformer_decoder_forward.9} parent=80 // pred_fallthru
          _
      $region81: #{transformer_decoder_forward.9} parent=5 // pred_fallthru
        _
    $region6: #{transformer_decoder_forward.9} parent=1 // loop_footer
      %s16 = sadd.s32 1, %s12
    $region7: #{transformer_decoder_forward.9} parent=1 // loop_footer_branch
      %11 = sbr.rel target = $region3
    $region8: #{transformer_decoder_forward.9} parent=1 // loop_exit
      _
    %476 = vsyncpa [#allocation4], 1
    %s477 = scalar_lea.sflag [#allocation4], 1
    %478 = vsyncpa %s477, 1

</llo_original>
